<compile_context>
chip_gen: v6e
topology: v6e:2x2x1
jax: 0.10.0
libtpu: 0.0.40
codegen_flags: <defaults>
</compile_context>

<pallas_src>
import functools

import numpy as np
import jax
import jax.numpy as jnp
from jax import lax
from jax.experimental import pallas as pl
from jax.experimental.pallas import tpu as pltpu

MERGE_FACTOR = 16                      # 4x PatchMerging == space-to-depth by 16


# ---------------------------------------------------------------------------
# VMEM-budget helpers (generation-aware-ish: cap at v7x's 64 MiB physical)
# ---------------------------------------------------------------------------
def _vmem_limit(block_bytes, scratch_bytes=0):
    need = 2 * block_bytes + scratch_bytes          # double-buffered blocks
    return int(min(64 << 20, max(8 << 20, (need * 3) // 2)))


def _pick_row_tile(rows, hw):
    """Row tile for the (B*C, HW) dwconv: multiple of 8, fits VMEM, >=2 steps."""
    def step_bytes(rt):
        return 2 * rt * hw * (4 + 2 + 2)            # f32 in + 2x bf16 out, dbl-buf
    cands = [r for r in range(8, rows + 1, 8)
             if rows % r == 0 and step_bytes(r) <= (24 << 20)]
    multi = [r for r in cands if rows // r >= 2]
    if multi:
        return max(multi)
    if cands:
        return max(cands)
    return rows


def _pick_kv_tile(n):
    if n % 128 == 0:
        for cand in (512, 256, 128):
            if n % cand == 0:
                return cand
    return n


def _pick_lane_tile(hw, c):
    def step_bytes(t):
        return 2 * (3 * c * t * 4) + c * c * 4
    if hw <= 32768 and step_bytes(hw) <= (24 << 20):
        return hw
    for cand in (32768, 16384, 8192, 4096, 2048, 1024, 512, 256, 128):
        if cand < hw and hw % cand == 0 and step_bytes(cand) <= (24 << 20):
            return cand
    return hw


# ---------------------------------------------------------------------------
# Pallas kernels
# ---------------------------------------------------------------------------
def _dwconv_qk_kernel(x_ref, xi_ref, wq_ref, bq_ref, wk_ref, bk_ref,
                      q_ref, k_ref, *, H, W):
    # x_ref : (rt, HW) f32   -- rt rows, each row = one (batch, channel) image
    # xi_ref: (1, HW)  int32 -- x coordinate of every flattened pixel
    # wq/wk : (rt, 9)  f32   -- depthwise 3x3 weights, taps (dy, dx) row-major
    # bq/bk : (rt, 1)  f32
    # q/k   : (rt, HW) bf16  -- lane-dense, sublane-dense stores
    x = x_ref[...]
    xi = xi_ref[...]
    wq = wq_ref[...]                                # hoisted weight reads
    wk = wk_ref[...]
    hw = H * W
    col = lax.broadcasted_iota(jnp.int32, (1, hw), 1)

    # Per-offset validity masks built on the VPU (no mask DMA).  The y-check is
    # done on the flat index (col + dy*W in [0, HW)) so no integer div/mod.
    xm, ym = [], []
    for dd in (-1, 0, 1):
        xs = xi + dd
        xm.append(((xs >= 0) & (xs < W)).astype(x.dtype))
        cs = col + dd * W
        ym.append(((cs >= 0) & (cs < hw)).astype(x.dtype))

    accq = jnp.zeros_like(x)                        # f32 accumulation (v5e-safe)
    acck = jnp.zeros_like(x)
    t = 0
    for dy in (-1, 0, 1):                           # static 3x3 unroll
        for dx in (-1, 0, 1):
            d = dy * W + dx                         # flat-index displacement
            if d == 0:
                win = x
            else:
                # win[p] = x[p + d] via XLU lane rotation, zeroed where the
                # neighbour is outside the image or wraps across a row end.
                shifted = pltpu.roll(x, shift=(-d) % hw, axis=1)
                win = shifted * (xm[dx + 1] * ym[dy + 1])
            accq = accq + win * wq[:, t:t + 1]
            acck = acck + win * wk[:, t:t + 1]
            t += 1
    q_ref[...] = (accq + bq_ref[...]).astype(q_ref.dtype)
    k_ref[...] = (acck + bk_ref[...]).astype(k_ref.dtype)


def _attn_kernel(q_ref, k_ref, v_ref, o_ref, m_sc, l_sc, acc_sc):
    # Flash-style attention, KV axis tiled (grid axis 1), online softmax.
    # q_ref : (1, n, Cm)  bf16      k_ref : (1, Cm, tkv) bf16
    # v_ref : (1, tkv, Cm) bf16     o_ref : (1, n, Cm)   f32
    # scratch: m (n,1) f32, l (n,1) f32, acc (n, Cm) f32
    j = pl.program_id(1)

    @pl.when(j == 0)
    def _():
        m_sc[...] = jnp.full(m_sc.shape, -jnp.inf, m_sc.dtype)
        l_sc[...] = jnp.zeros(l_sc.shape, l_sc.dtype)
        acc_sc[...] = jnp.zeros(acc_sc.shape, acc_sc.dtype)

    # S = Q^T K on the MXU, bf16 inputs, f32 accumulation (transpose-free).
    s = jnp.dot(q_ref[0], k_ref[0], preferred_element_type=jnp.float32)  # (n, tkv)
    m_prev = m_sc[...]
    m_new = jnp.maximum(m_prev, jnp.max(s, axis=-1, keepdims=True))
    alpha = jnp.exp(m_prev - m_new)
    p = jnp.exp(s - m_new)
    l_sc[...] = alpha * l_sc[...] + jnp.sum(p, axis=-1, keepdims=True)
    acc_sc[...] = alpha * acc_sc[...] + jnp.dot(
        p.astype(jnp.bfloat16), v_ref[0], preferred_element_type=jnp.float32)
    m_sc[...] = m_new

    @pl.when(j == pl.num_programs(1) - 1)
    def _():
        # EUP reciprocal: ~2^-12 relative error -> fine at module tolerances.
        o_ref[0] = acc_sc[...] * pl.reciprocal(l_sc[...], approx=True)


def _conv1x1_res_kernel(e_ref, x_ref, w_ref, o_ref):
    # e/x/o : (1, C, tile) slabs of the native (B, C, HW) layout,  w : (C, C)
    s = e_ref[0] + x_ref[0]                          # residual add (E + x), f32
    # Default matmul precision (bf16 passes) is well within module tolerance;
    # switch to a VPU accumulation / HIGHEST precision if bit-accuracy matters.
    o_ref[0] = jnp.dot(w_ref[...], s, preferred_element_type=jnp.float32)


# ---------------------------------------------------------------------------
# Pallas wrappers
# ---------------------------------------------------------------------------
def dw_conv3x3_qk(x, wq, bq, wk, bk):
    B, C, H, W = x.shape
    HW = H * W
    rows = B * C
    xf = x.reshape(rows, HW)                         # free reshape (major dims)
    w9q = jnp.tile(wq.reshape(C, 9), (B, 1))         # tiny per-row weights
    w9k = jnp.tile(wk.reshape(C, 9), (B, 1))
    bq2 = jnp.tile(bq.reshape(C, 1), (B, 1))
    bk2 = jnp.tile(bk.reshape(C, 1), (B, 1))
    # x coordinate of every flattened pixel (tiny int32 row; replaces the old
    # (9, HW) f32 mask tensor).
    xi = jnp.asarray(np.tile(np.arange(W, dtype=np.int32), H)[None, :])

    rt = _pick_row_tile(rows, HW)
    grid = (rows // rt,)
    block_bytes = rt * HW * 4 + 2 * rt * HW * 2 + HW * 4 + 2 * rt * 40

    kernel = functools.partial(_dwconv_qk_kernel, H=H, W=W)
    q, k = pl.pallas_call(
        kernel,
        out_shape=(jax.ShapeDtypeStruct((rows, HW), jnp.bfloat16),
                   jax.ShapeDtypeStruct((rows, HW), jnp.bfloat16)),
        grid=grid,
        in_specs=[
            pl.BlockSpec((rt, HW), lambda i: (i, 0)),
            pl.BlockSpec((1, HW), lambda i: (0, 0)),
            pl.BlockSpec((rt, 9), lambda i: (i, 0)),
            pl.BlockSpec((rt, 1), lambda i: (i, 0)),
            pl.BlockSpec((rt, 9), lambda i: (i, 0)),
            pl.BlockSpec((rt, 1), lambda i: (i, 0)),
        ],
        out_specs=(pl.BlockSpec((rt, HW), lambda i: (i, 0)),
                   pl.BlockSpec((rt, HW), lambda i: (i, 0))),
        compiler_params=pltpu.CompilerParams(
            dimension_semantics=("parallel",),
            vmem_limit_bytes=_vmem_limit(block_bytes)),
    )(xf, xi, w9q, bq2, w9k, bk2)
    return q, k                                      # (B*C, HW) bf16 each


def attention_pallas(qt, kc, vt):
    # qt, vt: (B, n, Cm) bf16   kc: (B, Cm, n) bf16   ->   (B, n, Cm) f32
    B, N, Cm = qt.shape
    tkv = _pick_kv_tile(N)
    nkv = N // tkv
    block_bytes = N * Cm * 2 + Cm * tkv * 2 + tkv * Cm * 2 + N * Cm * 4
    scratch_bytes = (N * Cm + 2 * N) * 4
    return pl.pallas_call(
        _attn_kernel,
        out_shape=jax.ShapeDtypeStruct((B, N, Cm), jnp.float32),
        grid=(B, nkv),
        in_specs=[pl.BlockSpec((1, N, Cm), lambda b, j: (b, 0, 0)),
                  pl.BlockSpec((1, Cm, tkv), lambda b, j: (b, 0, j)),
                  pl.BlockSpec((1, tkv, Cm), lambda b, j: (b, j, 0))],
        out_specs=pl.BlockSpec((1, N, Cm), lambda b, j: (b, 0, 0)),
        scratch_shapes=[pltpu.VMEM((N, 1), jnp.float32),
                        pltpu.VMEM((N, 1), jnp.float32),
                        pltpu.VMEM((N, Cm), jnp.float32)],
        compiler_params=pltpu.CompilerParams(
            dimension_semantics=("parallel", "arbitrary"),
            vmem_limit_bytes=_vmem_limit(block_bytes, scratch_bytes)),
    )(qt, kc, vt)


def conv1x1_residual(e_img, x_img, wc):
    # e_img, x_img: (B, C, HW) native layout   wc: (C, C)   ->   (B, C, HW)
    B, C, HW = e_img.shape
    tile = _pick_lane_tile(HW, C)
    block_bytes = 3 * C * tile * 4 + C * C * 4
    return pl.pallas_call(
        _conv1x1_res_kernel,
        out_shape=jax.ShapeDtypeStruct((B, C, HW), jnp.float32),
        grid=(B, HW // tile),
        in_specs=[pl.BlockSpec((1, C, tile), lambda b, i: (b, 0, i)),
                  pl.BlockSpec((1, C, tile), lambda b, i: (b, 0, i)),
                  pl.BlockSpec((C, C), lambda b, i: (0, 0))],
        out_specs=pl.BlockSpec((1, C, tile), lambda b, i: (b, 0, i)),
        compiler_params=pltpu.CompilerParams(
            dimension_semantics=("parallel", "parallel"),
            vmem_limit_bytes=_vmem_limit(block_bytes)),
    )(e_img, x_img, wc)


# ---------------------------------------------------------------------------
# Glue: single space-to-depth (== 4x PatchMerging up to a consistent
# permutation, exactly inverted before the residual / 1x1 conv) and its inverse.
# ---------------------------------------------------------------------------
def s2d_nCc(x, f):
    """(B, C, H, W) -> (B, n, C*f*f) with n = (H/f)*(W/f)."""
    B, C, H, W = x.shape
    x = x.reshape(B, C, H // f, f, W // f, f)
    x = x.transpose(0, 2, 4, 1, 3, 5)                # (B, H/f, W/f, C, f, f)
    return x.reshape(B, (H // f) * (W // f), C * f * f)


def s2d_Ccn(x, f):
    """(B, C, H, W) -> (B, C*f*f, n)."""
    B, C, H, W = x.shape
    x = x.reshape(B, C, H // f, f, W // f, f)
    x = x.transpose(0, 1, 3, 5, 2, 4)                # (B, C, f, f, H/f, W/f)
    return x.reshape(B, C * f * f, (H // f) * (W // f))


@jax.jit
def pmpa1_ave_forward(x, wq, bq, wk, bk, wc):
    B, C, H, W = x.shape
    f = MERGE_FACTOR
    h, w = H // f, W // f

    # Kernel 1: depthwise 3x3 convs (Q, K), sublane-packed (B*C, HW), bf16 out.
    Qf, Kf = dw_conv3x3_qk(x, wq, bq, wk, bk)            # (B*C, H*W) bf16

    # Remaining host-side s2d shuffles, all at bf16 (half the bytes of before);
    # the x_cb transpose of the old version is gone entirely.
    Qt = s2d_nCc(Qf.reshape(B, C, H, W), f)              # (B, n, 256C) bf16
    Kc = s2d_Ccn(Kf.reshape(B, C, H, W), f)              # (B, 256C, n) bf16
    Vt = s2d_nCc(x.astype(jnp.bfloat16), f)              # (B, n, 256C) bf16

    # Kernel 2: flash-tiled attention (softmax(Q^T K) applied to V).
    Et = attention_pallas(Qt, Kc, Vt)                    # (B, n, 256C) f32

    # Inverse space-to-depth for E (single f32 pass); x stays in native layout.
    E_img = (Et.reshape(B, h, w, C, f, f)
               .transpose(0, 3, 1, 4, 2, 5)
               .reshape(B, C, H * W))
    x_img = x.reshape(B, C, H * W)

    # Kernel 3: residual add + 1x1 conv on the native (B, C, HW) layout.
    o = conv1x1_residual(E_img, x_img, wc)               # (B, C, H*W) f32
    return o.reshape(B, C, H, W)


# ---------------------------------------------------------------------------
# Pure-JAX reference (faithful to the PyTorch forward: iterated PatchMerging /
# Patch2Image, f32 everywhere) for the correctness check.
# ---------------------------------------------------------------------------
def patch_merging(x):
    x0 = x[:, :, 0::2, 0::2]
    x1 = x[:, :, 1::2, 0::2]
    x2 = x[:, :, 0::2, 1::2]
    x3 = x[:, :, 1::2, 1::2]
    return jnp.concatenate([x0, x1, x2, x3], axis=1)


def patch2image(x):
    B, C4, H, W = x.shape
    C = C4 // 4
    xr = jnp.zeros((B, C, H * 2, W * 2), x.dtype)
    xr = xr.at[:, :, 0::2, 0::2].set(x[:, 0:C])
    xr = xr.at[:, :, 1::2, 0::2].set(x[:, C:2 * C])
    xr = xr.at[:, :, 0::2, 1::2].set(x[:, 2 * C:3 * C])
    xr = xr.at[:, :, 1::2, 1::2].set(x[:, 3 * C:4 * C])
    return xr


def ref_forward(x, wq, bq, wk, bk, wc):
    B, C, H, W = x.shape
    dn = ('NCHW', 'OIHW', 'NCHW')
    Q = lax.conv_general_dilated(x, wq.reshape(C, 1, 3, 3), (1, 1),
                                 ((1, 1), (1, 1)), feature_group_count=C,
                                 dimension_numbers=dn) + bq[None, :, None, None]
    K = lax.conv_general_dilated(x, wk.reshape(C, 1, 3, 3), (1, 1),
                                 ((1, 1), (1, 1)), feature_group_count=C,
                                 dimension_numbers=dn) + bk[None, :, None, None]
    for _ in range(4):
        Q = patch_merging(Q)
        K = patch_merging(K)
    V = x
    for _ in range(4):
        V = patch_merging(V)
    b, c, h, w = V.shape
    Qf = Q.reshape(b, c, h * w)
    Kf = K.reshape(b, c, h * w)
    Vf = V.reshape(b, c, h * w)
    S = jax.nn.softmax(jnp.einsum('bcn,bcm->bnm', Qf, Kf), axis=-1)
    E = jnp.einsum('bcm,bnm->bcn', Vf, S).reshape(b, c, h, w)
    for _ in range(4):
        E = patch2image(E)
    E = E + x
    return jnp.einsum('oi,bihw->bohw', wc, E)


# ---------------------------------------------------------------------------
if __name__ == "__main__":
    # groups=in_channels plus the Q.view(b, c, ...) in the torch code force
    # out_channels == in_channels.  H, W must be divisible by 16 (4x merging).
    B, C, H, W = 2, 4, 32, 32

    key = jax.random.PRNGKey(0)
    kx, kwq, kbq, kwk, kbk, kwc = jax.random.split(key, 6)
    x = jax.random.normal(kx, (B, C, H, W), jnp.float32)
    # convq / convk: Conv2d(C, C, 3, padding=1, groups=C) -> (C, 1, 3, 3) + (C,)
    wq = jax.random.normal(kwq, (C, 3, 3), jnp.float32) * 0.05
    bq = jax.random.normal(kbq, (C,), jnp.float32) * 0.1
    wk = jax.random.normal(kwk, (C, 3, 3), jnp.float32) * 0.05
    bk = jax.random.normal(kbk, (C,), jnp.float32) * 0.1
    # conv: Conv2d(C, C, 1, bias=False) -> weight (C, C, 1, 1), stored as (C, C)
    wc = jax.random.normal(kwc, (C, C), jnp.float32) * 0.2

    out = jax.block_until_ready(pmpa1_ave_forward(x, wq, bq, wk, bk, wc))
    ref = ref_forward(x, wq, bq, wk, bk, wc)
    assert out.shape == (B, C, H, W)
    # bf16 MXU inputs in the attention path -> slightly looser tolerance.
    assert jnp.allclose(out, ref, atol=2e-2, rtol=2e-2), \
        float(jnp.max(jnp.abs(out - ref)))

    print("KERNEL_OK")
</pallas_src>

<mosaic_0001>
module attributes {stable_mosaic.version = 11 : i64} {
  func.func @_dwconv_qk_kernel(%arg0: i32, %arg1: memref<8x1024xf32, #tpu.memory_space<vmem>>, %arg2: memref<1x1024xi32, #tpu.memory_space<vmem>>, %arg3: memref<8x9xf32, #tpu.memory_space<vmem>>, %arg4: memref<8x1xf32, #tpu.memory_space<vmem>>, %arg5: memref<8x9xf32, #tpu.memory_space<vmem>>, %arg6: memref<8x1xf32, #tpu.memory_space<vmem>>, %arg7: memref<8x1024xbf16, #tpu.memory_space<vmem>>, %arg8: memref<8x1024xbf16, #tpu.memory_space<vmem>>) attributes {dimension_semantics = [#tpu.dimension_semantics<parallel>], iteration_bounds = array<i64: 1>, scalar_prefetch = 0 : i64, scratch_operands = 0 : i64, tpu.core_type = #tpu.core_type<tc>, window_params = [{transform_indices = @transform_0, window_bounds = array<i64: 8, 1024>}, {pipeline_mode = #tpu.pipeline_mode<synchronous>, transform_indices = @transform_1, window_bounds = array<i64: 1, 1024>}, {transform_indices = @transform_2, window_bounds = array<i64: 8, 9>}, {transform_indices = @transform_3, window_bounds = array<i64: 8, 1>}, {transform_indices = @transform_4, window_bounds = array<i64: 8, 9>}, {transform_indices = @transform_5, window_bounds = array<i64: 8, 1>}, {transform_indices = @transform_6, window_bounds = array<i64: 8, 1024>}, {transform_indices = @transform_7, window_bounds = array<i64: 8, 1024>}]} {
    %c0 = arith.constant 0 : index
    %c0_0 = arith.constant 0 : index
    %0 = vector.load %arg1[%c0, %c0_0] : memref<8x1024xf32, #tpu.memory_space<vmem>>, vector<8x1024xf32>
    %c0_1 = arith.constant 0 : index
    %c0_2 = arith.constant 0 : index
    %1 = vector.load %arg2[%c0_1, %c0_2] : memref<1x1024xi32, #tpu.memory_space<vmem>>, vector<1x1024xi32>
    %c0_3 = arith.constant 0 : index
    %c0_4 = arith.constant 0 : index
    %2 = vector.load %arg3[%c0_3, %c0_4] : memref<8x9xf32, #tpu.memory_space<vmem>>, vector<8x9xf32>
    %c0_5 = arith.constant 0 : index
    %c0_6 = arith.constant 0 : index
    %3 = vector.load %arg5[%c0_5, %c0_6] : memref<8x9xf32, #tpu.memory_space<vmem>>, vector<8x9xf32>
    %4 = tpu.iota {dimensions = array<i32: 1>} : vector<1x1024xi32>
    %c-1_i32 = arith.constant -1 : i32
    %5 = vector.broadcast %c-1_i32 : i32 to vector<1x1024xi32>
    %6 = arith.addi %1, %5 : vector<1x1024xi32>
    %c0_i32 = arith.constant 0 : i32
    %7 = vector.broadcast %c0_i32 : i32 to vector<1x1024xi32>
    %8 = arith.cmpi sge, %6, %7 : vector<1x1024xi32>
    %c32_i32 = arith.constant 32 : i32
    %9 = vector.broadcast %c32_i32 : i32 to vector<1x1024xi32>
    %10 = arith.cmpi slt, %6, %9 : vector<1x1024xi32>
    %11 = arith.andi %8, %10 : vector<1x1024xi1>
    %12 = arith.extui %11 : vector<1x1024xi1> to vector<1x1024xi32>
    %13 = arith.sitofp %12 : vector<1x1024xi32> to vector<1x1024xf32>
    %c-32_i32 = arith.constant -32 : i32
    %14 = vector.broadcast %c-32_i32 : i32 to vector<1x1024xi32>
    %15 = arith.addi %4, %14 : vector<1x1024xi32>
    %c0_i32_7 = arith.constant 0 : i32
    %16 = vector.broadcast %c0_i32_7 : i32 to vector<1x1024xi32>
    %17 = arith.cmpi sge, %15, %16 : vector<1x1024xi32>
    %c1024_i32 = arith.constant 1024 : i32
    %18 = vector.broadcast %c1024_i32 : i32 to vector<1x1024xi32>
    %19 = arith.cmpi slt, %15, %18 : vector<1x1024xi32>
    %20 = arith.andi %17, %19 : vector<1x1024xi1>
    %21 = arith.extui %20 : vector<1x1024xi1> to vector<1x1024xi32>
    %22 = arith.sitofp %21 : vector<1x1024xi32> to vector<1x1024xf32>
    %c0_i32_8 = arith.constant 0 : i32
    %23 = vector.broadcast %c0_i32_8 : i32 to vector<1x1024xi32>
    %24 = arith.addi %1, %23 : vector<1x1024xi32>
    %c0_i32_9 = arith.constant 0 : i32
    %25 = vector.broadcast %c0_i32_9 : i32 to vector<1x1024xi32>
    %26 = arith.cmpi sge, %24, %25 : vector<1x1024xi32>
    %c32_i32_10 = arith.constant 32 : i32
    %27 = vector.broadcast %c32_i32_10 : i32 to vector<1x1024xi32>
    %28 = arith.cmpi slt, %24, %27 : vector<1x1024xi32>
    %29 = arith.andi %26, %28 : vector<1x1024xi1>
    %30 = arith.extui %29 : vector<1x1024xi1> to vector<1x1024xi32>
    %31 = arith.sitofp %30 : vector<1x1024xi32> to vector<1x1024xf32>
    %c0_i32_11 = arith.constant 0 : i32
    %32 = vector.broadcast %c0_i32_11 : i32 to vector<1x1024xi32>
    %33 = arith.addi %4, %32 : vector<1x1024xi32>
    %c0_i32_12 = arith.constant 0 : i32
    %34 = vector.broadcast %c0_i32_12 : i32 to vector<1x1024xi32>
    %35 = arith.cmpi sge, %33, %34 : vector<1x1024xi32>
    %c1024_i32_13 = arith.constant 1024 : i32
    %36 = vector.broadcast %c1024_i32_13 : i32 to vector<1x1024xi32>
    %37 = arith.cmpi slt, %33, %36 : vector<1x1024xi32>
    %38 = arith.andi %35, %37 : vector<1x1024xi1>
    %39 = arith.extui %38 : vector<1x1024xi1> to vector<1x1024xi32>
    %40 = arith.sitofp %39 : vector<1x1024xi32> to vector<1x1024xf32>
    %c1_i32 = arith.constant 1 : i32
    %41 = vector.broadcast %c1_i32 : i32 to vector<1x1024xi32>
    %42 = arith.addi %1, %41 : vector<1x1024xi32>
    %c0_i32_14 = arith.constant 0 : i32
    %43 = vector.broadcast %c0_i32_14 : i32 to vector<1x1024xi32>
    %44 = arith.cmpi sge, %42, %43 : vector<1x1024xi32>
    %c32_i32_15 = arith.constant 32 : i32
    %45 = vector.broadcast %c32_i32_15 : i32 to vector<1x1024xi32>
    %46 = arith.cmpi slt, %42, %45 : vector<1x1024xi32>
    %47 = arith.andi %44, %46 : vector<1x1024xi1>
    %48 = arith.extui %47 : vector<1x1024xi1> to vector<1x1024xi32>
    %49 = arith.sitofp %48 : vector<1x1024xi32> to vector<1x1024xf32>
    %c32_i32_16 = arith.constant 32 : i32
    %50 = vector.broadcast %c32_i32_16 : i32 to vector<1x1024xi32>
    %51 = arith.addi %4, %50 : vector<1x1024xi32>
    %c0_i32_17 = arith.constant 0 : i32
    %52 = vector.broadcast %c0_i32_17 : i32 to vector<1x1024xi32>
    %53 = arith.cmpi sge, %51, %52 : vector<1x1024xi32>
    %c1024_i32_18 = arith.constant 1024 : i32
    %54 = vector.broadcast %c1024_i32_18 : i32 to vector<1x1024xi32>
    %55 = arith.cmpi slt, %51, %54 : vector<1x1024xi32>
    %56 = arith.andi %53, %55 : vector<1x1024xi1>
    %57 = arith.extui %56 : vector<1x1024xi1> to vector<1x1024xi32>
    %58 = arith.sitofp %57 : vector<1x1024xi32> to vector<1x1024xf32>
    %cst = arith.constant 0.000000e+00 : f32
    %59 = vector.broadcast %cst : f32 to vector<8x1024xf32>
    %cst_19 = arith.constant 0.000000e+00 : f32
    %60 = vector.broadcast %cst_19 : f32 to vector<8x1024xf32>
    %c33_i32 = arith.constant 33 : i32
    %61 = tpu.dynamic_rotate %0 by %c33_i32 dim 1 : vector<8x1024xf32>, i32 -> vector<8x1024xf32>
    %62 = arith.mulf %13, %22 : vector<1x1024xf32>
    %63 = vector.broadcast %62 : vector<1x1024xf32> to vector<8x1024xf32>
    %64 = arith.mulf %61, %63 : vector<8x1024xf32>
    %65 = vector.extract_strided_slice %2 {offsets = [0, 0], sizes = [8, 1], strides = [1, 1]} : vector<8x9xf32> to vector<8x1xf32>
    %66 = vector.broadcast %65 : vector<8x1xf32> to vector<8x1024xf32>
    %67 = arith.mulf %64, %66 : vector<8x1024xf32>
    %68 = arith.addf %59, %67 : vector<8x1024xf32>
    %69 = vector.extract_strided_slice %3 {offsets = [0, 0], sizes = [8, 1], strides = [1, 1]} : vector<8x9xf32> to vector<8x1xf32>
    %70 = vector.broadcast %69 : vector<8x1xf32> to vector<8x1024xf32>
    %71 = arith.mulf %64, %70 : vector<8x1024xf32>
    %72 = arith.addf %60, %71 : vector<8x1024xf32>
    %c32_i32_20 = arith.constant 32 : i32
    %73 = tpu.dynamic_rotate %0 by %c32_i32_20 dim 1 : vector<8x1024xf32>, i32 -> vector<8x1024xf32>
    %74 = arith.mulf %31, %22 : vector<1x1024xf32>
    %75 = vector.broadcast %74 : vector<1x1024xf32> to vector<8x1024xf32>
    %76 = arith.mulf %73, %75 : vector<8x1024xf32>
    %77 = vector.extract_strided_slice %2 {offsets = [0, 1], sizes = [8, 1], strides = [1, 1]} : vector<8x9xf32> to vector<8x1xf32>
    %78 = vector.broadcast %77 : vector<8x1xf32> to vector<8x1024xf32>
    %79 = arith.mulf %76, %78 : vector<8x1024xf32>
    %80 = arith.addf %68, %79 : vector<8x1024xf32>
    %81 = vector.extract_strided_slice %3 {offsets = [0, 1], sizes = [8, 1], strides = [1, 1]} : vector<8x9xf32> to vector<8x1xf32>
    %82 = vector.broadcast %81 : vector<8x1xf32> to vector<8x1024xf32>
    %83 = arith.mulf %76, %82 : vector<8x1024xf32>
    %84 = arith.addf %72, %83 : vector<8x1024xf32>
    %c31_i32 = arith.constant 31 : i32
    %85 = tpu.dynamic_rotate %0 by %c31_i32 dim 1 : vector<8x1024xf32>, i32 -> vector<8x1024xf32>
    %86 = arith.mulf %49, %22 : vector<1x1024xf32>
    %87 = vector.broadcast %86 : vector<1x1024xf32> to vector<8x1024xf32>
    %88 = arith.mulf %85, %87 : vector<8x1024xf32>
    %89 = vector.extract_strided_slice %2 {offsets = [0, 2], sizes = [8, 1], strides = [1, 1]} : vector<8x9xf32> to vector<8x1xf32>
    %90 = vector.broadcast %89 : vector<8x1xf32> to vector<8x1024xf32>
    %91 = arith.mulf %88, %90 : vector<8x1024xf32>
    %92 = arith.addf %80, %91 : vector<8x1024xf32>
    %93 = vector.extract_strided_slice %3 {offsets = [0, 2], sizes = [8, 1], strides = [1, 1]} : vector<8x9xf32> to vector<8x1xf32>
    %94 = vector.broadcast %93 : vector<8x1xf32> to vector<8x1024xf32>
    %95 = arith.mulf %88, %94 : vector<8x1024xf32>
    %96 = arith.addf %84, %95 : vector<8x1024xf32>
    %c1_i32_21 = arith.constant 1 : i32
    %97 = tpu.dynamic_rotate %0 by %c1_i32_21 dim 1 : vector<8x1024xf32>, i32 -> vector<8x1024xf32>
    %98 = arith.mulf %13, %40 : vector<1x1024xf32>
    %99 = vector.broadcast %98 : vector<1x1024xf32> to vector<8x1024xf32>
    %100 = arith.mulf %97, %99 : vector<8x1024xf32>
    %101 = vector.extract_strided_slice %2 {offsets = [0, 3], sizes = [8, 1], strides = [1, 1]} : vector<8x9xf32> to vector<8x1xf32>
    %102 = vector.broadcast %101 : vector<8x1xf32> to vector<8x1024xf32>
    %103 = arith.mulf %100, %102 : vector<8x1024xf32>
    %104 = arith.addf %92, %103 : vector<8x1024xf32>
    %105 = vector.extract_strided_slice %3 {offsets = [0, 3], sizes = [8, 1], strides = [1, 1]} : vector<8x9xf32> to vector<8x1xf32>
    %106 = vector.broadcast %105 : vector<8x1xf32> to vector<8x1024xf32>
    %107 = arith.mulf %100, %106 : vector<8x1024xf32>
    %108 = arith.addf %96, %107 : vector<8x1024xf32>
    %109 = vector.extract_strided_slice %2 {offsets = [0, 4], sizes = [8, 1], strides = [1, 1]} : vector<8x9xf32> to vector<8x1xf32>
    %110 = vector.broadcast %109 : vector<8x1xf32> to vector<8x1024xf32>
    %111 = arith.mulf %0, %110 : vector<8x1024xf32>
    %112 = arith.addf %104, %111 : vector<8x1024xf32>
    %113 = vector.extract_strided_slice %3 {offsets = [0, 4], sizes = [8, 1], strides = [1, 1]} : vector<8x9xf32> to vector<8x1xf32>
    %114 = vector.broadcast %113 : vector<8x1xf32> to vector<8x1024xf32>
    %115 = arith.mulf %0, %114 : vector<8x1024xf32>
    %116 = arith.addf %108, %115 : vector<8x1024xf32>
    %c1023_i32 = arith.constant 1023 : i32
    %117 = tpu.dynamic_rotate %0 by %c1023_i32 dim 1 : vector<8x1024xf32>, i32 -> vector<8x1024xf32>
    %118 = arith.mulf %49, %40 : vector<1x1024xf32>
    %119 = vector.broadcast %118 : vector<1x1024xf32> to vector<8x1024xf32>
    %120 = arith.mulf %117, %119 : vector<8x1024xf32>
    %121 = vector.extract_strided_slice %2 {offsets = [0, 5], sizes = [8, 1], strides = [1, 1]} : vector<8x9xf32> to vector<8x1xf32>
    %122 = vector.broadcast %121 : vector<8x1xf32> to vector<8x1024xf32>
    %123 = arith.mulf %120, %122 : vector<8x1024xf32>
    %124 = arith.addf %112, %123 : vector<8x1024xf32>
    %125 = vector.extract_strided_slice %3 {offsets = [0, 5], sizes = [8, 1], strides = [1, 1]} : vector<8x9xf32> to vector<8x1xf32>
    %126 = vector.broadcast %125 : vector<8x1xf32> to vector<8x1024xf32>
    %127 = arith.mulf %120, %126 : vector<8x1024xf32>
    %128 = arith.addf %116, %127 : vector<8x1024xf32>
    %c993_i32 = arith.constant 993 : i32
    %129 = tpu.dynamic_rotate %0 by %c993_i32 dim 1 : vector<8x1024xf32>, i32 -> vector<8x1024xf32>
    %130 = arith.mulf %13, %58 : vector<1x1024xf32>
    %131 = vector.broadcast %130 : vector<1x1024xf32> to vector<8x1024xf32>
    %132 = arith.mulf %129, %131 : vector<8x1024xf32>
    %133 = vector.extract_strided_slice %2 {offsets = [0, 6], sizes = [8, 1], strides = [1, 1]} : vector<8x9xf32> to vector<8x1xf32>
    %134 = vector.broadcast %133 : vector<8x1xf32> to vector<8x1024xf32>
    %135 = arith.mulf %132, %134 : vector<8x1024xf32>
    %136 = arith.addf %124, %135 : vector<8x1024xf32>
    %137 = vector.extract_strided_slice %3 {offsets = [0, 6], sizes = [8, 1], strides = [1, 1]} : vector<8x9xf32> to vector<8x1xf32>
    %138 = vector.broadcast %137 : vector<8x1xf32> to vector<8x1024xf32>
    %139 = arith.mulf %132, %138 : vector<8x1024xf32>
    %140 = arith.addf %128, %139 : vector<8x1024xf32>
    %c992_i32 = arith.constant 992 : i32
    %141 = tpu.dynamic_rotate %0 by %c992_i32 dim 1 : vector<8x1024xf32>, i32 -> vector<8x1024xf32>
    %142 = arith.mulf %31, %58 : vector<1x1024xf32>
    %143 = vector.broadcast %142 : vector<1x1024xf32> to vector<8x1024xf32>
    %144 = arith.mulf %141, %143 : vector<8x1024xf32>
    %145 = vector.extract_strided_slice %2 {offsets = [0, 7], sizes = [8, 1], strides = [1, 1]} : vector<8x9xf32> to vector<8x1xf32>
    %146 = vector.broadcast %145 : vector<8x1xf32> to vector<8x1024xf32>
    %147 = arith.mulf %144, %146 : vector<8x1024xf32>
    %148 = arith.addf %136, %147 : vector<8x1024xf32>
    %149 = vector.extract_strided_slice %3 {offsets = [0, 7], sizes = [8, 1], strides = [1, 1]} : vector<8x9xf32> to vector<8x1xf32>
    %150 = vector.broadcast %149 : vector<8x1xf32> to vector<8x1024xf32>
    %151 = arith.mulf %144, %150 : vector<8x1024xf32>
    %152 = arith.addf %140, %151 : vector<8x1024xf32>
    %c991_i32 = arith.constant 991 : i32
    %153 = tpu.dynamic_rotate %0 by %c991_i32 dim 1 : vector<8x1024xf32>, i32 -> vector<8x1024xf32>
    %154 = arith.mulf %49, %58 : vector<1x1024xf32>
    %155 = vector.broadcast %154 : vector<1x1024xf32> to vector<8x1024xf32>
    %156 = arith.mulf %153, %155 : vector<8x1024xf32>
    %157 = vector.extract_strided_slice %2 {offsets = [0, 8], sizes = [8, 1], strides = [1, 1]} : vector<8x9xf32> to vector<8x1xf32>
    %158 = vector.broadcast %157 : vector<8x1xf32> to vector<8x1024xf32>
    %159 = arith.mulf %156, %158 : vector<8x1024xf32>
    %160 = arith.addf %148, %159 : vector<8x1024xf32>
    %161 = vector.extract_strided_slice %3 {offsets = [0, 8], sizes = [8, 1], strides = [1, 1]} : vector<8x9xf32> to vector<8x1xf32>
    %162 = vector.broadcast %161 : vector<8x1xf32> to vector<8x1024xf32>
    %163 = arith.mulf %156, %162 : vector<8x1024xf32>
    %164 = arith.addf %152, %163 : vector<8x1024xf32>
    %c0_22 = arith.constant 0 : index
    %c0_23 = arith.constant 0 : index
    %165 = vector.load %arg4[%c0_22, %c0_23] : memref<8x1xf32, #tpu.memory_space<vmem>>, vector<8x1xf32>
    %166 = vector.broadcast %165 : vector<8x1xf32> to vector<8x1024xf32>
    %167 = arith.addf %160, %166 : vector<8x1024xf32>
    %168 = arith.truncf %167 : vector<8x1024xf32> to vector<8x1024xbf16>
    %c0_24 = arith.constant 0 : index
    %c0_25 = arith.constant 0 : index
    %169 = vector.load %arg7[%c0_24, %c0_25] : memref<8x1024xbf16, #tpu.memory_space<vmem>>, vector<8x1024xbf16>
    tpu.vector_store %arg7[%c0_24, %c0_25], %168 {strides = array<i32>} : memref<8x1024xbf16, #tpu.memory_space<vmem>>, vector<8x1024xbf16>,
    %c0_26 = arith.constant 0 : index
    %c0_27 = arith.constant 0 : index
    %170 = vector.load %arg6[%c0_26, %c0_27] : memref<8x1xf32, #tpu.memory_space<vmem>>, vector<8x1xf32>
    %171 = vector.broadcast %170 : vector<8x1xf32> to vector<8x1024xf32>
    %172 = arith.addf %164, %171 : vector<8x1024xf32>
    %173 = arith.truncf %172 : vector<8x1024xf32> to vector<8x1024xbf16>
    %c0_28 = arith.constant 0 : index
    %c0_29 = arith.constant 0 : index
    %174 = vector.load %arg8[%c0_28, %c0_29] : memref<8x1024xbf16, #tpu.memory_space<vmem>>, vector<8x1024xbf16>
    tpu.vector_store %arg8[%c0_28, %c0_29], %173 {strides = array<i32>} : memref<8x1024xbf16, #tpu.memory_space<vmem>>, vector<8x1024xbf16>,
    return
  }
  func.func @transform_0(%arg0: i32) -> (i32, i32) {
    %c0_i32 = arith.constant 0 : i32
    %c0_i32_0 = arith.constant 0 : i32
    return %arg0, %c0_i32 : i32, i32
  }
  func.func @transform_1(%arg0: i32) -> (i32, i32) {
    %c0_i32 = arith.constant 0 : i32
    %c0_i32_0 = arith.constant 0 : i32
    %c0_i32_1 = arith.constant 0 : i32
    return %c0_i32, %c0_i32_0 : i32, i32
  }
  func.func @transform_2(%arg0: i32) -> (i32, i32) {
    %c0_i32 = arith.constant 0 : i32
    %c0_i32_0 = arith.constant 0 : i32
    return %arg0, %c0_i32 : i32, i32
  }
  func.func @transform_3(%arg0: i32) -> (i32, i32) {
    %c0_i32 = arith.constant 0 : i32
    %c0_i32_0 = arith.constant 0 : i32
    return %arg0, %c0_i32 : i32, i32
  }
  func.func @transform_4(%arg0: i32) -> (i32, i32) {
    %c0_i32 = arith.constant 0 : i32
    %c0_i32_0 = arith.constant 0 : i32
    return %arg0, %c0_i32 : i32, i32
  }
  func.func @transform_5(%arg0: i32) -> (i32, i32) {
    %c0_i32 = arith.constant 0 : i32
    %c0_i32_0 = arith.constant 0 : i32
    return %arg0, %c0_i32 : i32, i32
  }
  func.func @transform_6(%arg0: i32) -> (i32, i32) {
    %c0_i32 = arith.constant 0 : i32
    %c0_i32_0 = arith.constant 0 : i32
    return %arg0, %c0_i32 : i32, i32
  }
  func.func @transform_7(%arg0: i32) -> (i32, i32) {
    %c0_i32 = arith.constant 0 : i32
    %c0_i32_0 = arith.constant 0 : i32
    return %arg0, %c0_i32 : i32, i32
  }
}

module attributes {stable_mosaic.version = 11 : i64} {
  func.func @_attn_kernel(%arg0: i32, %arg1: i32, %arg2: memref<1x4x1024xbf16, #tpu.memory_space<vmem>>, %arg3: memref<1x1024x4xbf16, #tpu.memory_space<vmem>>, %arg4: memref<1x4x1024xbf16, #tpu.memory_space<vmem>>, %arg5: memref<1x4x1024xf32, #tpu.memory_space<vmem>>, %arg6: memref<4x1xf32, #tpu.memory_space<vmem>>, %arg7: memref<4x1xf32, #tpu.memory_space<vmem>>, %arg8: memref<4x1024xf32, #tpu.memory_space<vmem>>) attributes {dimension_semantics = [#tpu.dimension_semantics<parallel>, #tpu.dimension_semantics<arbitrary>], iteration_bounds = array<i64: 2, 1>, scalar_prefetch = 0 : i64, scratch_operands = 3 : i64, tpu.core_type = #tpu.core_type<tc>, window_params = [{transform_indices = @transform_0, window_bounds = array<i64: 1, 4, 1024>}, {transform_indices = @transform_1, window_bounds = array<i64: 1, 1024, 4>}, {transform_indices = @transform_2, window_bounds = array<i64: 1, 4, 1024>}, {transform_indices = @transform_3, window_bounds = array<i64: 1, 4, 1024>}]} {
    %c0_i32 = arith.constant 0 : i32
    %0 = arith.cmpi eq, %arg1, %c0_i32 : i32
    %1 = arith.extui %0 : i1 to i32
    %c0_i32_0 = arith.constant 0 : i32
    %2 = arith.cmpi ne, %1, %c0_i32_0 : i32
    scf.if %2 {
      %cst_26 = arith.constant 0xFF800000 : f32
      %36 = vector.broadcast %cst_26 : f32 to vector<4x1xf32>
      %c0_27 = arith.constant 0 : index
      %c0_28 = arith.constant 0 : index
      %37 = vector.load %arg6[%c0_27, %c0_28] : memref<4x1xf32, #tpu.memory_space<vmem>>, vector<4x1xf32>
      tpu.vector_store %arg6[%c0_27, %c0_28], %36 {strides = array<i32>} : memref<4x1xf32, #tpu.memory_space<vmem>>, vector<4x1xf32>,
      %cst_29 = arith.constant 0.000000e+00 : f32
      %38 = vector.broadcast %cst_29 : f32 to vector<4x1xf32>
      %c0_30 = arith.constant 0 : index
      %c0_31 = arith.constant 0 : index
      %39 = vector.load %arg7[%c0_30, %c0_31] : memref<4x1xf32, #tpu.memory_space<vmem>>, vector<4x1xf32>
      tpu.vector_store %arg7[%c0_30, %c0_31], %38 {strides = array<i32>} : memref<4x1xf32, #tpu.memory_space<vmem>>, vector<4x1xf32>,
      %cst_32 = arith.constant 0.000000e+00 : f32
      %40 = vector.broadcast %cst_32 : f32 to vector<4x1024xf32>
      %c0_33 = arith.constant 0 : index
      %c0_34 = arith.constant 0 : index
      %41 = vector.load %arg8[%c0_33, %c0_34] : memref<4x1024xf32, #tpu.memory_space<vmem>>, vector<4x1024xf32>
      tpu.vector_store %arg8[%c0_33, %c0_34], %40 {strides = array<i32>} : memref<4x1024xf32, #tpu.memory_space<vmem>>, vector<4x1024xf32>,
    } else {
    }
    %c0 = arith.constant 0 : index
    %c0_1 = arith.constant 0 : index
    %c0_2 = arith.constant 0 : index
    %3 = vector.load %arg2[%c0, %c0_1, %c0_2] : memref<1x4x1024xbf16, #tpu.memory_space<vmem>>, vector<1x4x1024xbf16>
    %4 = vector.shape_cast %3 : vector<1x4x1024xbf16> to vector<4x1024xbf16>
    %c0_3 = arith.constant 0 : index
    %c0_4 = arith.constant 0 : index
    %c0_5 = arith.constant 0 : index
    %5 = vector.load %arg3[%c0_3, %c0_4, %c0_5] : memref<1x1024x4xbf16, #tpu.memory_space<vmem>>, vector<1x1024x4xbf16>
    %6 = vector.shape_cast %5 : vector<1x1024x4xbf16> to vector<1024x4xbf16>
    %cst = arith.constant dense<0.000000e+00> : vector<4x4xf32>
    %7 = tpu.matmul %4, %6, %cst {dimension_numbers = #tpu.dot_dimension_numbers<[1], [0], [0], [1], [0, 0, 1, 1], [], []>} : vector<4x1024xbf16>, vector<1024x4xbf16>, vector<4x4xf32> -> vector<4x4xf32>
    %c0_6 = arith.constant 0 : index
    %c0_7 = arith.constant 0 : index
    %8 = vector.load %arg6[%c0_6, %c0_7] : memref<4x1xf32, #tpu.memory_space<vmem>>, vector<4x1xf32>
    %cst_8 = arith.constant dense<0xFF800000> : vector<4xf32>
    %9 = vector.multi_reduction <maximumf>, %7, %cst_8 [1] : vector<4x4xf32> to vector<4xf32>
    %10 = vector.shape_cast %9 : vector<4xf32> to vector<4x1xf32>
    %11 = arith.maximumf %8, %10 : vector<4x1xf32>
    %12 = arith.subf %8, %11 : vector<4x1xf32>
    %13 = math.exp %12 : vector<4x1xf32>
    %14 = vector.broadcast %11 : vector<4x1xf32> to vector<4x4xf32>
    %15 = arith.subf %7, %14 : vector<4x4xf32>
    %16 = math.exp %15 : vector<4x4xf32>
    %c0_9 = arith.constant 0 : index
    %c0_10 = arith.constant 0 : index
    %17 = vector.load %arg7[%c0_9, %c0_10] : memref<4x1xf32, #tpu.memory_space<vmem>>, vector<4x1xf32>
    %18 = arith.mulf %13, %17 : vector<4x1xf32>
    %cst_11 = arith.constant dense<0.000000e+00> : vector<4xf32>
    %19 = vector.multi_reduction <add>, %16, %cst_11 [1] : vector<4x4xf32> to vector<4xf32>
    %20 = vector.shape_cast %19 : vector<4xf32> to vector<4x1xf32>
    %21 = arith.addf %18, %20 : vector<4x1xf32>
    %c0_12 = arith.constant 0 : index
    %c0_13 = arith.constant 0 : index
    %22 = vector.load %arg7[%c0_12, %c0_13] : memref<4x1xf32, #tpu.memory_space<vmem>>, vector<4x1xf32>
    tpu.vector_store %arg7[%c0_12, %c0_13], %21 {strides = array<i32>} : memref<4x1xf32, #tpu.memory_space<vmem>>, vector<4x1xf32>,
    %c0_14 = arith.constant 0 : index
    %c0_15 = arith.constant 0 : index
    %23 = vector.load %arg8[%c0_14, %c0_15] : memref<4x1024xf32, #tpu.memory_space<vmem>>, vector<4x1024xf32>
    %24 = vector.broadcast %13 : vector<4x1xf32> to vector<4x1024xf32>
    %25 = arith.mulf %24, %23 : vector<4x1024xf32>
    %26 = arith.truncf %16 : vector<4x4xf32> to vector<4x4xbf16>
    %c0_16 = arith.constant 0 : index
    %c0_17 = arith.constant 0 : index
    %c0_18 = arith.constant 0 : index
    %27 = vector.load %arg4[%c0_16, %c0_17, %c0_18] : memref<1x4x1024xbf16, #tpu.memory_space<vmem>>, vector<1x4x1024xbf16>
    %28 = vector.shape_cast %27 : vector<1x4x1024xbf16> to vector<4x1024xbf16>
    %cst_19 = arith.constant dense<0.000000e+00> : vector<4x1024xf32>
    %29 = tpu.matmul %26, %28, %cst_19 {dimension_numbers = #tpu.dot_dimension_numbers<[1], [0], [0], [1], [0, 0, 1, 1], [], []>} : vector<4x4xbf16>, vector<4x1024xbf16>, vector<4x1024xf32> -> vector<4x1024xf32>
    %30 = arith.addf %25, %29 : vector<4x1024xf32>
    %c0_20 = arith.constant 0 : index
    %c0_21 = arith.constant 0 : index
    %31 = vector.load %arg8[%c0_20, %c0_21] : memref<4x1024xf32, #tpu.memory_space<vmem>>, vector<4x1024xf32>
    tpu.vector_store %arg8[%c0_20, %c0_21], %30 {strides = array<i32>} : memref<4x1024xf32, #tpu.memory_space<vmem>>, vector<4x1024xf32>,
    %c0_22 = arith.constant 0 : index
    %c0_23 = arith.constant 0 : index
    %32 = vector.load %arg6[%c0_22, %c0_23] : memref<4x1xf32, #tpu.memory_space<vmem>>, vector<4x1xf32>
    tpu.vector_store %arg6[%c0_22, %c0_23], %11 {strides = array<i32>} : memref<4x1xf32, #tpu.memory_space<vmem>>, vector<4x1xf32>,
    %c0_i32_24 = arith.constant 0 : i32
    %33 = arith.cmpi eq, %arg1, %c0_i32_24 : i32
    %34 = arith.extui %33 : i1 to i32
    %c0_i32_25 = arith.constant 0 : i32
    %35 = arith.cmpi ne, %34, %c0_i32_25 : i32
    scf.if %35 {
      %c0_26 = arith.constant 0 : index
      %c0_27 = arith.constant 0 : index
      %36 = vector.load %arg8[%c0_26, %c0_27] : memref<4x1024xf32, #tpu.memory_space<vmem>>, vector<4x1024xf32>
      %c0_28 = arith.constant 0 : index
      %c0_29 = arith.constant 0 : index
      %37 = vector.load %arg7[%c0_28, %c0_29] : memref<4x1xf32, #tpu.memory_space<vmem>>, vector<4x1xf32>
      %38 = tpu.reciprocal %37 {approx = true} : vector<4x1xf32> -> vector<4x1xf32>
      %39 = vector.broadcast %38 : vector<4x1xf32> to vector<4x1024xf32>
      %40 = arith.mulf %36, %39 : vector<4x1024xf32>
      %c0_30 = arith.constant 0 : index
      %c0_31 = arith.constant 0 : index
      %c0_32 = arith.constant 0 : index
      %41 = vector.load %arg5[%c0_30, %c0_31, %c0_32] : memref<1x4x1024xf32, #tpu.memory_space<vmem>>, vector<1x4x1024xf32>
      %42 = vector.shape_cast %41 : vector<1x4x1024xf32> to vector<4x1024xf32>
      %43 = vector.shape_cast %40 : vector<4x1024xf32> to vector<1x4x1024xf32>
      tpu.vector_store %arg5[%c0_30, %c0_31, %c0_32], %43 {strides = array<i32>} : memref<1x4x1024xf32, #tpu.memory_space<vmem>>, vector<1x4x1024xf32>,
    } else {
    }
    return
  }
  func.func @transform_0(%arg0: i32, %arg1: i32) -> (i32, i32, i32) {
    %c0_i32 = arith.constant 0 : i32
    %c0_i32_0 = arith.constant 0 : i32
    %c0_i32_1 = arith.constant 0 : i32
    return %arg0, %c0_i32, %c0_i32_0 : i32, i32, i32
  }
  func.func @transform_1(%arg0: i32, %arg1: i32) -> (i32, i32, i32) {
    %c0_i32 = arith.constant 0 : i32
    %c0_i32_0 = arith.constant 0 : i32
    return %arg0, %c0_i32, %arg1 : i32, i32, i32
  }
  func.func @transform_2(%arg0: i32, %arg1: i32) -> (i32, i32, i32) {
    %c0_i32 = arith.constant 0 : i32
    %c0_i32_0 = arith.constant 0 : i32
    return %arg0, %arg1, %c0_i32 : i32, i32, i32
  }
  func.func @transform_3(%arg0: i32, %arg1: i32) -> (i32, i32, i32) {
    %c0_i32 = arith.constant 0 : i32
    %c0_i32_0 = arith.constant 0 : i32
    %c0_i32_1 = arith.constant 0 : i32
    return %arg0, %c0_i32, %c0_i32_0 : i32, i32, i32
  }
}

module attributes {stable_mosaic.version = 11 : i64} {
  func.func @_conv1x1_res_kernel(%arg0: i32, %arg1: i32, %arg2: memref<1x4x1024xf32, #tpu.memory_space<vmem>>, %arg3: memref<1x4x1024xf32, #tpu.memory_space<vmem>>, %arg4: memref<4x4xf32, #tpu.memory_space<vmem>>, %arg5: memref<1x4x1024xf32, #tpu.memory_space<vmem>>) attributes {dimension_semantics = [#tpu.dimension_semantics<parallel>, #tpu.dimension_semantics<parallel>], iteration_bounds = array<i64: 2, 1>, scalar_prefetch = 0 : i64, scratch_operands = 0 : i64, tpu.core_type = #tpu.core_type<tc>, window_params = [{transform_indices = @transform_0, window_bounds = array<i64: 1, 4, 1024>}, {transform_indices = @transform_1, window_bounds = array<i64: 1, 4, 1024>}, {pipeline_mode = #tpu.pipeline_mode<synchronous>, transform_indices = @transform_2, window_bounds = array<i64: 4, 4>}, {transform_indices = @transform_3, window_bounds = array<i64: 1, 4, 1024>}]} {
    %c0 = arith.constant 0 : index
    %c0_0 = arith.constant 0 : index
    %c0_1 = arith.constant 0 : index
    %0 = vector.load %arg2[%c0, %c0_0, %c0_1] : memref<1x4x1024xf32, #tpu.memory_space<vmem>>, vector<1x4x1024xf32>
    %1 = vector.shape_cast %0 : vector<1x4x1024xf32> to vector<4x1024xf32>
    %c0_2 = arith.constant 0 : index
    %c0_3 = arith.constant 0 : index
    %c0_4 = arith.constant 0 : index
    %2 = vector.load %arg3[%c0_2, %c0_3, %c0_4] : memref<1x4x1024xf32, #tpu.memory_space<vmem>>, vector<1x4x1024xf32>
    %3 = vector.shape_cast %2 : vector<1x4x1024xf32> to vector<4x1024xf32>
    %4 = arith.addf %1, %3 : vector<4x1024xf32>
    %c0_5 = arith.constant 0 : index
    %c0_6 = arith.constant 0 : index
    %5 = vector.load %arg4[%c0_5, %c0_6] : memref<4x4xf32, #tpu.memory_space<vmem>>, vector<4x4xf32>
    %cst = arith.constant dense<0.000000e+00> : vector<4x1024xf32>
    %6 = tpu.matmul %5, %4, %cst {dimension_numbers = #tpu.dot_dimension_numbers<[1], [0], [0], [1], [0, 0, 1, 1], [], []>} : vector<4x4xf32>, vector<4x1024xf32>, vector<4x1024xf32> -> vector<4x1024xf32>
    %c0_7 = arith.constant 0 : index
    %c0_8 = arith.constant 0 : index
    %c0_9 = arith.constant 0 : index
    %7 = vector.load %arg5[%c0_7, %c0_8, %c0_9] : memref<1x4x1024xf32, #tpu.memory_space<vmem>>, vector<1x4x1024xf32>
    %8 = vector.shape_cast %7 : vector<1x4x1024xf32> to vector<4x1024xf32>
    %9 = vector.shape_cast %6 : vector<4x1024xf32> to vector<1x4x1024xf32>
    tpu.vector_store %arg5[%c0_7, %c0_8, %c0_9], %9 {strides = array<i32>} : memref<1x4x1024xf32, #tpu.memory_space<vmem>>, vector<1x4x1024xf32>,
    return
  }
  func.func @transform_0(%arg0: i32, %arg1: i32) -> (i32, i32, i32) {
    %c0_i32 = arith.constant 0 : i32
    %c0_i32_0 = arith.constant 0 : i32
    return %arg0, %c0_i32, %arg1 : i32, i32, i32
  }
  func.func @transform_1(%arg0: i32, %arg1: i32) -> (i32, i32, i32) {
    %c0_i32 = arith.constant 0 : i32
    %c0_i32_0 = arith.constant 0 : i32
    return %arg0, %c0_i32, %arg1 : i32, i32, i32
  }
  func.func @transform_2(%arg0: i32, %arg1: i32) -> (i32, i32) {
    %c0_i32 = arith.constant 0 : i32
    %c0_i32_0 = arith.constant 0 : i32
    %c0_i32_1 = arith.constant 0 : i32
    return %c0_i32, %c0_i32_0 : i32, i32
  }
  func.func @transform_3(%arg0: i32, %arg1: i32) -> (i32, i32, i32) {
    %c0_i32 = arith.constant 0 : i32
    %c0_i32_0 = arith.constant 0 : i32
    return %arg0, %c0_i32, %arg1 : i32, i32, i32
  }
}

</mosaic_0001>

<llo_original>
// kernel: pmpa1_ave_forward.3
$region0: #{pmpa1_ave_forward.3}
  #allocation0 [shape = 'u32[]', space=smem, size = 0x4, offset = 0x4, fixed_abs, tag = 'smem constant byte address 0x4 - core index']
  #allocation1 [shape = 'u32[144,128]{1,0:T(1,128)}', space=vmem, size = 0x12000, scoped, tag = 'internal scratch']
  %s0 = inlined_call_operand.vmem [shape: f32[8,1024], index: 0, kind: input, shape index: {}]
  %s1 = inlined_call_operand.vmem [shape: s32[1,1024], index: 1, kind: input, shape index: {}]
  %s2 = inlined_call_operand.vmem [shape: f32[8,9], index: 2, kind: input, shape index: {}]
  %s3 = inlined_call_operand.vmem [shape: f32[8,1], index: 3, kind: input, shape index: {}]
  %s4 = inlined_call_operand.vmem [shape: f32[8,9], index: 4, kind: input, shape index: {}]
  %s5 = inlined_call_operand.vmem [shape: f32[8,1], index: 5, kind: input, shape index: {}]
  %s6 = inlined_call_operand.vmem [shape: bf16[8,1024], index: 6, kind: output, shape index: {0}]
  %s7 = inlined_call_operand.vmem [shape: bf16[8,1024], index: 7, kind: output, shape index: {1}]
  %8 = xla_tuple %s6, %s7
  %s9 = sld [smem:[#allocation0]]
  $region42: #{pmpa1_ave_forward.3} parent=0
    _
  %s11 = ssub.s32 1, %s9
  %s12 = scalar_select 0, %s11, %s9
  // Predicated region
  $region2: #{pmpa1_ave_forward.3} parent=0 // pred_check
    _
  $region3: #{pmpa1_ave_forward.3} parent=0 // pred_check_branch
    %14 = sbr.rel (0) target = $region5
  $region4: #{pmpa1_ave_forward.3} parent=0 // pred_region
    _
  $region5: #{pmpa1_ave_forward.3} parent=0 // pred_fallthru
    _
  // Predicated region
  $region6: #{pmpa1_ave_forward.3} parent=0 // pred_check
    _
  $region7: #{pmpa1_ave_forward.3} parent=0 // pred_check_branch
    %16 = sbr.rel (0) target = $region9
  $region8: #{pmpa1_ave_forward.3} parent=0 // pred_region
    _
  $region9: #{pmpa1_ave_forward.3} parent=0 // pred_fallthru
    _
  // Predicated region
  $region10: #{pmpa1_ave_forward.3} parent=0 // pred_check
    _
  $region11: #{pmpa1_ave_forward.3} parent=0 // pred_check_branch
    %18 = sbr.rel (0) target = $region13
  $region12: #{pmpa1_ave_forward.3} parent=0 // pred_region
    _
  $region13: #{pmpa1_ave_forward.3} parent=0 // pred_fallthru
    _
  // Predicated region
  $region14: #{pmpa1_ave_forward.3} parent=0 // pred_check
    _
  $region15: #{pmpa1_ave_forward.3} parent=0 // pred_check_branch
    %20 = sbr.rel (0) target = $region17
  $region16: #{pmpa1_ave_forward.3} parent=0 // pred_region
    _
  $region17: #{pmpa1_ave_forward.3} parent=0 // pred_fallthru
    _
  // Predicated region
  $region18: #{pmpa1_ave_forward.3} parent=0 // pred_check
    _
  $region19: #{pmpa1_ave_forward.3} parent=0 // pred_check_branch
    %22 = sbr.rel (0) target = $region21
  $region20: #{pmpa1_ave_forward.3} parent=0 // pred_region
    _
  $region21: #{pmpa1_ave_forward.3} parent=0 // pred_fallthru
    _
  // Predicated region
  $region22: #{pmpa1_ave_forward.3} parent=0 // pred_check
    _
  $region23: #{pmpa1_ave_forward.3} parent=0 // pred_check_branch
    %24 = sbr.rel (0) target = $region25
  $region24: #{pmpa1_ave_forward.3} parent=0 // pred_region
    _
  $region25: #{pmpa1_ave_forward.3} parent=0 // pred_fallthru
    _
  %v25 = vld [vmem:[%s0] sm:$0xff]
  %v26 = vld [vmem:[%s0 + $0x8] sm:$0xff]
  %v27 = vld [vmem:[%s0 + $0x10] sm:$0xff]
  %v28 = vld [vmem:[%s0 + $0x18] sm:$0xff]
  %v29 = vld [vmem:[%s0 + $0x20] sm:$0xff]
  %v30 = vld [vmem:[%s0 + $0x28] sm:$0xff]
  %v31 = vld [vmem:[%s0 + $0x30] sm:$0xff]
  %v32 = vld [vmem:[%s0 + $0x38] sm:$0xff]
  %v33 = vld [vmem:[%s1] sm:$0xff]
  %v34 = vld [vmem:[%s2] sm:$0xff]
  %v35 = vld [vmem:[%s4] sm:$0xff]
  %v36 = vlaneseq
  %v37 = vand.u32 %v36, 127
  %v38 = vadd.s32 %v37, 128
  %v39 = vadd.s32 %v37, 256
  %v40 = vadd.s32 %v37, 384
  %v41 = vadd.s32 %v37, 512
  %v42 = vadd.s32 %v37, 640
  %v43 = vadd.s32 %v37, 768
  %v44 = vadd.s32 %v37, 896
  %v45 = vadd.s32 %v33, 4294967295
  %vm46 = vcmp.ge.s32.totalorder %v45, 0
  %vm47 = vcmp.lt.s32.totalorder %v45, 32
  %vm48 = vmand %vm46, %vm47
  %v49 = vsel %vm48, 1, 0
  %v50 = vcvt.s32.f32 %v49
  %v51 = vadd.s32 %v37, 4294967264
  %v52 = vadd.s32 %v38, 4294967264
  %v53 = vadd.s32 %v39, 4294967264
  %v54 = vadd.s32 %v40, 4294967264
  %v55 = vadd.s32 %v41, 4294967264
  %v56 = vadd.s32 %v42, 4294967264
  %v57 = vadd.s32 %v43, 4294967264
  %v58 = vadd.s32 %v44, 4294967264
  %vm59 = vcmp.ge.s32.totalorder %v51, 0
  %vm60 = vcmp.ge.s32.totalorder %v52, 0
  %vm61 = vcmp.ge.s32.totalorder %v53, 0
  %vm62 = vcmp.ge.s32.totalorder %v54, 0
  %vm63 = vcmp.ge.s32.totalorder %v55, 0
  %vm64 = vcmp.ge.s32.totalorder %v56, 0
  %vm65 = vcmp.ge.s32.totalorder %v57, 0
  %vm66 = vcmp.ge.s32.totalorder %v58, 0
  %vm67 = vcmp.lt.s32.totalorder %v51, 1024
  %vm68 = vcmp.lt.s32.totalorder %v52, 1024
  %vm69 = vcmp.lt.s32.totalorder %v53, 1024
  %vm70 = vcmp.lt.s32.totalorder %v54, 1024
  %vm71 = vcmp.lt.s32.totalorder %v55, 1024
  %vm72 = vcmp.lt.s32.totalorder %v56, 1024
  %vm73 = vcmp.lt.s32.totalorder %v57, 1024
  %vm74 = vcmp.lt.s32.totalorder %v58, 1024
  %vm75 = vmand %vm59, %vm67
  %vm76 = vmand %vm60, %vm68
  %vm77 = vmand %vm61, %vm69
  %vm78 = vmand %vm62, %vm70
  %vm79 = vmand %vm63, %vm71
  %vm80 = vmand %vm64, %vm72
  %vm81 = vmand %vm65, %vm73
  %vm82 = vmand %vm66, %vm74
  %v83 = vsel %vm75, 1, 0
  %v84 = vsel %vm76, 1, 0
  %v85 = vsel %vm77, 1, 0
  %v86 = vsel %vm78, 1, 0
  %v87 = vsel %vm79, 1, 0
  %v88 = vsel %vm80, 1, 0
  %v89 = vsel %vm81, 1, 0
  %v90 = vsel %vm82, 1, 0
  %v91 = vcvt.s32.f32 %v83
  %v92 = vcvt.s32.f32 %v84
  %v93 = vcvt.s32.f32 %v85
  %v94 = vcvt.s32.f32 %v86
  %v95 = vcvt.s32.f32 %v87
  %v96 = vcvt.s32.f32 %v88
  %v97 = vcvt.s32.f32 %v89
  %v98 = vcvt.s32.f32 %v90
  %vm99 = vcmp.ge.s32.totalorder %v33, 0
  %vm100 = vcmp.lt.s32.totalorder %v33, 32
  %vm101 = vmand %vm99, %vm100
  %v102 = vsel %vm101, 1, 0
  %v103 = vcvt.s32.f32 %v102
  %vm104 = vcmp.ge.s32.totalorder %v37, 0
  %vm105 = vcmp.ge.s32.totalorder %v38, 0
  %vm106 = vcmp.ge.s32.totalorder %v39, 0
  %vm107 = vcmp.ge.s32.totalorder %v40, 0
  %vm108 = vcmp.ge.s32.totalorder %v41, 0
  %vm109 = vcmp.ge.s32.totalorder %v42, 0
  %vm110 = vcmp.ge.s32.totalorder %v43, 0
  %vm111 = vcmp.ge.s32.totalorder %v44, 0
  %vm112 = vcmp.lt.s32.totalorder %v37, 1024
  %vm113 = vcmp.lt.s32.totalorder %v38, 1024
  %vm114 = vcmp.lt.s32.totalorder %v39, 1024
  %vm115 = vcmp.lt.s32.totalorder %v40, 1024
  %vm116 = vcmp.lt.s32.totalorder %v41, 1024
  %vm117 = vcmp.lt.s32.totalorder %v42, 1024
  %vm118 = vcmp.lt.s32.totalorder %v43, 1024
  %vm119 = vcmp.lt.s32.totalorder %v44, 1024
  %vm120 = vmand %vm104, %vm112
  %vm121 = vmand %vm105, %vm113
  %vm122 = vmand %vm106, %vm114
  %vm123 = vmand %vm107, %vm115
  %vm124 = vmand %vm108, %vm116
  %vm125 = vmand %vm109, %vm117
  %vm126 = vmand %vm110, %vm118
  %vm127 = vmand %vm111, %vm119
  %v128 = vsel %vm120, 1, 0
  %v129 = vsel %vm121, 1, 0
  %v130 = vsel %vm122, 1, 0
  %v131 = vsel %vm123, 1, 0
  %v132 = vsel %vm124, 1, 0
  %v133 = vsel %vm125, 1, 0
  %v134 = vsel %vm126, 1, 0
  %v135 = vsel %vm127, 1, 0
  %v136 = vcvt.s32.f32 %v128
  %v137 = vcvt.s32.f32 %v129
  %v138 = vcvt.s32.f32 %v130
  %v139 = vcvt.s32.f32 %v131
  %v140 = vcvt.s32.f32 %v132
  %v141 = vcvt.s32.f32 %v133
  %v142 = vcvt.s32.f32 %v134
  %v143 = vcvt.s32.f32 %v135
  %v144 = vadd.s32 %v33, 1
  %vm145 = vcmp.ge.s32.totalorder %v144, 0
  %vm146 = vcmp.lt.s32.totalorder %v144, 32
  %vm147 = vmand %vm145, %vm146
  %v148 = vsel %vm147, 1, 0
  %v149 = vcvt.s32.f32 %v148
  %v150 = vadd.s32 %v37, 32
  %v151 = vadd.s32 %v38, 32
  %v152 = vadd.s32 %v39, 32
  %v153 = vadd.s32 %v40, 32
  %v154 = vadd.s32 %v41, 32
  %v155 = vadd.s32 %v42, 32
  %v156 = vadd.s32 %v43, 32
  %v157 = vadd.s32 %v44, 32
  %vm158 = vcmp.ge.s32.totalorder %v150, 0
  %vm159 = vcmp.ge.s32.totalorder %v151, 0
  %vm160 = vcmp.ge.s32.totalorder %v152, 0
  %vm161 = vcmp.ge.s32.totalorder %v153, 0
  %vm162 = vcmp.ge.s32.totalorder %v154, 0
  %vm163 = vcmp.ge.s32.totalorder %v155, 0
  %vm164 = vcmp.ge.s32.totalorder %v156, 0
  %vm165 = vcmp.ge.s32.totalorder %v157, 0
  %vm166 = vcmp.lt.s32.totalorder %v150, 1024
  %vm167 = vcmp.lt.s32.totalorder %v151, 1024
  %vm168 = vcmp.lt.s32.totalorder %v152, 1024
  %vm169 = vcmp.lt.s32.totalorder %v153, 1024
  %vm170 = vcmp.lt.s32.totalorder %v154, 1024
  %vm171 = vcmp.lt.s32.totalorder %v155, 1024
  %vm172 = vcmp.lt.s32.totalorder %v156, 1024
  %vm173 = vcmp.lt.s32.totalorder %v157, 1024
  %vm174 = vmand %vm158, %vm166
  %vm175 = vmand %vm159, %vm167
  %vm176 = vmand %vm160, %vm168
  %vm177 = vmand %vm161, %vm169
  %vm178 = vmand %vm162, %vm170
  %vm179 = vmand %vm163, %vm171
  %vm180 = vmand %vm164, %vm172
  %vm181 = vmand %vm165, %vm173
  %v182 = vsel %vm174, 1, 0
  %v183 = vsel %vm175, 1, 0
  %v184 = vsel %vm176, 1, 0
  %v185 = vsel %vm177, 1, 0
  %v186 = vsel %vm178, 1, 0
  %v187 = vsel %vm179, 1, 0
  %v188 = vsel %vm180, 1, 0
  %v189 = vsel %vm181, 1, 0
  %v190 = vcvt.s32.f32 %v182
  %v191 = vcvt.s32.f32 %v183
  %v192 = vcvt.s32.f32 %v184
  %v193 = vcvt.s32.f32 %v185
  %v194 = vcvt.s32.f32 %v186
  %v195 = vcvt.s32.f32 %v187
  %v196 = vcvt.s32.f32 %v188
  %v197 = vcvt.s32.f32 %v189
  %198 = vrot.lane.b32.xlu0 %v25, 33
  %v199 = vpop.permute.xlu0 %198
  %200 = vrot.lane.b32.xlu0 %v26, 33
  %v201 = vpop.permute.xlu0 %200
  %202 = vrot.lane.b32.xlu0 %v27, 33
  %v203 = vpop.permute.xlu0 %202
  %204 = vrot.lane.b32.xlu0 %v28, 33
  %v205 = vpop.permute.xlu0 %204
  %206 = vrot.lane.b32.xlu0 %v29, 33
  %v207 = vpop.permute.xlu0 %206
  %208 = vrot.lane.b32.xlu0 %v30, 33
  %v209 = vpop.permute.xlu0 %208
  %210 = vrot.lane.b32.xlu0 %v31, 33
  %v211 = vpop.permute.xlu0 %210
  %212 = vrot.lane.b32.xlu0 %v32, 33
  %v213 = vpop.permute.xlu0 %212
  %vm214 = vcmp.lt.s32.totalorder %v37, 33
  %v215 = vsel %vm214, %v211, %v213
  %v216 = vsel %vm214, %v209, %v211
  %v217 = vsel %vm214, %v207, %v209
  %v218 = vsel %vm214, %v205, %v207
  %v219 = vsel %vm214, %v203, %v205
  %v220 = vsel %vm214, %v201, %v203
  %v221 = vsel %vm214, %v199, %v201
  %v222 = vsel %vm214, %v213, %v199
  %v231 = vcombine.low %v91, %v92
  %v232 = vcombine.low %v93, %v94
  %v233 = vcombine.low %v95, %v96
  %v234 = vcombine.low %v97, %v98
  %v236 = vunpack.c.l.s4 1966171168
  %v237 = vunpack.c.0.s8 %v236
  %v238 = vlaneseq
  %v239 = vshrl.u32 %v238, 7
  %v240 = vsub.s32 %v237, %v239
  %v241 = vrot.slane %v231, %v240
  %v243 = vunpack.c.l.s4 1966171168
  %v244 = vunpack.c.0.s8 %v243
  %v245 = vlaneseq
  %v246 = vshrl.u32 %v245, 7
  %v247 = vsub.s32 %v244, %v246
  %v248 = vrot.slane %v232, %v247
  %v250 = vunpack.c.l.s4 1966171168
  %v251 = vunpack.c.0.s8 %v250
  %v252 = vlaneseq
  %v253 = vshrl.u32 %v252, 7
  %v254 = vsub.s32 %v251, %v253
  %v255 = vrot.slane %v233, %v254
  %v257 = vunpack.c.l.s4 1966171168
  %v258 = vunpack.c.0.s8 %v257
  %v259 = vlaneseq
  %v260 = vshrl.u32 %v259, 7
  %v261 = vsub.s32 %v258, %v260
  %v262 = vrot.slane %v234, %v261
  %v263 = vcombine.low %v241, %v248
  %v264 = vcombine.low %v255, %v262
  %v266 = vunpack.c.l.s4 1966171168
  %v267 = vunpack.c.0.s8 %v266
  %v268 = vlaneseq
  %v269 = vshrl.u32 %v268, 7
  %v270 = vsub.s32 %v267, %v269
  %v271 = vrot.slane %v263, %v270
  %v273 = vunpack.c.l.s4 1966171168
  %v274 = vunpack.c.0.s8 %v273
  %v275 = vlaneseq
  %v276 = vshrl.u32 %v275, 7
  %v277 = vsub.s32 %v274, %v276
  %v278 = vrot.slane %v264, %v277
  %v279 = vcombine.low %v271, %v278
  %v281 = vmul.f32 %v50, %v279
  %v283 = vlaneseq
  %v284 = vshrl.u32 %v283, 7
  %v285 = vsub.s32 0, %v284
  %v286 = vrot.slane %v281, %v285
  %v287 = vlaneseq
  %v288 = vshrl.u32 %v287, 7
  %v289 = vsub.s32 1, %v288
  %v290 = vrot.slane %v281, %v289
  %v291 = vlaneseq
  %v292 = vshrl.u32 %v291, 7
  %v293 = vsub.s32 2, %v292
  %v294 = vrot.slane %v281, %v293
  %v295 = vlaneseq
  %v296 = vshrl.u32 %v295, 7
  %v297 = vsub.s32 3, %v296
  %v298 = vrot.slane %v281, %v297
  %v299 = vlaneseq
  %v300 = vshrl.u32 %v299, 7
  %v301 = vsub.s32 4, %v300
  %v302 = vrot.slane %v281, %v301
  %v303 = vlaneseq
  %v304 = vshrl.u32 %v303, 7
  %v305 = vsub.s32 5, %v304
  %v306 = vrot.slane %v281, %v305
  %v307 = vlaneseq
  %v308 = vshrl.u32 %v307, 7
  %v309 = vsub.s32 6, %v308
  %v310 = vrot.slane %v281, %v309
  %v311 = vlaneseq
  %v312 = vshrl.u32 %v311, 7
  %v313 = vsub.s32 7, %v312
  %v314 = vrot.slane %v281, %v313
  %v323 = vmul.f32 %v222, %v286
  %v324 = vmul.f32 %v221, %v290
  %v325 = vmul.f32 %v220, %v294
  %v326 = vmul.f32 %v219, %v298
  %v327 = vmul.f32 %v218, %v302
  %v328 = vmul.f32 %v217, %v306
  %v329 = vmul.f32 %v216, %v310
  %v330 = vmul.f32 %v215, %v314
  %332 = vset.pattern.permute.xlu0 0
  %333 = vperm.xlu0 %332, %v34
  %v334 = vpop.permute.xlu0 %333
  %v336 = vmul.f32 %v323, %v334
  %v337 = vmul.f32 %v324, %v334
  %v338 = vmul.f32 %v325, %v334
  %v339 = vmul.f32 %v326, %v334
  %v340 = vmul.f32 %v327, %v334
  %v341 = vmul.f32 %v328, %v334
  %v342 = vmul.f32 %v329, %v334
  %v343 = vmul.f32 %v330, %v334
  %v344 = vadd.f32 %v336, 0.0
  %v345 = vadd.f32 %v337, 0.0
  %v346 = vadd.f32 %v338, 0.0
  %v347 = vadd.f32 %v339, 0.0
  %v348 = vadd.f32 %v340, 0.0
  %v349 = vadd.f32 %v341, 0.0
  %v350 = vadd.f32 %v342, 0.0
  %v351 = vadd.f32 %v343, 0.0
  %353 = vset.pattern.permute.xlu0 0
  %354 = vperm.xlu0 %353, %v35
  %v355 = vpop.permute.xlu0 %354
  %v357 = vmul.f32 %v323, %v355
  %v358 = vmul.f32 %v324, %v355
  %v359 = vmul.f32 %v325, %v355
  %v360 = vmul.f32 %v326, %v355
  %v361 = vmul.f32 %v327, %v355
  %v362 = vmul.f32 %v328, %v355
  %v363 = vmul.f32 %v329, %v355
  %v364 = vmul.f32 %v330, %v355
  %v365 = vadd.f32 %v357, 0.0
  %v366 = vadd.f32 %v358, 0.0
  %v367 = vadd.f32 %v359, 0.0
  %v368 = vadd.f32 %v360, 0.0
  %v369 = vadd.f32 %v361, 0.0
  %v370 = vadd.f32 %v362, 0.0
  %v371 = vadd.f32 %v363, 0.0
  %v372 = vadd.f32 %v364, 0.0
  %373 = vrot.lane.b32.xlu0 %v25, 32
  %v374 = vpop.permute.xlu0 %373
  %375 = vrot.lane.b32.xlu0 %v26, 32
  %v376 = vpop.permute.xlu0 %375
  %377 = vrot.lane.b32.xlu0 %v27, 32
  %v378 = vpop.permute.xlu0 %377
  %379 = vrot.lane.b32.xlu0 %v28, 32
  %v380 = vpop.permute.xlu0 %379
  %381 = vrot.lane.b32.xlu0 %v29, 32
  %v382 = vpop.permute.xlu0 %381
  %383 = vrot.lane.b32.xlu0 %v30, 32
  %v384 = vpop.permute.xlu0 %383
  %385 = vrot.lane.b32.xlu0 %v31, 32
  %v386 = vpop.permute.xlu0 %385
  %387 = vrot.lane.b32.xlu0 %v32, 32
  %v388 = vpop.permute.xlu0 %387
  %vm389 = vcmp.lt.s32.totalorder %v37, 32
  %v390 = vsel %vm389, %v386, %v388
  %v391 = vsel %vm389, %v384, %v386
  %v392 = vsel %vm389, %v382, %v384
  %v393 = vsel %vm389, %v380, %v382
  %v394 = vsel %vm389, %v378, %v380
  %v395 = vsel %vm389, %v376, %v378
  %v396 = vsel %vm389, %v374, %v376
  %v397 = vsel %vm389, %v388, %v374
  %v398 = vmul.f32 %v103, %v279
  %v400 = vlaneseq
  %v401 = vshrl.u32 %v400, 7
  %v402 = vsub.s32 0, %v401
  %v403 = vrot.slane %v398, %v402
  %v404 = vlaneseq
  %v405 = vshrl.u32 %v404, 7
  %v406 = vsub.s32 1, %v405
  %v407 = vrot.slane %v398, %v406
  %v408 = vlaneseq
  %v409 = vshrl.u32 %v408, 7
  %v410 = vsub.s32 2, %v409
  %v411 = vrot.slane %v398, %v410
  %v412 = vlaneseq
  %v413 = vshrl.u32 %v412, 7
  %v414 = vsub.s32 3, %v413
  %v415 = vrot.slane %v398, %v414
  %v416 = vlaneseq
  %v417 = vshrl.u32 %v416, 7
  %v418 = vsub.s32 4, %v417
  %v419 = vrot.slane %v398, %v418
  %v420 = vlaneseq
  %v421 = vshrl.u32 %v420, 7
  %v422 = vsub.s32 5, %v421
  %v423 = vrot.slane %v398, %v422
  %v424 = vlaneseq
  %v425 = vshrl.u32 %v424, 7
  %v426 = vsub.s32 6, %v425
  %v427 = vrot.slane %v398, %v426
  %v428 = vlaneseq
  %v429 = vshrl.u32 %v428, 7
  %v430 = vsub.s32 7, %v429
  %v431 = vrot.slane %v398, %v430
  %v440 = vmul.f32 %v397, %v403
  %v441 = vmul.f32 %v396, %v407
  %v442 = vmul.f32 %v395, %v411
  %v443 = vmul.f32 %v394, %v415
  %v444 = vmul.f32 %v393, %v419
  %v445 = vmul.f32 %v392, %v423
  %v446 = vmul.f32 %v391, %v427
  %v447 = vmul.f32 %v390, %v431
  %448 = vset.pattern.permute.xlu0 1
  %449 = vperm.xlu0 %448, %v34
  %v450 = vpop.permute.xlu0 %449
  %v452 = vmul.f32 %v440, %v450
  %v453 = vmul.f32 %v441, %v450
  %v454 = vmul.f32 %v442, %v450
  %v455 = vmul.f32 %v443, %v450
  %v456 = vmul.f32 %v444, %v450
  %v457 = vmul.f32 %v445, %v450
  %v458 = vmul.f32 %v446, %v450
  %v459 = vmul.f32 %v447, %v450
  %v460 = vadd.f32 %v344, %v452
  %v461 = vadd.f32 %v345, %v453
  %v462 = vadd.f32 %v346, %v454
  %v463 = vadd.f32 %v347, %v455
  %v464 = vadd.f32 %v348, %v456
  %v465 = vadd.f32 %v349, %v457
  %v466 = vadd.f32 %v350, %v458
  %v467 = vadd.f32 %v351, %v459
  %468 = vset.pattern.permute.xlu0 1
  %469 = vperm.xlu0 %468, %v35
  %v470 = vpop.permute.xlu0 %469
  %v472 = vmul.f32 %v440, %v470
  %v473 = vmul.f32 %v441, %v470
  %v474 = vmul.f32 %v442, %v470
  %v475 = vmul.f32 %v443, %v470
  %v476 = vmul.f32 %v444, %v470
  %v477 = vmul.f32 %v445, %v470
  %v478 = vmul.f32 %v446, %v470
  %v479 = vmul.f32 %v447, %v470
  %v480 = vadd.f32 %v365, %v472
  %v481 = vadd.f32 %v366, %v473
  %v482 = vadd.f32 %v367, %v474
  %v483 = vadd.f32 %v368, %v475
  %v484 = vadd.f32 %v369, %v476
  %v485 = vadd.f32 %v370, %v477
  %v486 = vadd.f32 %v371, %v478
  %v487 = vadd.f32 %v372, %v479
  %488 = vrot.lane.b32.xlu0 %v25, 31
  %v489 = vpop.permute.xlu0 %488
  %490 = vrot.lane.b32.xlu0 %v26, 31
  %v491 = vpop.permute.xlu0 %490
  %492 = vrot.lane.b32.xlu0 %v27, 31
  %v493 = vpop.permute.xlu0 %492
  %494 = vrot.lane.b32.xlu0 %v28, 31
  %v495 = vpop.permute.xlu0 %494
  %496 = vrot.lane.b32.xlu0 %v29, 31
  %v497 = vpop.permute.xlu0 %496
  %498 = vrot.lane.b32.xlu0 %v30, 31
  %v499 = vpop.permute.xlu0 %498
  %500 = vrot.lane.b32.xlu0 %v31, 31
  %v501 = vpop.permute.xlu0 %500
  %502 = vrot.lane.b32.xlu0 %v32, 31
  %v503 = vpop.permute.xlu0 %502
  %vm504 = vcmp.lt.s32.totalorder %v37, 31
  %v505 = vsel %vm504, %v501, %v503
  %v506 = vsel %vm504, %v499, %v501
  %v507 = vsel %vm504, %v497, %v499
  %v508 = vsel %vm504, %v495, %v497
  %v509 = vsel %vm504, %v493, %v495
  %v510 = vsel %vm504, %v491, %v493
  %v511 = vsel %vm504, %v489, %v491
  %v512 = vsel %vm504, %v503, %v489
  %v513 = vmul.f32 %v149, %v279
  %v515 = vlaneseq
  %v516 = vshrl.u32 %v515, 7
  %v517 = vsub.s32 0, %v516
  %v518 = vrot.slane %v513, %v517
  %v519 = vlaneseq
  %v520 = vshrl.u32 %v519, 7
  %v521 = vsub.s32 1, %v520
  %v522 = vrot.slane %v513, %v521
  %v523 = vlaneseq
  %v524 = vshrl.u32 %v523, 7
  %v525 = vsub.s32 2, %v524
  %v526 = vrot.slane %v513, %v525
  %v527 = vlaneseq
  %v528 = vshrl.u32 %v527, 7
  %v529 = vsub.s32 3, %v528
  %v530 = vrot.slane %v513, %v529
  %v531 = vlaneseq
  %v532 = vshrl.u32 %v531, 7
  %v533 = vsub.s32 4, %v532
  %v534 = vrot.slane %v513, %v533
  %v535 = vlaneseq
  %v536 = vshrl.u32 %v535, 7
  %v537 = vsub.s32 5, %v536
  %v538 = vrot.slane %v513, %v537
  %v539 = vlaneseq
  %v540 = vshrl.u32 %v539, 7
  %v541 = vsub.s32 6, %v540
  %v542 = vrot.slane %v513, %v541
  %v543 = vlaneseq
  %v544 = vshrl.u32 %v543, 7
  %v545 = vsub.s32 7, %v544
  %v546 = vrot.slane %v513, %v545
  %v555 = vmul.f32 %v512, %v518
  %v556 = vmul.f32 %v511, %v522
  %v557 = vmul.f32 %v510, %v526
  %v558 = vmul.f32 %v509, %v530
  %v559 = vmul.f32 %v508, %v534
  %v560 = vmul.f32 %v507, %v538
  %v561 = vmul.f32 %v506, %v542
  %v562 = vmul.f32 %v505, %v546
  %563 = vset.pattern.permute.xlu0 2
  %564 = vperm.xlu0 %563, %v34
  %v565 = vpop.permute.xlu0 %564
  %v567 = vmul.f32 %v555, %v565
  %v568 = vmul.f32 %v556, %v565
  %v569 = vmul.f32 %v557, %v565
  %v570 = vmul.f32 %v558, %v565
  %v571 = vmul.f32 %v559, %v565
  %v572 = vmul.f32 %v560, %v565
  %v573 = vmul.f32 %v561, %v565
  %v574 = vmul.f32 %v562, %v565
  %v575 = vadd.f32 %v460, %v567
  %v576 = vadd.f32 %v461, %v568
  %v577 = vadd.f32 %v462, %v569
  %v578 = vadd.f32 %v463, %v570
  %v579 = vadd.f32 %v464, %v571
  %v580 = vadd.f32 %v465, %v572
  %v581 = vadd.f32 %v466, %v573
  %v582 = vadd.f32 %v467, %v574
  %583 = vset.pattern.permute.xlu0 2
  %584 = vperm.xlu0 %583, %v35
  %v585 = vpop.permute.xlu0 %584
  %v587 = vmul.f32 %v555, %v585
  %v588 = vmul.f32 %v556, %v585
  %v589 = vmul.f32 %v557, %v585
  %v590 = vmul.f32 %v558, %v585
  %v591 = vmul.f32 %v559, %v585
  %v592 = vmul.f32 %v560, %v585
  %v593 = vmul.f32 %v561, %v585
  %v594 = vmul.f32 %v562, %v585
  %v595 = vadd.f32 %v480, %v587
  %v596 = vadd.f32 %v481, %v588
  %v597 = vadd.f32 %v482, %v589
  %v598 = vadd.f32 %v483, %v590
  %v599 = vadd.f32 %v484, %v591
  %v600 = vadd.f32 %v485, %v592
  %v601 = vadd.f32 %v486, %v593
  %v602 = vadd.f32 %v487, %v594
  %603 = vrot.lane.b32.xlu0 %v25, 1
  %v604 = vpop.permute.xlu0 %603
  %605 = vrot.lane.b32.xlu0 %v26, 1
  %v606 = vpop.permute.xlu0 %605
  %607 = vrot.lane.b32.xlu0 %v27, 1
  %v608 = vpop.permute.xlu0 %607
  %609 = vrot.lane.b32.xlu0 %v28, 1
  %v610 = vpop.permute.xlu0 %609
  %611 = vrot.lane.b32.xlu0 %v29, 1
  %v612 = vpop.permute.xlu0 %611
  %613 = vrot.lane.b32.xlu0 %v30, 1
  %v614 = vpop.permute.xlu0 %613
  %615 = vrot.lane.b32.xlu0 %v31, 1
  %v616 = vpop.permute.xlu0 %615
  %617 = vrot.lane.b32.xlu0 %v32, 1
  %v618 = vpop.permute.xlu0 %617
  %vm619 = vcmp.lt.s32.totalorder %v37, 1
  %v620 = vsel %vm619, %v616, %v618
  %v621 = vsel %vm619, %v614, %v616
  %v622 = vsel %vm619, %v612, %v614
  %v623 = vsel %vm619, %v610, %v612
  %v624 = vsel %vm619, %v608, %v610
  %v625 = vsel %vm619, %v606, %v608
  %v626 = vsel %vm619, %v604, %v606
  %v627 = vsel %vm619, %v618, %v604
  %v636 = vcombine.low %v136, %v137
  %v637 = vcombine.low %v138, %v139
  %v638 = vcombine.low %v140, %v141
  %v639 = vcombine.low %v142, %v143
  %v641 = vunpack.c.l.s4 1966171168
  %v642 = vunpack.c.0.s8 %v641
  %v643 = vlaneseq
  %v644 = vshrl.u32 %v643, 7
  %v645 = vsub.s32 %v642, %v644
  %v646 = vrot.slane %v636, %v645
  %v648 = vunpack.c.l.s4 1966171168
  %v649 = vunpack.c.0.s8 %v648
  %v650 = vlaneseq
  %v651 = vshrl.u32 %v650, 7
  %v652 = vsub.s32 %v649, %v651
  %v653 = vrot.slane %v637, %v652
  %v655 = vunpack.c.l.s4 1966171168
  %v656 = vunpack.c.0.s8 %v655
  %v657 = vlaneseq
  %v658 = vshrl.u32 %v657, 7
  %v659 = vsub.s32 %v656, %v658
  %v660 = vrot.slane %v638, %v659
  %v662 = vunpack.c.l.s4 1966171168
  %v663 = vunpack.c.0.s8 %v662
  %v664 = vlaneseq
  %v665 = vshrl.u32 %v664, 7
  %v666 = vsub.s32 %v663, %v665
  %v667 = vrot.slane %v639, %v666
  %v668 = vcombine.low %v646, %v653
  %v669 = vcombine.low %v660, %v667
  %v671 = vunpack.c.l.s4 1966171168
  %v672 = vunpack.c.0.s8 %v671
  %v673 = vlaneseq
  %v674 = vshrl.u32 %v673, 7
  %v675 = vsub.s32 %v672, %v674
  %v676 = vrot.slane %v668, %v675
  %v678 = vunpack.c.l.s4 1966171168
  %v679 = vunpack.c.0.s8 %v678
  %v680 = vlaneseq
  %v681 = vshrl.u32 %v680, 7
  %v682 = vsub.s32 %v679, %v681
  %v683 = vrot.slane %v669, %v682
  %v684 = vcombine.low %v676, %v683
  %v686 = vmul.f32 %v50, %v684
  %v688 = vlaneseq
  %v689 = vshrl.u32 %v688, 7
  %v690 = vsub.s32 0, %v689
  %v691 = vrot.slane %v686, %v690
  %v692 = vlaneseq
  %v693 = vshrl.u32 %v692, 7
  %v694 = vsub.s32 1, %v693
  %v695 = vrot.slane %v686, %v694
  %v696 = vlaneseq
  %v697 = vshrl.u32 %v696, 7
  %v698 = vsub.s32 2, %v697
  %v699 = vrot.slane %v686, %v698
  %v700 = vlaneseq
  %v701 = vshrl.u32 %v700, 7
  %v702 = vsub.s32 3, %v701
  %v703 = vrot.slane %v686, %v702
  %v704 = vlaneseq
  %v705 = vshrl.u32 %v704, 7
  %v706 = vsub.s32 4, %v705
  %v707 = vrot.slane %v686, %v706
  %v708 = vlaneseq
  %v709 = vshrl.u32 %v708, 7
  %v710 = vsub.s32 5, %v709
  %v711 = vrot.slane %v686, %v710
  %v712 = vlaneseq
  %v713 = vshrl.u32 %v712, 7
  %v714 = vsub.s32 6, %v713
  %v715 = vrot.slane %v686, %v714
  %v716 = vlaneseq
  %v717 = vshrl.u32 %v716, 7
  %v718 = vsub.s32 7, %v717
  %v719 = vrot.slane %v686, %v718
  %v728 = vmul.f32 %v627, %v691
  %v729 = vmul.f32 %v626, %v695
  %v730 = vmul.f32 %v625, %v699
  %v731 = vmul.f32 %v624, %v703
  %v732 = vmul.f32 %v623, %v707
  %v733 = vmul.f32 %v622, %v711
  %v734 = vmul.f32 %v621, %v715
  %v735 = vmul.f32 %v620, %v719
  %736 = vset.pattern.permute.xlu0 3
  %737 = vperm.xlu0 %736, %v34
  %v738 = vpop.permute.xlu0 %737
  %v740 = vmul.f32 %v728, %v738
  %v741 = vmul.f32 %v729, %v738
  %v742 = vmul.f32 %v730, %v738
  %v743 = vmul.f32 %v731, %v738
  %v744 = vmul.f32 %v732, %v738
  %v745 = vmul.f32 %v733, %v738
  %v746 = vmul.f32 %v734, %v738
  %v747 = vmul.f32 %v735, %v738
  %v748 = vadd.f32 %v575, %v740
  %v749 = vadd.f32 %v576, %v741
  %v750 = vadd.f32 %v577, %v742
  %v751 = vadd.f32 %v578, %v743
  %v752 = vadd.f32 %v579, %v744
  %v753 = vadd.f32 %v580, %v745
  %v754 = vadd.f32 %v581, %v746
  %v755 = vadd.f32 %v582, %v747
  %756 = vset.pattern.permute.xlu0 3
  %757 = vperm.xlu0 %756, %v35
  %v758 = vpop.permute.xlu0 %757
  %v760 = vmul.f32 %v728, %v758
  %v761 = vmul.f32 %v729, %v758
  %v762 = vmul.f32 %v730, %v758
  %v763 = vmul.f32 %v731, %v758
  %v764 = vmul.f32 %v732, %v758
  %v765 = vmul.f32 %v733, %v758
  %v766 = vmul.f32 %v734, %v758
  %v767 = vmul.f32 %v735, %v758
  %v768 = vadd.f32 %v595, %v760
  %v769 = vadd.f32 %v596, %v761
  %v770 = vadd.f32 %v597, %v762
  %v771 = vadd.f32 %v598, %v763
  %v772 = vadd.f32 %v599, %v764
  %v773 = vadd.f32 %v600, %v765
  %v774 = vadd.f32 %v601, %v766
  %v775 = vadd.f32 %v602, %v767
  %776 = vset.pattern.permute.xlu0 4
  %777 = vperm.xlu0 %776, %v34
  %v778 = vpop.permute.xlu0 %777
  %v780 = vmul.f32 %v25, %v778
  %v781 = vmul.f32 %v26, %v778
  %v782 = vmul.f32 %v27, %v778
  %v783 = vmul.f32 %v28, %v778
  %v784 = vmul.f32 %v29, %v778
  %v785 = vmul.f32 %v30, %v778
  %v786 = vmul.f32 %v31, %v778
  %v787 = vmul.f32 %v32, %v778
  %v788 = vadd.f32 %v748, %v780
  %v789 = vadd.f32 %v749, %v781
  %v790 = vadd.f32 %v750, %v782
  %v791 = vadd.f32 %v751, %v783
  %v792 = vadd.f32 %v752, %v784
  %v793 = vadd.f32 %v753, %v785
  %v794 = vadd.f32 %v754, %v786
  %v795 = vadd.f32 %v755, %v787
  %796 = vset.pattern.permute.xlu0 4
  %797 = vperm.xlu0 %796, %v35
  %v798 = vpop.permute.xlu0 %797
  %v800 = vmul.f32 %v25, %v798
  %v801 = vmul.f32 %v26, %v798
  %v802 = vmul.f32 %v27, %v798
  %v803 = vmul.f32 %v28, %v798
  %v804 = vmul.f32 %v29, %v798
  %v805 = vmul.f32 %v30, %v798
  %v806 = vmul.f32 %v31, %v798
  %v807 = vmul.f32 %v32, %v798
  %v808 = vadd.f32 %v768, %v800
  %v809 = vadd.f32 %v769, %v801
  %v810 = vadd.f32 %v770, %v802
  %v811 = vadd.f32 %v771, %v803
  %v812 = vadd.f32 %v772, %v804
  %v813 = vadd.f32 %v773, %v805
  %v814 = vadd.f32 %v774, %v806
  %v815 = vadd.f32 %v775, %v807
  %816 = vrot.lane.b32.xlu0 %v25, 127
  %v817 = vpop.permute.xlu0 %816
  %818 = vrot.lane.b32.xlu0 %v26, 127
  %v819 = vpop.permute.xlu0 %818
  %820 = vrot.lane.b32.xlu0 %v27, 127
  %v821 = vpop.permute.xlu0 %820
  %822 = vrot.lane.b32.xlu0 %v28, 127
  %v823 = vpop.permute.xlu0 %822
  %824 = vrot.lane.b32.xlu0 %v29, 127
  %v825 = vpop.permute.xlu0 %824
  %826 = vrot.lane.b32.xlu0 %v30, 127
  %v827 = vpop.permute.xlu0 %826
  %828 = vrot.lane.b32.xlu0 %v31, 127
  %v829 = vpop.permute.xlu0 %828
  %830 = vrot.lane.b32.xlu0 %v32, 127
  %v831 = vpop.permute.xlu0 %830
  %vm832 = vcmp.lt.s32.totalorder %v37, 127
  %v833 = vsel %vm832, %v829, %v831
  %v834 = vsel %vm832, %v827, %v829
  %v835 = vsel %vm832, %v825, %v827
  %v836 = vsel %vm832, %v823, %v825
  %v837 = vsel %vm832, %v821, %v823
  %v838 = vsel %vm832, %v819, %v821
  %v839 = vsel %vm832, %v817, %v819
  %v840 = vsel %vm832, %v831, %v817
  %v841 = vmul.f32 %v149, %v684
  %v843 = vlaneseq
  %v844 = vshrl.u32 %v843, 7
  %v845 = vsub.s32 0, %v844
  %v846 = vrot.slane %v841, %v845
  %v847 = vlaneseq
  %v848 = vshrl.u32 %v847, 7
  %v849 = vsub.s32 1, %v848
  %v850 = vrot.slane %v841, %v849
  %v851 = vlaneseq
  %v852 = vshrl.u32 %v851, 7
  %v853 = vsub.s32 2, %v852
  %v854 = vrot.slane %v841, %v853
  %v855 = vlaneseq
  %v856 = vshrl.u32 %v855, 7
  %v857 = vsub.s32 3, %v856
  %v858 = vrot.slane %v841, %v857
  %v859 = vlaneseq
  %v860 = vshrl.u32 %v859, 7
  %v861 = vsub.s32 4, %v860
  %v862 = vrot.slane %v841, %v861
  %v863 = vlaneseq
  %v864 = vshrl.u32 %v863, 7
  %v865 = vsub.s32 5, %v864
  %v866 = vrot.slane %v841, %v865
  %v867 = vlaneseq
  %v868 = vshrl.u32 %v867, 7
  %v869 = vsub.s32 6, %v868
  %v870 = vrot.slane %v841, %v869
  %v871 = vlaneseq
  %v872 = vshrl.u32 %v871, 7
  %v873 = vsub.s32 7, %v872
  %v874 = vrot.slane %v841, %v873
  %v883 = vmul.f32 %v839, %v846
  %v884 = vmul.f32 %v838, %v850
  %v885 = vmul.f32 %v837, %v854
  %v886 = vmul.f32 %v836, %v858
  %v887 = vmul.f32 %v835, %v862
  %v888 = vmul.f32 %v834, %v866
  %v889 = vmul.f32 %v833, %v870
  %v890 = vmul.f32 %v840, %v874
  %891 = vset.pattern.permute.xlu0 5
  %892 = vperm.xlu0 %891, %v34
  %v893 = vpop.permute.xlu0 %892
  %v895 = vmul.f32 %v883, %v893
  %v896 = vmul.f32 %v884, %v893
  %v897 = vmul.f32 %v885, %v893
  %v898 = vmul.f32 %v886, %v893
  %v899 = vmul.f32 %v887, %v893
  %v900 = vmul.f32 %v888, %v893
  %v901 = vmul.f32 %v889, %v893
  %v902 = vmul.f32 %v890, %v893
  %v903 = vadd.f32 %v788, %v895
  %v904 = vadd.f32 %v789, %v896
  %v905 = vadd.f32 %v790, %v897
  %v906 = vadd.f32 %v791, %v898
  %v907 = vadd.f32 %v792, %v899
  %v908 = vadd.f32 %v793, %v900
  %v909 = vadd.f32 %v794, %v901
  %v910 = vadd.f32 %v795, %v902
  %911 = vset.pattern.permute.xlu0 5
  %912 = vperm.xlu0 %911, %v35
  %v913 = vpop.permute.xlu0 %912
  %v915 = vmul.f32 %v883, %v913
  %v916 = vmul.f32 %v884, %v913
  %v917 = vmul.f32 %v885, %v913
  %v918 = vmul.f32 %v886, %v913
  %v919 = vmul.f32 %v887, %v913
  %v920 = vmul.f32 %v888, %v913
  %v921 = vmul.f32 %v889, %v913
  %v922 = vmul.f32 %v890, %v913
  %v923 = vadd.f32 %v808, %v915
  %v924 = vadd.f32 %v809, %v916
  %v925 = vadd.f32 %v810, %v917
  %v926 = vadd.f32 %v811, %v918
  %v927 = vadd.f32 %v812, %v919
  %v928 = vadd.f32 %v813, %v920
  %v929 = vadd.f32 %v814, %v921
  %v930 = vadd.f32 %v815, %v922
  %931 = vrot.lane.b32.xlu0 %v25, 97
  %v932 = vpop.permute.xlu0 %931
  %933 = vrot.lane.b32.xlu0 %v26, 97
  %v934 = vpop.permute.xlu0 %933
  %935 = vrot.lane.b32.xlu0 %v27, 97
  %v936 = vpop.permute.xlu0 %935
  %937 = vrot.lane.b32.xlu0 %v28, 97
  %v938 = vpop.permute.xlu0 %937
  %939 = vrot.lane.b32.xlu0 %v29, 97
  %v940 = vpop.permute.xlu0 %939
  %941 = vrot.lane.b32.xlu0 %v30, 97
  %v942 = vpop.permute.xlu0 %941
  %943 = vrot.lane.b32.xlu0 %v31, 97
  %v944 = vpop.permute.xlu0 %943
  %945 = vrot.lane.b32.xlu0 %v32, 97
  %v946 = vpop.permute.xlu0 %945
  %vm947 = vcmp.lt.s32.totalorder %v37, 97
  %v948 = vsel %vm947, %v944, %v946
  %v949 = vsel %vm947, %v942, %v944
  %v950 = vsel %vm947, %v940, %v942
  %v951 = vsel %vm947, %v938, %v940
  %v952 = vsel %vm947, %v936, %v938
  %v953 = vsel %vm947, %v934, %v936
  %v954 = vsel %vm947, %v932, %v934
  %v955 = vsel %vm947, %v946, %v932
  %v964 = vcombine.low %v190, %v191
  %v965 = vcombine.low %v192, %v193
  %v966 = vcombine.low %v194, %v195
  %v967 = vcombine.low %v196, %v197
  %v969 = vunpack.c.l.s4 1966171168
  %v970 = vunpack.c.0.s8 %v969
  %v971 = vlaneseq
  %v972 = vshrl.u32 %v971, 7
  %v973 = vsub.s32 %v970, %v972
  %v974 = vrot.slane %v964, %v973
  %v976 = vunpack.c.l.s4 1966171168
  %v977 = vunpack.c.0.s8 %v976
  %v978 = vlaneseq
  %v979 = vshrl.u32 %v978, 7
  %v980 = vsub.s32 %v977, %v979
  %v981 = vrot.slane %v965, %v980
  %v983 = vunpack.c.l.s4 1966171168
  %v984 = vunpack.c.0.s8 %v983
  %v985 = vlaneseq
  %v986 = vshrl.u32 %v985, 7
  %v987 = vsub.s32 %v984, %v986
  %v988 = vrot.slane %v966, %v987
  %v990 = vunpack.c.l.s4 1966171168
  %v991 = vunpack.c.0.s8 %v990
  %v992 = vlaneseq
  %v993 = vshrl.u32 %v992, 7
  %v994 = vsub.s32 %v991, %v993
  %v995 = vrot.slane %v967, %v994
  %v996 = vcombine.low %v974, %v981
  %v997 = vcombine.low %v988, %v995
  %v999 = vunpack.c.l.s4 1966171168
  %v1000 = vunpack.c.0.s8 %v999
  %v1001 = vlaneseq
  %v1002 = vshrl.u32 %v1001, 7
  %v1003 = vsub.s32 %v1000, %v1002
  %v1004 = vrot.slane %v996, %v1003
  %v1006 = vunpack.c.l.s4 1966171168
  %v1007 = vunpack.c.0.s8 %v1006
  %v1008 = vlaneseq
  %v1009 = vshrl.u32 %v1008, 7
  %v1010 = vsub.s32 %v1007, %v1009
  %v1011 = vrot.slane %v997, %v1010
  %v1012 = vcombine.low %v1004, %v1011
  %v1014 = vmul.f32 %v50, %v1012
  %v1016 = vlaneseq
  %v1017 = vshrl.u32 %v1016, 7
  %v1018 = vsub.s32 0, %v1017
  %v1019 = vrot.slane %v1014, %v1018
  %v1020 = vlaneseq
  %v1021 = vshrl.u32 %v1020, 7
  %v1022 = vsub.s32 1, %v1021
  %v1023 = vrot.slane %v1014, %v1022
  %v1024 = vlaneseq
  %v1025 = vshrl.u32 %v1024, 7
  %v1026 = vsub.s32 2, %v1025
  %v1027 = vrot.slane %v1014, %v1026
  %v1028 = vlaneseq
  %v1029 = vshrl.u32 %v1028, 7
  %v1030 = vsub.s32 3, %v1029
  %v1031 = vrot.slane %v1014, %v1030
  %v1032 = vlaneseq
  %v1033 = vshrl.u32 %v1032, 7
  %v1034 = vsub.s32 4, %v1033
  %v1035 = vrot.slane %v1014, %v1034
  %v1036 = vlaneseq
  %v1037 = vshrl.u32 %v1036, 7
  %v1038 = vsub.s32 5, %v1037
  %v1039 = vrot.slane %v1014, %v1038
  %v1040 = vlaneseq
  %v1041 = vshrl.u32 %v1040, 7
  %v1042 = vsub.s32 6, %v1041
  %v1043 = vrot.slane %v1014, %v1042
  %v1044 = vlaneseq
  %v1045 = vshrl.u32 %v1044, 7
  %v1046 = vsub.s32 7, %v1045
  %v1047 = vrot.slane %v1014, %v1046
  %v1056 = vmul.f32 %v954, %v1019
  %v1057 = vmul.f32 %v953, %v1023
  %v1058 = vmul.f32 %v952, %v1027
  %v1059 = vmul.f32 %v951, %v1031
  %v1060 = vmul.f32 %v950, %v1035
  %v1061 = vmul.f32 %v949, %v1039
  %v1062 = vmul.f32 %v948, %v1043
  %v1063 = vmul.f32 %v955, %v1047
  %1064 = vset.pattern.permute.xlu0 6
  %1065 = vperm.xlu0 %1064, %v34
  %v1066 = vpop.permute.xlu0 %1065
  %v1068 = vmul.f32 %v1056, %v1066
  %v1069 = vmul.f32 %v1057, %v1066
  %v1070 = vmul.f32 %v1058, %v1066
  %v1071 = vmul.f32 %v1059, %v1066
  %v1072 = vmul.f32 %v1060, %v1066
  %v1073 = vmul.f32 %v1061, %v1066
  %v1074 = vmul.f32 %v1062, %v1066
  %v1075 = vmul.f32 %v1063, %v1066
  %v1076 = vadd.f32 %v903, %v1068
  %v1077 = vadd.f32 %v904, %v1069
  %v1078 = vadd.f32 %v905, %v1070
  %v1079 = vadd.f32 %v906, %v1071
  %v1080 = vadd.f32 %v907, %v1072
  %v1081 = vadd.f32 %v908, %v1073
  %v1082 = vadd.f32 %v909, %v1074
  %v1083 = vadd.f32 %v910, %v1075
  %1084 = vset.pattern.permute.xlu0 6
  %1085 = vperm.xlu0 %1084, %v35
  %v1086 = vpop.permute.xlu0 %1085
  %v1088 = vmul.f32 %v1056, %v1086
  %v1089 = vmul.f32 %v1057, %v1086
  %v1090 = vmul.f32 %v1058, %v1086
  %v1091 = vmul.f32 %v1059, %v1086
  %v1092 = vmul.f32 %v1060, %v1086
  %v1093 = vmul.f32 %v1061, %v1086
  %v1094 = vmul.f32 %v1062, %v1086
  %v1095 = vmul.f32 %v1063, %v1086
  %v1096 = vadd.f32 %v923, %v1088
  %v1097 = vadd.f32 %v924, %v1089
  %v1098 = vadd.f32 %v925, %v1090
  %v1099 = vadd.f32 %v926, %v1091
  %v1100 = vadd.f32 %v927, %v1092
  %v1101 = vadd.f32 %v928, %v1093
  %v1102 = vadd.f32 %v929, %v1094
  %v1103 = vadd.f32 %v930, %v1095
  %1104 = vrot.lane.b32.xlu0 %v25, 96
  %v1105 = vpop.permute.xlu0 %1104
  %1106 = vrot.lane.b32.xlu0 %v26, 96
  %v1107 = vpop.permute.xlu0 %1106
  %1108 = vrot.lane.b32.xlu0 %v27, 96
  %v1109 = vpop.permute.xlu0 %1108
  %1110 = vrot.lane.b32.xlu0 %v28, 96
  %v1111 = vpop.permute.xlu0 %1110
  %1112 = vrot.lane.b32.xlu0 %v29, 96
  %v1113 = vpop.permute.xlu0 %1112
  %1114 = vrot.lane.b32.xlu0 %v30, 96
  %v1115 = vpop.permute.xlu0 %1114
  %1116 = vrot.lane.b32.xlu0 %v31, 96
  %v1117 = vpop.permute.xlu0 %1116
  %1118 = vrot.lane.b32.xlu0 %v32, 96
  %v1119 = vpop.permute.xlu0 %1118
  %vm1120 = vcmp.lt.s32.totalorder %v37, 96
  %v1121 = vsel %vm1120, %v1117, %v1119
  %v1122 = vsel %vm1120, %v1115, %v1117
  %v1123 = vsel %vm1120, %v1113, %v1115
  %v1124 = vsel %vm1120, %v1111, %v1113
  %v1125 = vsel %vm1120, %v1109, %v1111
  %v1126 = vsel %vm1120, %v1107, %v1109
  %v1127 = vsel %vm1120, %v1105, %v1107
  %v1128 = vsel %vm1120, %v1119, %v1105
  %v1129 = vmul.f32 %v103, %v1012
  %v1131 = vlaneseq
  %v1132 = vshrl.u32 %v1131, 7
  %v1133 = vsub.s32 0, %v1132
  %v1134 = vrot.slane %v1129, %v1133
  %v1135 = vlaneseq
  %v1136 = vshrl.u32 %v1135, 7
  %v1137 = vsub.s32 1, %v1136
  %v1138 = vrot.slane %v1129, %v1137
  %v1139 = vlaneseq
  %v1140 = vshrl.u32 %v1139, 7
  %v1141 = vsub.s32 2, %v1140
  %v1142 = vrot.slane %v1129, %v1141
  %v1143 = vlaneseq
  %v1144 = vshrl.u32 %v1143, 7
  %v1145 = vsub.s32 3, %v1144
  %v1146 = vrot.slane %v1129, %v1145
  %v1147 = vlaneseq
  %v1148 = vshrl.u32 %v1147, 7
  %v1149 = vsub.s32 4, %v1148
  %v1150 = vrot.slane %v1129, %v1149
  %v1151 = vlaneseq
  %v1152 = vshrl.u32 %v1151, 7
  %v1153 = vsub.s32 5, %v1152
  %v1154 = vrot.slane %v1129, %v1153
  %v1155 = vlaneseq
  %v1156 = vshrl.u32 %v1155, 7
  %v1157 = vsub.s32 6, %v1156
  %v1158 = vrot.slane %v1129, %v1157
  %v1159 = vlaneseq
  %v1160 = vshrl.u32 %v1159, 7
  %v1161 = vsub.s32 7, %v1160
  %v1162 = vrot.slane %v1129, %v1161
  %v1171 = vmul.f32 %v1127, %v1134
  %v1172 = vmul.f32 %v1126, %v1138
  %v1173 = vmul.f32 %v1125, %v1142
  %v1174 = vmul.f32 %v1124, %v1146
  %v1175 = vmul.f32 %v1123, %v1150
  %v1176 = vmul.f32 %v1122, %v1154
  %v1177 = vmul.f32 %v1121, %v1158
  %v1178 = vmul.f32 %v1128, %v1162
  %1179 = vset.pattern.permute.xlu0 7
  %1180 = vperm.xlu0 %1179, %v34
  %v1181 = vpop.permute.xlu0 %1180
  %v1183 = vmul.f32 %v1171, %v1181
  %v1184 = vmul.f32 %v1172, %v1181
  %v1185 = vmul.f32 %v1173, %v1181
  %v1186 = vmul.f32 %v1174, %v1181
  %v1187 = vmul.f32 %v1175, %v1181
  %v1188 = vmul.f32 %v1176, %v1181
  %v1189 = vmul.f32 %v1177, %v1181
  %v1190 = vmul.f32 %v1178, %v1181
  %v1191 = vadd.f32 %v1076, %v1183
  %v1192 = vadd.f32 %v1077, %v1184
  %v1193 = vadd.f32 %v1078, %v1185
  %v1194 = vadd.f32 %v1079, %v1186
  %v1195 = vadd.f32 %v1080, %v1187
  %v1196 = vadd.f32 %v1081, %v1188
  %v1197 = vadd.f32 %v1082, %v1189
  %v1198 = vadd.f32 %v1083, %v1190
  %1199 = vset.pattern.permute.xlu0 7
  %1200 = vperm.xlu0 %1199, %v35
  %v1201 = vpop.permute.xlu0 %1200
  %v1203 = vmul.f32 %v1171, %v1201
  %v1204 = vmul.f32 %v1172, %v1201
  %v1205 = vmul.f32 %v1173, %v1201
  %v1206 = vmul.f32 %v1174, %v1201
  %v1207 = vmul.f32 %v1175, %v1201
  %v1208 = vmul.f32 %v1176, %v1201
  %v1209 = vmul.f32 %v1177, %v1201
  %v1210 = vmul.f32 %v1178, %v1201
  %v1211 = vadd.f32 %v1096, %v1203
  %v1212 = vadd.f32 %v1097, %v1204
  %v1213 = vadd.f32 %v1098, %v1205
  %v1214 = vadd.f32 %v1099, %v1206
  %v1215 = vadd.f32 %v1100, %v1207
  %v1216 = vadd.f32 %v1101, %v1208
  %v1217 = vadd.f32 %v1102, %v1209
  %v1218 = vadd.f32 %v1103, %v1210
  %1219 = vrot.lane.b32.xlu0 %v25, 95
  %v1220 = vpop.permute.xlu0 %1219
  %1221 = vrot.lane.b32.xlu0 %v26, 95
  %v1222 = vpop.permute.xlu0 %1221
  %1223 = vrot.lane.b32.xlu0 %v27, 95
  %v1224 = vpop.permute.xlu0 %1223
  %1225 = vrot.lane.b32.xlu0 %v28, 95
  %v1226 = vpop.permute.xlu0 %1225
  %1227 = vrot.lane.b32.xlu0 %v29, 95
  %v1228 = vpop.permute.xlu0 %1227
  %1229 = vrot.lane.b32.xlu0 %v30, 95
  %v1230 = vpop.permute.xlu0 %1229
  %1231 = vrot.lane.b32.xlu0 %v31, 95
  %v1232 = vpop.permute.xlu0 %1231
  %1233 = vrot.lane.b32.xlu0 %v32, 95
  %v1234 = vpop.permute.xlu0 %1233
  %vm1235 = vcmp.lt.s32.totalorder %v37, 95
  %v1236 = vsel %vm1235, %v1232, %v1234
  %v1237 = vsel %vm1235, %v1230, %v1232
  %v1238 = vsel %vm1235, %v1228, %v1230
  %v1239 = vsel %vm1235, %v1226, %v1228
  %v1240 = vsel %vm1235, %v1224, %v1226
  %v1241 = vsel %vm1235, %v1222, %v1224
  %v1242 = vsel %vm1235, %v1220, %v1222
  %v1243 = vsel %vm1235, %v1234, %v1220
  %v1244 = vmul.f32 %v149, %v1012
  %v1246 = vlaneseq
  %v1247 = vshrl.u32 %v1246, 7
  %v1248 = vsub.s32 0, %v1247
  %v1249 = vrot.slane %v1244, %v1248
  %v1250 = vlaneseq
  %v1251 = vshrl.u32 %v1250, 7
  %v1252 = vsub.s32 1, %v1251
  %v1253 = vrot.slane %v1244, %v1252
  %v1254 = vlaneseq
  %v1255 = vshrl.u32 %v1254, 7
  %v1256 = vsub.s32 2, %v1255
  %v1257 = vrot.slane %v1244, %v1256
  %v1258 = vlaneseq
  %v1259 = vshrl.u32 %v1258, 7
  %v1260 = vsub.s32 3, %v1259
  %v1261 = vrot.slane %v1244, %v1260
  %v1262 = vlaneseq
  %v1263 = vshrl.u32 %v1262, 7
  %v1264 = vsub.s32 4, %v1263
  %v1265 = vrot.slane %v1244, %v1264
  %v1266 = vlaneseq
  %v1267 = vshrl.u32 %v1266, 7
  %v1268 = vsub.s32 5, %v1267
  %v1269 = vrot.slane %v1244, %v1268
  %v1270 = vlaneseq
  %v1271 = vshrl.u32 %v1270, 7
  %v1272 = vsub.s32 6, %v1271
  %v1273 = vrot.slane %v1244, %v1272
  %v1274 = vlaneseq
  %v1275 = vshrl.u32 %v1274, 7
  %v1276 = vsub.s32 7, %v1275
  %v1277 = vrot.slane %v1244, %v1276
  %v1286 = vmul.f32 %v1242, %v1249
  %v1287 = vmul.f32 %v1241, %v1253
  %v1288 = vmul.f32 %v1240, %v1257
  %v1289 = vmul.f32 %v1239, %v1261
  %v1290 = vmul.f32 %v1238, %v1265
  %v1291 = vmul.f32 %v1237, %v1269
  %v1292 = vmul.f32 %v1236, %v1273
  %v1293 = vmul.f32 %v1243, %v1277
  %1294 = vset.pattern.permute.xlu0 8
  %1295 = vperm.xlu0 %1294, %v34
  %v1296 = vpop.permute.xlu0 %1295
  %v1298 = vmul.f32 %v1286, %v1296
  %v1299 = vmul.f32 %v1287, %v1296
  %v1300 = vmul.f32 %v1288, %v1296
  %v1301 = vmul.f32 %v1289, %v1296
  %v1302 = vmul.f32 %v1290, %v1296
  %v1303 = vmul.f32 %v1291, %v1296
  %v1304 = vmul.f32 %v1292, %v1296
  %v1305 = vmul.f32 %v1293, %v1296
  %v1306 = vadd.f32 %v1191, %v1298
  %v1307 = vadd.f32 %v1192, %v1299
  %v1308 = vadd.f32 %v1193, %v1300
  %v1309 = vadd.f32 %v1194, %v1301
  %v1310 = vadd.f32 %v1195, %v1302
  %v1311 = vadd.f32 %v1196, %v1303
  %v1312 = vadd.f32 %v1197, %v1304
  %v1313 = vadd.f32 %v1198, %v1305
  %1314 = vset.pattern.permute.xlu0 8
  %1315 = vperm.xlu0 %1314, %v35
  %v1316 = vpop.permute.xlu0 %1315
  %v1318 = vmul.f32 %v1286, %v1316
  %v1319 = vmul.f32 %v1287, %v1316
  %v1320 = vmul.f32 %v1288, %v1316
  %v1321 = vmul.f32 %v1289, %v1316
  %v1322 = vmul.f32 %v1290, %v1316
  %v1323 = vmul.f32 %v1291, %v1316
  %v1324 = vmul.f32 %v1292, %v1316
  %v1325 = vmul.f32 %v1293, %v1316
  %v1326 = vadd.f32 %v1211, %v1318
  %v1327 = vadd.f32 %v1212, %v1319
  %v1328 = vadd.f32 %v1213, %v1320
  %v1329 = vadd.f32 %v1214, %v1321
  %v1330 = vadd.f32 %v1215, %v1322
  %v1331 = vadd.f32 %v1216, %v1323
  %v1332 = vadd.f32 %v1217, %v1324
  %v1333 = vadd.f32 %v1218, %v1325
  %v1334 = vld [vmem:[%s3] sm:$0xff]
  %1336 = vset.pattern.permute.xlu0 0
  %1337 = vperm.xlu0 %1336, %v1334
  %v1338 = vpop.permute.xlu0 %1337
  %v1340 = vadd.f32 %v1306, %v1338
  %v1341 = vadd.f32 %v1307, %v1338
  %v1342 = vadd.f32 %v1308, %v1338
  %v1343 = vadd.f32 %v1309, %v1338
  %v1344 = vadd.f32 %v1310, %v1338
  %v1345 = vadd.f32 %v1311, %v1338
  %v1346 = vadd.f32 %v1312, %v1338
  %v1347 = vadd.f32 %v1313, %v1338
  %v1348 = vpack.c.bf16 %v1340, %v1340
  %v1349 = vpack.c.bf16 %v1341, %v1341
  %v1350 = vpack.c.bf16 %v1342, %v1342
  %v1351 = vpack.c.bf16 %v1343, %v1343
  %v1352 = vpack.c.bf16 %v1344, %v1344
  %v1353 = vpack.c.bf16 %v1345, %v1345
  %v1354 = vpack.c.bf16 %v1346, %v1346
  %v1355 = vpack.c.bf16 %v1347, %v1347
  %v1364 = vunpack.c.l.b16 %v1348
  %v1365 = vunpack.c.l.b16 %v1349
  %v1366 = vunpack.c.l.b16 %v1350
  %v1367 = vunpack.c.l.b16 %v1351
  %v1368 = vunpack.c.l.b16 %v1352
  %v1369 = vunpack.c.l.b16 %v1353
  %v1370 = vunpack.c.l.b16 %v1354
  %v1371 = vunpack.c.l.b16 %v1355
  %v1372 = vpack.c.b16 %v1365, %v1364
  %v1373 = vpack.c.b16 %v1367, %v1366
  %v1374 = vpack.c.b16 %v1369, %v1368
  %v1375 = vpack.c.b16 %v1371, %v1370
  %1380 = vst [vmem:[%s6] sm:$0xff] %v1372
  %1381 = vst [vmem:[%s6 + $0x8] sm:$0xff] %v1373
  %1382 = vst [vmem:[%s6 + $0x10] sm:$0xff] %v1374
  %1383 = vst [vmem:[%s6 + $0x18] sm:$0xff] %v1375
  %v1384 = vld [vmem:[%s5] sm:$0xff]
  %1386 = vset.pattern.permute.xlu0 0
  %1387 = vperm.xlu0 %1386, %v1384
  %v1388 = vpop.permute.xlu0 %1387
  %v1390 = vadd.f32 %v1326, %v1388
  %v1391 = vadd.f32 %v1327, %v1388
  %v1392 = vadd.f32 %v1328, %v1388
  %v1393 = vadd.f32 %v1329, %v1388
  %v1394 = vadd.f32 %v1330, %v1388
  %v1395 = vadd.f32 %v1331, %v1388
  %v1396 = vadd.f32 %v1332, %v1388
  %v1397 = vadd.f32 %v1333, %v1388
  %v1398 = vpack.c.bf16 %v1390, %v1390
  %v1399 = vpack.c.bf16 %v1391, %v1391
  %v1400 = vpack.c.bf16 %v1392, %v1392
  %v1401 = vpack.c.bf16 %v1393, %v1393
  %v1402 = vpack.c.bf16 %v1394, %v1394
  %v1403 = vpack.c.bf16 %v1395, %v1395
  %v1404 = vpack.c.bf16 %v1396, %v1396
  %v1405 = vpack.c.bf16 %v1397, %v1397
  %v1414 = vunpack.c.l.b16 %v1398
  %v1415 = vunpack.c.l.b16 %v1399
  %v1416 = vunpack.c.l.b16 %v1400
  %v1417 = vunpack.c.l.b16 %v1401
  %v1418 = vunpack.c.l.b16 %v1402
  %v1419 = vunpack.c.l.b16 %v1403
  %v1420 = vunpack.c.l.b16 %v1404
  %v1421 = vunpack.c.l.b16 %v1405
  %v1422 = vpack.c.b16 %v1415, %v1414
  %v1423 = vpack.c.b16 %v1417, %v1416
  %v1424 = vpack.c.b16 %v1419, %v1418
  %v1425 = vpack.c.b16 %v1421, %v1420
  %1430 = vst [vmem:[%s7] sm:$0xff] %v1422
  %1431 = vst [vmem:[%s7 + $0x8] sm:$0xff] %v1423
  %1432 = vst [vmem:[%s7 + $0x10] sm:$0xff] %v1424
  %1433 = vst [vmem:[%s7 + $0x18] sm:$0xff] %v1425
  // Predicated region
  $region26: #{pmpa1_ave_forward.3} parent=0 // pred_check
    _
  $region27: #{pmpa1_ave_forward.3} parent=0 // pred_check_branch
    %1435 = sbr.rel (0) target = $region29
  $region28: #{pmpa1_ave_forward.3} parent=0 // pred_region
    _
  $region29: #{pmpa1_ave_forward.3} parent=0 // pred_fallthru
    _
  // Predicated region
  $region30: #{pmpa1_ave_forward.3} parent=0 // pred_check
    _
  $region31: #{pmpa1_ave_forward.3} parent=0 // pred_check_branch
    %1437 = sbr.rel (0) target = $region33
  $region32: #{pmpa1_ave_forward.3} parent=0 // pred_region
    _
  $region33: #{pmpa1_ave_forward.3} parent=0 // pred_fallthru
    _
  // Predicated region
  $region34: #{pmpa1_ave_forward.3} parent=0 // pred_check
    _
  $region35: #{pmpa1_ave_forward.3} parent=0 // pred_check_branch
    %1439 = sbr.rel (0) target = $region37
  $region36: #{pmpa1_ave_forward.3} parent=0 // pred_region
    _
  $region37: #{pmpa1_ave_forward.3} parent=0 // pred_fallthru
    _
  // Predicated region
  $region38: #{pmpa1_ave_forward.3} parent=0 // pred_check
    _
  $region39: #{pmpa1_ave_forward.3} parent=0 // pred_check_branch
    %1441 = sbr.rel (0) target = $region41
  $region40: #{pmpa1_ave_forward.3} parent=0 // pred_region
    _
  $region41: #{pmpa1_ave_forward.3} parent=0 // pred_fallthru
    _

// kernel: pmpa1_ave_forward.4
$region0: #{pmpa1_ave_forward.4}
  #allocation0 [shape = 'u32[]', space=smem, size = 0x4, offset = 0x4, fixed_abs, tag = 'smem constant byte address 0x4 - core index']
  #allocation1 [shape = 'u32[144,128]{1,0:T(1,128)}', space=vmem, size = 0x12000, scoped, tag = 'internal scratch']
  #allocation2 [shape = 'f32[4,1]{1,0:T(4,128)}', space=vmem, size = 0x800, scoped, tag = 'scratch operand']
  #allocation3 [shape = 'f32[4,1]{1,0:T(4,128)}', space=vmem, size = 0x800, scoped, tag = 'scratch operand']
  #allocation4 [shape = 'f32[4,1024]{1,0:T(4,128)}', space=vmem, size = 0x4000, scoped, tag = 'scratch operand']
  %s0 = inlined_call_operand.vmem [shape: bf16[2,4,1024], index: 0, kind: input, shape index: {}]
  %s1 = inlined_call_operand.vmem [shape: bf16[2,1024,4], index: 1, kind: input, shape index: {}]
  %s2 = inlined_call_operand.vmem [shape: bf16[2,4,1024], index: 2, kind: input, shape index: {}]
  %s3 = inlined_call_operand.vmem [shape: f32[2,4,1024], index: 3, kind: output, shape index: {}]
  %s4 = sld [smem:[#allocation0]]
  $region53: #{pmpa1_ave_forward.4} parent=0
    _
  %s6 = ssub.s32 1, %s4
  %s7 = scalar_select 0, %s6, %s4
  loop: start=0, step=1, limit=4
  $region2: #{pmpa1_ave_forward.4} parent=0 // loop_pre_header
    _
  $region3: #{pmpa1_ave_forward.4} parent=0 // loop_header
    %s9 = sphi 0, %s13
    %p10 = scmp.ge.s32.totalorder %s9, 4
    %s16 = sphi 0, %s28
    %s17 = sphi 0, %s24
    %s18 = sphi 0, %s16
    %s19 = sphi 0, %s17
    %s20 = sphi 0, %s18
    %s21 = sphi 0, %s19
    %s31 = sphi 0, %s33
    %s34 = sphi 0, %s31
    %s35 = sphi 0, %s34
    %s51 = sphi 0, %s35
    %s59 = sphi 0, %s61
    %s62 = sphi 0, %s59
    %s63 = sphi 0, %s62
    %s79 = sphi 0, %s63
    %s87 = sphi 0, %s89
    %s90 = sphi 0, %s87
    %s91 = sphi 0, %s90
    %s107 = sphi 0, %s91
    %s113 = sphi 0, %s115
    %s116 = sphi 0, %s113
    %s117 = sphi 0, %s116
    %s133 = sphi 0, %s117
  $region4: #{pmpa1_ave_forward.4} parent=0 // loop_header_branch
    %12 = sbr.rel (%p10) target = $region8
  $region5: #{pmpa1_ave_forward.4} parent=0 // loop_body
    %s14 = ssub.s32 %s9, 1
    %s15 = ssub.s32 %s9, 2
    %s22 = sadd.s32 1, %s17
    %p23 = scmp.ge.s32.totalorder %s22, 1
    %s24 = scalar_select %p23, 0, %s22
    %s25 = sadd.s32 1, %s16
    %s26 = scalar_select %p23, %s25, %s16
    %p27 = scmp.ge.s32.totalorder %s26, 2
    %s28 = scalar_select %p27, 0, %s26
    %s29 = ssub.s32 %s16, %s28
    %p30 = scmp.eq.s32.totalorder %s29, 0
    %s32 = sadd.s32 %s31, 1
    %s33 = scalar_select %p30, %s31, %s32
    %p36 = pneg %p30
    %p37 = scmp.eq.s32.totalorder %s9, 1
    %p38 = por %p36, %p37
    %p39 = scmp.ne.s32.totalorder %s31, %s34
    %p40 = scmp.eq.s32.totalorder %s9, 0
    %p41 = por %p39, %p40
    %p42 = scmp.ne.s32.totalorder %s31, %s34
    %p43 = scmp.eq.s32.totalorder %s14, 1
    %p44 = por %p42, %p43
    %p45 = scmp.ne.s32.totalorder %s34, %s35
    %p46 = scmp.eq.s32.totalorder %s14, 0
    %p47 = por %p45, %p46
    %p48 = scmp.ne.s32.totalorder %s34, %s35
    %p49 = scmp.eq.s32.totalorder %s15, 1
    %p50 = por %p48, %p49
    %p52 = scmp.ne.s32.totalorder %s35, %s51
    %p53 = scmp.eq.s32.totalorder %s15, 0
    %p54 = por %p52, %p53
    %s55 = ssub.s32 %s16, %s28
    %s56 = ssub.s32 %s17, %s24
    %s57 = sor.u32 %s55, %s56
    %p58 = scmp.eq.s32.totalorder %s57, 0
    %s60 = sadd.s32 %s59, 1
    %s61 = scalar_select %p58, %s59, %s60
    %p64 = pneg %p58
    %p65 = scmp.eq.s32.totalorder %s9, 1
    %p66 = por %p64, %p65
    %p67 = scmp.ne.s32.totalorder %s59, %s62
    %p68 = scmp.eq.s32.totalorder %s9, 0
    %p69 = por %p67, %p68
    %p70 = scmp.ne.s32.totalorder %s59, %s62
    %p71 = scmp.eq.s32.totalorder %s14, 1
    %p72 = por %p70, %p71
    %p73 = scmp.ne.s32.totalorder %s62, %s63
    %p74 = scmp.eq.s32.totalorder %s14, 0
    %p75 = por %p73, %p74
    %p76 = scmp.ne.s32.totalorder %s62, %s63
    %p77 = scmp.eq.s32.totalorder %s15, 1
    %p78 = por %p76, %p77
    %p80 = scmp.ne.s32.totalorder %s63, %s79
    %p81 = scmp.eq.s32.totalorder %s15, 0
    %p82 = por %p80, %p81
    %s83 = ssub.s32 %s16, %s28
    %s84 = ssub.s32 %s17, %s24
    %s85 = sor.u32 %s83, %s84
    %p86 = scmp.eq.s32.totalorder %s85, 0
    %s88 = sadd.s32 %s87, 1
    %s89 = scalar_select %p86, %s87, %s88
    %p92 = pneg %p86
    %p93 = scmp.eq.s32.totalorder %s9, 1
    %p94 = por %p92, %p93
    %p95 = scmp.ne.s32.totalorder %s87, %s90
    %p96 = scmp.eq.s32.totalorder %s9, 0
    %p97 = por %p95, %p96
    %p98 = scmp.ne.s32.totalorder %s87, %s90
    %p99 = scmp.eq.s32.totalorder %s14, 1
    %p100 = por %p98, %p99
    %p101 = scmp.ne.s32.totalorder %s90, %s91
    %p102 = scmp.eq.s32.totalorder %s14, 0
    %p103 = por %p101, %p102
    %p104 = scmp.ne.s32.totalorder %s90, %s91
    %p105 = scmp.eq.s32.totalorder %s15, 1
    %p106 = por %p104, %p105
    %p108 = scmp.ne.s32.totalorder %s91, %s107
    %p109 = scmp.eq.s32.totalorder %s15, 0
    %p110 = por %p108, %p109
    %s111 = ssub.s32 %s16, %s28
    %p112 = scmp.eq.s32.totalorder %s111, 0
    %s114 = sadd.s32 %s113, 1
    %s115 = scalar_select %p112, %s113, %s114
    %p118 = pneg %p112
    %p119 = scmp.eq.s32.totalorder %s9, 1
    %p120 = por %p118, %p119
    %p121 = scmp.ne.s32.totalorder %s113, %s116
    %p122 = scmp.eq.s32.totalorder %s9, 0
    %p123 = por %p121, %p122
    %p124 = scmp.ne.s32.totalorder %s113, %s116
    %p125 = scmp.eq.s32.totalorder %s14, 1
    %p126 = por %p124, %p125
    %p127 = scmp.ne.s32.totalorder %s116, %s117
    %p128 = scmp.eq.s32.totalorder %s14, 0
    %p129 = por %p127, %p128
    %p130 = scmp.ne.s32.totalorder %s116, %s117
    %p131 = scmp.eq.s32.totalorder %s15, 1
    %p132 = por %p130, %p131
    %p134 = scmp.ne.s32.totalorder %s117, %s133
    %p135 = scmp.eq.s32.totalorder %s15, 0
    %p136 = por %p134, %p135
    %p137 = scmp.le.s32.totalorder 1, %s9
    %p138 = scmp.lt.s32.totalorder %s9, 3
    %p139 = pnand %p137, %p138
    %p140 = pneg %p139
    // Predicated region
    $region9: #{pmpa1_ave_forward.4} parent=5 // pred_check
      _
    $region10: #{pmpa1_ave_forward.4} parent=5 // pred_check_branch
      %142 = sbr.rel (%p139) target = $region12
    $region11: #{pmpa1_ave_forward.4} parent=5 // pred_region
      %s143 = ssub.s32 %s9, 1
    $region12: #{pmpa1_ave_forward.4} parent=5 // pred_fallthru
      _
    %p144 = scmp.lt.s32.totalorder %s9, 2
    // Predicated region
    $region13: #{pmpa1_ave_forward.4} parent=5 // pred_check
      %p145 = pneg %p144
    $region14: #{pmpa1_ave_forward.4} parent=5 // pred_check_branch
      %147 = sbr.rel (%p145) target = $region16
    $region15: #{pmpa1_ave_forward.4} parent=5 // pred_region
      // Predicated region
      $region17: #{pmpa1_ave_forward.4} parent=15 // pred_check
        %p148 = pneg %p41
      $region18: #{pmpa1_ave_forward.4} parent=15 // pred_check_branch
        %150 = sbr.rel (%p148) target = $region20
      $region19: #{pmpa1_ave_forward.4} parent=15 // pred_region
        %p151 = scmp.lt.s32.totalorder %s16, 1
        %s152 = scalar_select %p151, %s16, 1
        %s153 = smul.addr %s152, 8
        %s154 = smul.addr %s153, 2
        %s155 = scalar_lea.vmem %s0, %s154
      $region20: #{pmpa1_ave_forward.4} parent=15 // pred_fallthru
        _
      // Predicated region
      $region21: #{pmpa1_ave_forward.4} parent=15 // pred_check
        %p156 = pneg %p69
      $region22: #{pmpa1_ave_forward.4} parent=15 // pred_check_branch
        %158 = sbr.rel (%p156) target = $region24
      $region23: #{pmpa1_ave_forward.4} parent=15 // pred_region
        %p159 = scmp.lt.s32.totalorder %s16, 1
        %s160 = scalar_select %p159, %s16, 1
        %p161 = scmp.lt.s32.totalorder %s17, 0
        %s162 = scalar_select %p161, %s17, 0
        %s163 = smul.addr %s160, 128
        %s164 = sadd.s32 %s162, %s163
        %s165 = smul.addr %s164, 4
        %s166 = scalar_lea.vmem %s1, %s165
      $region24: #{pmpa1_ave_forward.4} parent=15 // pred_fallthru
        _
      // Predicated region
      $region25: #{pmpa1_ave_forward.4} parent=15 // pred_check
        %p167 = pneg %p97
      $region26: #{pmpa1_ave_forward.4} parent=15 // pred_check_branch
        %169 = sbr.rel (%p167) target = $region28
      $region27: #{pmpa1_ave_forward.4} parent=15 // pred_region
        %p170 = scmp.lt.s32.totalorder %s16, 1
        %s171 = scalar_select %p170, %s16, 1
        %p172 = scmp.lt.s32.totalorder %s17, 0
        %s173 = scalar_select %p172, %s17, 0
        %s174 = smul.addr %s173, 8
        %s175 = smul.addr %s171, 8
        %s176 = sadd.s32 %s174, %s175
        %s177 = smul.addr %s176, 2
        %s178 = scalar_lea.vmem %s2, %s177
      $region28: #{pmpa1_ave_forward.4} parent=15 // pred_fallthru
        _
    $region16: #{pmpa1_ave_forward.4} parent=5 // pred_fallthru
      _
    %p179 = scmp.le.s32.totalorder 1, %s9
    %p180 = scmp.lt.s32.totalorder %s9, 3
    %p181 = pnand %p179, %p180
    %p182 = pneg %p181
    // Predicated region
    $region29: #{pmpa1_ave_forward.4} parent=5 // pred_check
      _
    $region30: #{pmpa1_ave_forward.4} parent=5 // pred_check_branch
      %184 = sbr.rel (%p181) target = $region32
    $region31: #{pmpa1_ave_forward.4} parent=5 // pred_region
      %s185 = ssub.s32 %s9, 1
      %p186 = scmp.lt.s32.totalorder %s18, 1
      %s187 = scalar_select %p186, %s18, 1
      %s188 = smul.addr %s187, 8
      %s189 = smul.addr %s188, 2
      %s190 = scalar_lea.vmem %s0, %s189
      %p191 = pneg %p47
      %p192 = pneg %p44
      %p193 = scmp.lt.s32.totalorder %s18, 1
      %s194 = scalar_select %p193, %s18, 1
      %p195 = scmp.lt.s32.totalorder %s19, 0
      %s196 = scalar_select %p195, %s19, 0
      %s197 = smul.addr %s194, 128
      %s198 = sadd.s32 %s196, %s197
      %s199 = smul.addr %s198, 4
      %s200 = scalar_lea.vmem %s1, %s199
      %p201 = pneg %p75
      %p202 = pneg %p72
      %p203 = scmp.lt.s32.totalorder %s18, 1
      %s204 = scalar_select %p203, %s18, 1
      %p205 = scmp.lt.s32.totalorder %s19, 0
      %s206 = scalar_select %p205, %s19, 0
      %s207 = smul.addr %s206, 8
      %s208 = smul.addr %s204, 8
      %s209 = sadd.s32 %s207, %s208
      %s210 = smul.addr %s209, 2
      %s211 = scalar_lea.vmem %s2, %s210
      %p212 = pneg %p103
      %p213 = pneg %p100
      %p214 = pneg %p129
      %p215 = pneg %p126
      %p216 = scmp.lt.s32.totalorder %s18, 1
      %s217 = scalar_select %p216, %s18, 1
      %s218 = smul.addr %s217, 8
      %s219 = smul.addr %s218, 4
      %s220 = scalar_lea.vmem %s3, %s219
      %p221 = scmp.lt.s32.totalorder %s18, 1
      %s222 = scalar_select %p221, %s18, 1
      %s223 = smul.addr %s222, 8
      %s224 = smul.addr %s223, 2
      %s225 = scalar_lea.vmem %s0, %s224
      %p226 = scmp.lt.s32.totalorder %s18, 1
      %s227 = scalar_select %p226, %s18, 1
      %p228 = scmp.lt.s32.totalorder %s19, 0
      %s229 = scalar_select %p228, %s19, 0
      %s230 = smul.addr %s227, 128
      %s231 = sadd.s32 %s229, %s230
      %s232 = smul.addr %s231, 4
      %s233 = scalar_lea.vmem %s1, %s232
      %p234 = scmp.lt.s32.totalorder %s18, 1
      %s235 = scalar_select %p234, %s18, 1
      %p236 = scmp.lt.s32.totalorder %s19, 0
      %s237 = scalar_select %p236, %s19, 0
      %s238 = smul.addr %s237, 8
      %s239 = smul.addr %s235, 8
      %s240 = sadd.s32 %s238, %s239
      %s241 = smul.addr %s240, 2
      %s242 = scalar_lea.vmem %s2, %s241
      %p243 = scmp.lt.s32.totalorder %s18, 1
      %s244 = scalar_select %p243, %s18, 1
      %s245 = smul.addr %s244, 8
      %s246 = smul.addr %s245, 4
      %s247 = scalar_lea.vmem %s3, %s246
      %p249 = scmp.eq.s32.totalorder %s19, 0
      // Predicated region
      $region33: #{pmpa1_ave_forward.4} parent=31 // pred_check
        %p250 = pneg %p249
      $region34: #{pmpa1_ave_forward.4} parent=31 // pred_check_branch
        %252 = sbr.rel (%p250) target = $region36
      $region35: #{pmpa1_ave_forward.4} parent=31 // pred_region
        %vm253 = vcmask 3072
        %254 = vst.msk [vmem:[#allocation2] sm:$0xf] %vm253, -inf
        %255 = vst.msk [vmem:[#allocation3] sm:$0xf] %vm253, 0.0
        %256 = vst [vmem:[#allocation4] sm:$0xff] 0.0
        %257 = vst [vmem:[#allocation4 + $0x8] sm:$0xff] 0.0
        %258 = vst [vmem:[#allocation4 + $0x10] sm:$0xff] 0.0
        %259 = vst [vmem:[#allocation4 + $0x18] sm:$0xff] 0.0
      $region36: #{pmpa1_ave_forward.4} parent=31 // pred_fallthru
        _
      %v260 = vld [vmem:[%s225] sm:$0xff]
      %v261 = vld [vmem:[%s225 + $0x8] sm:$0xff]
      %v262 = vld [vmem:[%s233] sm:$0xf]
      %v263 = vld [vmem:[%s233 + $0x4] sm:$0xf]
      %v264 = vld [vmem:[%s233 + $0x8] sm:$0xf]
      %v265 = vld [vmem:[%s233 + $0xc] sm:$0xf]
      %v266 = vld [vmem:[%s233 + $0x10] sm:$0xf]
      %v267 = vld [vmem:[%s233 + $0x14] sm:$0xf]
      %v268 = vld [vmem:[%s233 + $0x18] sm:$0xf]
      %v269 = vld [vmem:[%s233 + $0x1c] sm:$0xf]
      %v270 = vld [vmem:[%s233 + $0x20] sm:$0xf]
      %v271 = vld [vmem:[%s233 + $0x24] sm:$0xf]
      %v272 = vld [vmem:[%s233 + $0x28] sm:$0xf]
      %v273 = vld [vmem:[%s233 + $0x2c] sm:$0xf]
      %v274 = vld [vmem:[%s233 + $0x30] sm:$0xf]
      %v275 = vld [vmem:[%s233 + $0x34] sm:$0xf]
      %v276 = vld [vmem:[%s233 + $0x38] sm:$0xf]
      %v277 = vld [vmem:[%s233 + $0x3c] sm:$0xf]
      %v278 = vld [vmem:[%s233 + $0x40] sm:$0xf]
      %v279 = vld [vmem:[%s233 + $0x44] sm:$0xf]
      %v280 = vld [vmem:[%s233 + $0x48] sm:$0xf]
      %v281 = vld [vmem:[%s233 + $0x4c] sm:$0xf]
      %v282 = vld [vmem:[%s233 + $0x50] sm:$0xf]
      %v283 = vld [vmem:[%s233 + $0x54] sm:$0xf]
      %v284 = vld [vmem:[%s233 + $0x58] sm:$0xf]
      %v285 = vld [vmem:[%s233 + $0x5c] sm:$0xf]
      %v286 = vld [vmem:[%s233 + $0x60] sm:$0xf]
      %v287 = vld [vmem:[%s233 + $0x64] sm:$0xf]
      %v288 = vld [vmem:[%s233 + $0x68] sm:$0xf]
      %v289 = vld [vmem:[%s233 + $0x6c] sm:$0xf]
      %v290 = vld [vmem:[%s233 + $0x70] sm:$0xf]
      %v291 = vld [vmem:[%s233 + $0x74] sm:$0xf]
      %v292 = vld [vmem:[%s233 + $0x78] sm:$0xf]
      %v293 = vld [vmem:[%s233 + $0x7c] sm:$0xf]
      %v294 = vld [vmem:[%s233 + $0x80] sm:$0xf]
      %v295 = vld [vmem:[%s233 + $0x84] sm:$0xf]
      %v296 = vld [vmem:[%s233 + $0x88] sm:$0xf]
      %v297 = vld [vmem:[%s233 + $0x8c] sm:$0xf]
      %v298 = vld [vmem:[%s233 + $0x90] sm:$0xf]
      %v299 = vld [vmem:[%s233 + $0x94] sm:$0xf]
      %v300 = vld [vmem:[%s233 + $0x98] sm:$0xf]
      %v301 = vld [vmem:[%s233 + $0x9c] sm:$0xf]
      %v302 = vld [vmem:[%s233 + $0xa0] sm:$0xf]
      %v303 = vld [vmem:[%s233 + $0xa4] sm:$0xf]
      %v304 = vld [vmem:[%s233 + $0xa8] sm:$0xf]
      %v305 = vld [vmem:[%s233 + $0xac] sm:$0xf]
      %v306 = vld [vmem:[%s233 + $0xb0] sm:$0xf]
      %v307 = vld [vmem:[%s233 + $0xb4] sm:$0xf]
      %v308 = vld [vmem:[%s233 + $0xb8] sm:$0xf]
      %v309 = vld [vmem:[%s233 + $0xbc] sm:$0xf]
      %v310 = vld [vmem:[%s233 + $0xc0] sm:$0xf]
      %v311 = vld [vmem:[%s233 + $0xc4] sm:$0xf]
      %v312 = vld [vmem:[%s233 + $0xc8] sm:$0xf]
      %v313 = vld [vmem:[%s233 + $0xcc] sm:$0xf]
      %v314 = vld [vmem:[%s233 + $0xd0] sm:$0xf]
      %v315 = vld [vmem:[%s233 + $0xd4] sm:$0xf]
      %v316 = vld [vmem:[%s233 + $0xd8] sm:$0xf]
      %v317 = vld [vmem:[%s233 + $0xdc] sm:$0xf]
      %v318 = vld [vmem:[%s233 + $0xe0] sm:$0xf]
      %v319 = vld [vmem:[%s233 + $0xe4] sm:$0xf]
      %v320 = vld [vmem:[%s233 + $0xe8] sm:$0xf]
      %v321 = vld [vmem:[%s233 + $0xec] sm:$0xf]
      %v322 = vld [vmem:[%s233 + $0xf0] sm:$0xf]
      %v323 = vld [vmem:[%s233 + $0xf4] sm:$0xf]
      %v324 = vld [vmem:[%s233 + $0xf8] sm:$0xf]
      %v325 = vld [vmem:[%s233 + $0xfc] sm:$0xf]
      %v326 = vld [vmem:[%s233 + $0x100] sm:$0xf]
      %v327 = vld [vmem:[%s233 + $0x104] sm:$0xf]
      %v328 = vld [vmem:[%s233 + $0x108] sm:$0xf]
      %v329 = vld [vmem:[%s233 + $0x10c] sm:$0xf]
      %v330 = vld [vmem:[%s233 + $0x110] sm:$0xf]
      %v331 = vld [vmem:[%s233 + $0x114] sm:$0xf]
      %v332 = vld [vmem:[%s233 + $0x118] sm:$0xf]
      %v333 = vld [vmem:[%s233 + $0x11c] sm:$0xf]
      %v334 = vld [vmem:[%s233 + $0x120] sm:$0xf]
      %v335 = vld [vmem:[%s233 + $0x124] sm:$0xf]
      %v336 = vld [vmem:[%s233 + $0x128] sm:$0xf]
      %v337 = vld [vmem:[%s233 + $0x12c] sm:$0xf]
      %v338 = vld [vmem:[%s233 + $0x130] sm:$0xf]
      %v339 = vld [vmem:[%s233 + $0x134] sm:$0xf]
      %v340 = vld [vmem:[%s233 + $0x138] sm:$0xf]
      %v341 = vld [vmem:[%s233 + $0x13c] sm:$0xf]
      %v342 = vld [vmem:[%s233 + $0x140] sm:$0xf]
      %v343 = vld [vmem:[%s233 + $0x144] sm:$0xf]
      %v344 = vld [vmem:[%s233 + $0x148] sm:$0xf]
      %v345 = vld [vmem:[%s233 + $0x14c] sm:$0xf]
      %v346 = vld [vmem:[%s233 + $0x150] sm:$0xf]
      %v347 = vld [vmem:[%s233 + $0x154] sm:$0xf]
      %v348 = vld [vmem:[%s233 + $0x158] sm:$0xf]
      %v349 = vld [vmem:[%s233 + $0x15c] sm:$0xf]
      %v350 = vld [vmem:[%s233 + $0x160] sm:$0xf]
      %v351 = vld [vmem:[%s233 + $0x164] sm:$0xf]
      %v352 = vld [vmem:[%s233 + $0x168] sm:$0xf]
      %v353 = vld [vmem:[%s233 + $0x16c] sm:$0xf]
      %v354 = vld [vmem:[%s233 + $0x170] sm:$0xf]
      %v355 = vld [vmem:[%s233 + $0x174] sm:$0xf]
      %v356 = vld [vmem:[%s233 + $0x178] sm:$0xf]
      %v357 = vld [vmem:[%s233 + $0x17c] sm:$0xf]
      %v358 = vld [vmem:[%s233 + $0x180] sm:$0xf]
      %v359 = vld [vmem:[%s233 + $0x184] sm:$0xf]
      %v360 = vld [vmem:[%s233 + $0x188] sm:$0xf]
      %v361 = vld [vmem:[%s233 + $0x18c] sm:$0xf]
      %v362 = vld [vmem:[%s233 + $0x190] sm:$0xf]
      %v363 = vld [vmem:[%s233 + $0x194] sm:$0xf]
      %v364 = vld [vmem:[%s233 + $0x198] sm:$0xf]
      %v365 = vld [vmem:[%s233 + $0x19c] sm:$0xf]
      %v366 = vld [vmem:[%s233 + $0x1a0] sm:$0xf]
      %v367 = vld [vmem:[%s233 + $0x1a4] sm:$0xf]
      %v368 = vld [vmem:[%s233 + $0x1a8] sm:$0xf]
      %v369 = vld [vmem:[%s233 + $0x1ac] sm:$0xf]
      %v370 = vld [vmem:[%s233 + $0x1b0] sm:$0xf]
      %v371 = vld [vmem:[%s233 + $0x1b4] sm:$0xf]
      %v372 = vld [vmem:[%s233 + $0x1b8] sm:$0xf]
      %v373 = vld [vmem:[%s233 + $0x1bc] sm:$0xf]
      %v374 = vld [vmem:[%s233 + $0x1c0] sm:$0xf]
      %v375 = vld [vmem:[%s233 + $0x1c4] sm:$0xf]
      %v376 = vld [vmem:[%s233 + $0x1c8] sm:$0xf]
      %v377 = vld [vmem:[%s233 + $0x1cc] sm:$0xf]
      %v378 = vld [vmem:[%s233 + $0x1d0] sm:$0xf]
      %v379 = vld [vmem:[%s233 + $0x1d4] sm:$0xf]
      %v380 = vld [vmem:[%s233 + $0x1d8] sm:$0xf]
      %v381 = vld [vmem:[%s233 + $0x1dc] sm:$0xf]
      %v382 = vld [vmem:[%s233 + $0x1e0] sm:$0xf]
      %v383 = vld [vmem:[%s233 + $0x1e4] sm:$0xf]
      %v384 = vld [vmem:[%s233 + $0x1e8] sm:$0xf]
      %v385 = vld [vmem:[%s233 + $0x1ec] sm:$0xf]
      %v386 = vld [vmem:[%s233 + $0x1f0] sm:$0xf]
      %v387 = vld [vmem:[%s233 + $0x1f4] sm:$0xf]
      %v388 = vld [vmem:[%s233 + $0x1f8] sm:$0xf]
      %v389 = vld [vmem:[%s233 + $0x1fc] sm:$0xf]
      %v392 = vcombine.high %v260, %v260
      %v394 = vunpack.c.l.s4 1983009808
      %v395 = vunpack.c.0.s8 %v394
      %v396 = vlaneseq
      %v397 = vshrl.u32 %v396, 7
      %v398 = vsub.s32 %v395, %v397
      %v399 = vrot.slane %v260, %v398
      %v401 = vunpack.c.l.s4 1983009808
      %v402 = vunpack.c.0.s8 %v401
      %v403 = vlaneseq
      %v404 = vshrl.u32 %v403, 7
      %v405 = vsub.s32 %v402, %v404
      %v406 = vrot.slane %v392, %v405
      %v407 = vcombine.high %v399, %v399
      %v408 = vcombine.high %v406, %v406
      %v409 = vcombine.high %v261, %v261
      %v411 = vunpack.c.l.s4 1983009808
      %v412 = vunpack.c.0.s8 %v411
      %v413 = vlaneseq
      %v414 = vshrl.u32 %v413, 7
      %v415 = vsub.s32 %v412, %v414
      %v416 = vrot.slane %v261, %v415
      %v418 = vunpack.c.l.s4 1983009808
      %v419 = vunpack.c.0.s8 %v418
      %v420 = vlaneseq
      %v421 = vshrl.u32 %v420, 7
      %v422 = vsub.s32 %v419, %v421
      %v423 = vrot.slane %v409, %v422
      %v424 = vcombine.high %v416, %v416
      %v425 = vcombine.high %v423, %v423
      %v562 = vunpack.c.l.b16 %v262
      %v563 = vunpack.c.l.b16 %v263
      %v564 = vunpack.c.l.b16 %v264
      %v565 = vunpack.c.l.b16 %v265
      %v566 = vunpack.c.l.b16 %v266
      %v567 = vunpack.c.l.b16 %v267
      %v568 = vunpack.c.l.b16 %v268
      %v569 = vunpack.c.l.b16 %v269
      %v570 = vunpack.c.l.b16 %v270
      %v571 = vunpack.c.l.b16 %v271
      %v572 = vunpack.c.l.b16 %v272
      %v573 = vunpack.c.l.b16 %v273
      %v574 = vunpack.c.l.b16 %v274
      %v575 = vunpack.c.l.b16 %v275
      %v576 = vunpack.c.l.b16 %v276
      %v577 = vunpack.c.l.b16 %v277
      %v578 = vunpack.c.l.b16 %v278
      %v579 = vunpack.c.l.b16 %v279
      %v580 = vunpack.c.l.b16 %v280
      %v581 = vunpack.c.l.b16 %v281
      %v582 = vunpack.c.l.b16 %v282
      %v583 = vunpack.c.l.b16 %v283
      %v584 = vunpack.c.l.b16 %v284
      %v585 = vunpack.c.l.b16 %v285
      %v586 = vunpack.c.l.b16 %v286
      %v587 = vunpack.c.l.b16 %v287
      %v588 = vunpack.c.l.b16 %v288
      %v589 = vunpack.c.l.b16 %v289
      %v590 = vunpack.c.l.b16 %v290
      %v591 = vunpack.c.l.b16 %v291
      %v592 = vunpack.c.l.b16 %v292
      %v593 = vunpack.c.l.b16 %v293
      %v594 = vunpack.c.l.b16 %v294
      %v595 = vunpack.c.l.b16 %v295
      %v596 = vunpack.c.l.b16 %v296
      %v597 = vunpack.c.l.b16 %v297
      %v598 = vunpack.c.l.b16 %v298
      %v599 = vunpack.c.l.b16 %v299
      %v600 = vunpack.c.l.b16 %v300
      %v601 = vunpack.c.l.b16 %v301
      %v602 = vunpack.c.l.b16 %v302
      %v603 = vunpack.c.l.b16 %v303
      %v604 = vunpack.c.l.b16 %v304
      %v605 = vunpack.c.l.b16 %v305
      %v606 = vunpack.c.l.b16 %v306
      %v607 = vunpack.c.l.b16 %v307
      %v608 = vunpack.c.l.b16 %v308
      %v609 = vunpack.c.l.b16 %v309
      %v610 = vunpack.c.l.b16 %v310
      %v611 = vunpack.c.l.b16 %v311
      %v612 = vunpack.c.l.b16 %v312
      %v613 = vunpack.c.l.b16 %v313
      %v614 = vunpack.c.l.b16 %v314
      %v615 = vunpack.c.l.b16 %v315
      %v616 = vunpack.c.l.b16 %v316
      %v617 = vunpack.c.l.b16 %v317
      %v618 = vunpack.c.l.b16 %v318
      %v619 = vunpack.c.l.b16 %v319
      %v620 = vunpack.c.l.b16 %v320
      %v621 = vunpack.c.l.b16 %v321
      %v622 = vunpack.c.l.b16 %v322
      %v623 = vunpack.c.l.b16 %v323
      %v624 = vunpack.c.l.b16 %v324
      %v625 = vunpack.c.l.b16 %v325
      %v626 = vunpack.c.l.b16 %v326
      %v627 = vunpack.c.l.b16 %v327
      %v628 = vunpack.c.l.b16 %v328
      %v629 = vunpack.c.l.b16 %v329
      %v630 = vunpack.c.l.b16 %v330
      %v631 = vunpack.c.l.b16 %v331
      %v632 = vunpack.c.l.b16 %v332
      %v633 = vunpack.c.l.b16 %v333
      %v634 = vunpack.c.l.b16 %v334
      %v635 = vunpack.c.l.b16 %v335
      %v636 = vunpack.c.l.b16 %v336
      %v637 = vunpack.c.l.b16 %v337
      %v638 = vunpack.c.l.b16 %v338
      %v639 = vunpack.c.l.b16 %v339
      %v640 = vunpack.c.l.b16 %v340
      %v641 = vunpack.c.l.b16 %v341
      %v642 = vunpack.c.l.b16 %v342
      %v643 = vunpack.c.l.b16 %v343
      %v644 = vunpack.c.l.b16 %v344
      %v645 = vunpack.c.l.b16 %v345
      %v646 = vunpack.c.l.b16 %v346
      %v647 = vunpack.c.l.b16 %v347
      %v648 = vunpack.c.l.b16 %v348
      %v649 = vunpack.c.l.b16 %v349
      %v650 = vunpack.c.l.b16 %v350
      %v651 = vunpack.c.l.b16 %v351
      %v652 = vunpack.c.l.b16 %v352
      %v653 = vunpack.c.l.b16 %v353
      %v654 = vunpack.c.l.b16 %v354
      %v655 = vunpack.c.l.b16 %v355
      %v656 = vunpack.c.l.b16 %v356
      %v657 = vunpack.c.l.b16 %v357
      %v658 = vunpack.c.l.b16 %v358
      %v659 = vunpack.c.l.b16 %v359
      %v660 = vunpack.c.l.b16 %v360
      %v661 = vunpack.c.l.b16 %v361
      %v662 = vunpack.c.l.b16 %v362
      %v663 = vunpack.c.l.b16 %v363
      %v664 = vunpack.c.l.b16 %v364
      %v665 = vunpack.c.l.b16 %v365
      %v666 = vunpack.c.l.b16 %v366
      %v667 = vunpack.c.l.b16 %v367
      %v668 = vunpack.c.l.b16 %v368
      %v669 = vunpack.c.l.b16 %v369
      %v670 = vunpack.c.l.b16 %v370
      %v671 = vunpack.c.l.b16 %v371
      %v672 = vunpack.c.l.b16 %v372
      %v673 = vunpack.c.l.b16 %v373
      %v674 = vunpack.c.l.b16 %v374
      %v675 = vunpack.c.l.b16 %v375
      %v676 = vunpack.c.l.b16 %v376
      %v677 = vunpack.c.l.b16 %v377
      %v678 = vunpack.c.l.b16 %v378
      %v679 = vunpack.c.l.b16 %v379
      %v680 = vunpack.c.l.b16 %v380
      %v681 = vunpack.c.l.b16 %v381
      %v682 = vunpack.c.l.b16 %v382
      %v683 = vunpack.c.l.b16 %v383
      %v684 = vunpack.c.l.b16 %v384
      %v685 = vunpack.c.l.b16 %v385
      %v686 = vunpack.c.l.b16 %v386
      %v687 = vunpack.c.l.b16 %v387
      %v688 = vunpack.c.l.b16 %v388
      %v689 = vunpack.c.l.b16 %v389
      %v690 = vpack.c.b16 %v563, %v562
      %v691 = vpack.c.b16 %v565, %v564
      %v692 = vpack.c.b16 %v567, %v566
      %v693 = vpack.c.b16 %v569, %v568
      %v694 = vpack.c.b16 %v571, %v570
      %v695 = vpack.c.b16 %v573, %v572
      %v696 = vpack.c.b16 %v575, %v574
      %v697 = vpack.c.b16 %v577, %v576
      %v698 = vpack.c.b16 %v579, %v578
      %v699 = vpack.c.b16 %v581, %v580
      %v700 = vpack.c.b16 %v583, %v582
      %v701 = vpack.c.b16 %v585, %v584
      %v702 = vpack.c.b16 %v587, %v586
      %v703 = vpack.c.b16 %v589, %v588
      %v704 = vpack.c.b16 %v591, %v590
      %v705 = vpack.c.b16 %v593, %v592
      %v706 = vpack.c.b16 %v595, %v594
      %v707 = vpack.c.b16 %v597, %v596
      %v708 = vpack.c.b16 %v599, %v598
      %v709 = vpack.c.b16 %v601, %v600
      %v710 = vpack.c.b16 %v603, %v602
      %v711 = vpack.c.b16 %v605, %v604
      %v712 = vpack.c.b16 %v607, %v606
      %v713 = vpack.c.b16 %v609, %v608
      %v714 = vpack.c.b16 %v611, %v610
      %v715 = vpack.c.b16 %v613, %v612
      %v716 = vpack.c.b16 %v615, %v614
      %v717 = vpack.c.b16 %v617, %v616
      %v718 = vpack.c.b16 %v619, %v618
      %v719 = vpack.c.b16 %v621, %v620
      %v720 = vpack.c.b16 %v623, %v622
      %v721 = vpack.c.b16 %v625, %v624
      %v722 = vpack.c.b16 %v627, %v626
      %v723 = vpack.c.b16 %v629, %v628
      %v724 = vpack.c.b16 %v631, %v630
      %v725 = vpack.c.b16 %v633, %v632
      %v726 = vpack.c.b16 %v635, %v634
      %v727 = vpack.c.b16 %v637, %v636
      %v728 = vpack.c.b16 %v639, %v638
      %v729 = vpack.c.b16 %v641, %v640
      %v730 = vpack.c.b16 %v643, %v642
      %v731 = vpack.c.b16 %v645, %v644
      %v732 = vpack.c.b16 %v647, %v646
      %v733 = vpack.c.b16 %v649, %v648
      %v734 = vpack.c.b16 %v651, %v650
      %v735 = vpack.c.b16 %v653, %v652
      %v736 = vpack.c.b16 %v655, %v654
      %v737 = vpack.c.b16 %v657, %v656
      %v738 = vpack.c.b16 %v659, %v658
      %v739 = vpack.c.b16 %v661, %v660
      %v740 = vpack.c.b16 %v663, %v662
      %v741 = vpack.c.b16 %v665, %v664
      %v742 = vpack.c.b16 %v667, %v666
      %v743 = vpack.c.b16 %v669, %v668
      %v744 = vpack.c.b16 %v671, %v670
      %v745 = vpack.c.b16 %v673, %v672
      %v746 = vpack.c.b16 %v675, %v674
      %v747 = vpack.c.b16 %v677, %v676
      %v748 = vpack.c.b16 %v679, %v678
      %v749 = vpack.c.b16 %v681, %v680
      %v750 = vpack.c.b16 %v683, %v682
      %v751 = vpack.c.b16 %v685, %v684
      %v752 = vpack.c.b16 %v687, %v686
      %v753 = vpack.c.b16 %v689, %v688
      %818 = vmatprep.subr.bf16.mxu0 0
      %819 = vmatpush1.bf16.msra.mxu0 %v697
      %820 = vmatprep.subr.bf16.mxu0 0
      %821 = vmatpush1.bf16.msra.mxu0 %v696
      %822 = vmatprep.subr.bf16.mxu0 0
      %823 = vmatpush1.bf16.msra.mxu0 %v695
      %824 = vmatprep.subr.bf16.mxu0 0
      %825 = vmatpush1.bf16.msra.mxu0 %v694
      %826 = vmatprep.subr.bf16.mxu0 0
      %827 = vmatpush1.bf16.msra.mxu0 %v693
      %828 = vmatprep.subr.bf16.mxu0 0
      %829 = vmatpush1.bf16.msra.mxu0 %v692
      %830 = vmatprep.subr.bf16.mxu0 0
      %831 = vmatpush1.bf16.msra.mxu0 %v691
      %832 = vmatprep.subr.bf16.mxu0 0
      %833 = vmatpush1.bf16.msra.mxu0 %v690
      %834 = vmatprep.subr.bf16.mxu0 0
      %835 = vmatpush2.bf16.msra.mxu0 %v705
      %836 = vmatprep.subr.bf16.mxu0 0
      %837 = vmatpush2.bf16.msra.mxu0 %v704
      %838 = vmatprep.subr.bf16.mxu0 0
      %839 = vmatpush2.bf16.msra.mxu0 %v703
      %840 = vmatprep.subr.bf16.mxu0 0
      %841 = vmatpush2.bf16.msra.mxu0 %v702
      %842 = vmatprep.subr.bf16.mxu0 0
      %843 = vmatpush2.bf16.msra.mxu0 %v701
      %844 = vmatprep.subr.bf16.mxu0 0
      %845 = vmatpush2.bf16.msra.mxu0 %v700
      %846 = vmatprep.subr.bf16.mxu0 0
      %847 = vmatpush2.bf16.msra.mxu0 %v699
      %848 = vmatprep.subr.bf16.mxu0 0
      %849 = vmatpush2.bf16.msra.mxu0 %v698
      %850 = vmatprep.mubr.bf16.mxu0 %v407
      %851 = vmatmul.mubr.bf16.gmra.mxu0 %v399
      %v852 = vpop.f32.mrf.mxu0
      %v853 = vadd.f32 0.0, %v852
      %v854 = vpop.f32.mrf.mxu0
      %v855 = vpop.f32.mrf.mxu0
      %v856 = vpop.f32.mrf.mxu0
      %857 = vdwg.mxu0
      %858 = vmatprep.subr.bf16.mxu0 0
      %859 = vmatpush1.bf16.msra.mxu0 %v713
      %860 = vmatprep.subr.bf16.mxu0 0
      %861 = vmatpush1.bf16.msra.mxu0 %v712
      %862 = vmatprep.subr.bf16.mxu0 0
      %863 = vmatpush1.bf16.msra.mxu0 %v711
      %864 = vmatprep.subr.bf16.mxu0 0
      %865 = vmatpush1.bf16.msra.mxu0 %v710
      %866 = vmatprep.subr.bf16.mxu0 0
      %867 = vmatpush1.bf16.msra.mxu0 %v709
      %868 = vmatprep.subr.bf16.mxu0 0
      %869 = vmatpush1.bf16.msra.mxu0 %v708
      %870 = vmatprep.subr.bf16.mxu0 0
      %871 = vmatpush1.bf16.msra.mxu0 %v707
      %872 = vmatprep.subr.bf16.mxu0 0
      %873 = vmatpush1.bf16.msra.mxu0 %v706
      %874 = vmatprep.subr.bf16.mxu0 0
      %875 = vmatpush2.bf16.msra.mxu0 %v721
      %876 = vmatprep.subr.bf16.mxu0 0
      %877 = vmatpush2.bf16.msra.mxu0 %v720
      %878 = vmatprep.subr.bf16.mxu0 0
      %879 = vmatpush2.bf16.msra.mxu0 %v719
      %880 = vmatprep.subr.bf16.mxu0 0
      %881 = vmatpush2.bf16.msra.mxu0 %v718
      %882 = vmatprep.subr.bf16.mxu0 0
      %883 = vmatpush2.bf16.msra.mxu0 %v717
      %884 = vmatprep.subr.bf16.mxu0 0
      %885 = vmatpush2.bf16.msra.mxu0 %v716
      %886 = vmatprep.subr.bf16.mxu0 0
      %887 = vmatpush2.bf16.msra.mxu0 %v715
      %888 = vmatprep.subr.bf16.mxu0 0
      %889 = vmatpush2.bf16.msra.mxu0 %v714
      %890 = vmatprep.mubr.bf16.mxu0 %v408
      %891 = vmatmul.mubr.bf16.gmra.mxu0 %v406
      %v892 = vpop.f32.mrf.mxu0
      %v893 = vadd.f32 %v853, %v892
      %v894 = vpop.f32.mrf.mxu0
      %v895 = vpop.f32.mrf.mxu0
      %v896 = vpop.f32.mrf.mxu0
      %897 = vdwg.mxu0
      %898 = vmatprep.subr.bf16.mxu0 0
      %899 = vmatpush1.bf16.msra.mxu0 %v729
      %900 = vmatprep.subr.bf16.mxu0 0
      %901 = vmatpush1.bf16.msra.mxu0 %v728
      %902 = vmatprep.subr.bf16.mxu0 0
      %903 = vmatpush1.bf16.msra.mxu0 %v727
      %904 = vmatprep.subr.bf16.mxu0 0
      %905 = vmatpush1.bf16.msra.mxu0 %v726
      %906 = vmatprep.subr.bf16.mxu0 0
      %907 = vmatpush1.bf16.msra.mxu0 %v725
      %908 = vmatprep.subr.bf16.mxu0 0
      %909 = vmatpush1.bf16.msra.mxu0 %v724
      %910 = vmatprep.subr.bf16.mxu0 0
      %911 = vmatpush1.bf16.msra.mxu0 %v723
      %912 = vmatprep.subr.bf16.mxu0 0
      %913 = vmatpush1.bf16.msra.mxu0 %v722
      %914 = vmatprep.subr.bf16.mxu0 0
      %915 = vmatpush2.bf16.msra.mxu0 %v737
      %916 = vmatprep.subr.bf16.mxu0 0
      %917 = vmatpush2.bf16.msra.mxu0 %v736
      %918 = vmatprep.subr.bf16.mxu0 0
      %919 = vmatpush2.bf16.msra.mxu0 %v735
      %920 = vmatprep.subr.bf16.mxu0 0
      %921 = vmatpush2.bf16.msra.mxu0 %v734
      %922 = vmatprep.subr.bf16.mxu0 0
      %923 = vmatpush2.bf16.msra.mxu0 %v733
      %924 = vmatprep.subr.bf16.mxu0 0
      %925 = vmatpush2.bf16.msra.mxu0 %v732
      %926 = vmatprep.subr.bf16.mxu0 0
      %927 = vmatpush2.bf16.msra.mxu0 %v731
      %928 = vmatprep.subr.bf16.mxu0 0
      %929 = vmatpush2.bf16.msra.mxu0 %v730
      %930 = vmatprep.mubr.bf16.mxu0 %v424
      %931 = vmatmul.mubr.bf16.gmra.mxu0 %v416
      %v932 = vpop.f32.mrf.mxu0
      %v933 = vadd.f32 %v893, %v932
      %v934 = vpop.f32.mrf.mxu0
      %v935 = vpop.f32.mrf.mxu0
      %v936 = vpop.f32.mrf.mxu0
      %937 = vdwg.mxu0
      %938 = vmatprep.subr.bf16.mxu0 0
      %939 = vmatpush1.bf16.msra.mxu0 %v745
      %940 = vmatprep.subr.bf16.mxu0 0
      %941 = vmatpush1.bf16.msra.mxu0 %v744
      %942 = vmatprep.subr.bf16.mxu0 0
      %943 = vmatpush1.bf16.msra.mxu0 %v743
      %944 = vmatprep.subr.bf16.mxu0 0
      %945 = vmatpush1.bf16.msra.mxu0 %v742
      %946 = vmatprep.subr.bf16.mxu0 0
      %947 = vmatpush1.bf16.msra.mxu0 %v741
      %948 = vmatprep.subr.bf16.mxu0 0
      %949 = vmatpush1.bf16.msra.mxu0 %v740
      %950 = vmatprep.subr.bf16.mxu0 0
      %951 = vmatpush1.bf16.msra.mxu0 %v739
      %952 = vmatprep.subr.bf16.mxu0 0
      %953 = vmatpush1.bf16.msra.mxu0 %v738
      %954 = vmatprep.subr.bf16.mxu0 0
      %955 = vmatpush2.bf16.msra.mxu0 %v753
      %956 = vmatprep.subr.bf16.mxu0 0
      %957 = vmatpush2.bf16.msra.mxu0 %v752
      %958 = vmatprep.subr.bf16.mxu0 0
      %959 = vmatpush2.bf16.msra.mxu0 %v751
      %960 = vmatprep.subr.bf16.mxu0 0
      %961 = vmatpush2.bf16.msra.mxu0 %v750
      %962 = vmatprep.subr.bf16.mxu0 0
      %963 = vmatpush2.bf16.msra.mxu0 %v749
      %964 = vmatprep.subr.bf16.mxu0 0
      %965 = vmatpush2.bf16.msra.mxu0 %v748
      %966 = vmatprep.subr.bf16.mxu0 0
      %967 = vmatpush2.bf16.msra.mxu0 %v747
      %968 = vmatprep.subr.bf16.mxu0 0
      %969 = vmatpush2.bf16.msra.mxu0 %v746
      %970 = vmatprep.mubr.bf16.mxu0 %v425
      %971 = vmatmul.mubr.bf16.gmra.mxu0 %v423
      %v972 = vpop.f32.mrf.mxu0
      %v973 = vadd.f32 %v933, %v972
      %v974 = vpop.f32.mrf.mxu0
      %v975 = vpop.f32.mrf.mxu0
      %v976 = vpop.f32.mrf.mxu0
      %977 = vdwg.mxu0
      %v978 = vld [vmem:[#allocation2] sm:$0xf]
      %vm979 = vcmask 27648
      %v980 = vsel %vm979, %v973, -inf
      %981 = vmax.xlane.f32.xlu0 %v980
      %v982 = vpop.xlane.xlu0 %981
      %v983 = vmax.f32 %v978, %v982
      %v984 = vsub.f32 %v978, %v983
      %v985 = vmul.f32 %v984, 1.442695
      %v986 = vpow.pop %v985
      %988 = vset.pattern.permute.xlu0 0
      %989 = vperm.xlu0 %988, %v983
      %v990 = vpop.permute.xlu0 %989
      %v992 = vsub.f32 %v973, %v990
      %v993 = vmul.f32 %v992, 1.442695
      %v994 = vpow.pop %v993
      %v995 = vld [vmem:[#allocation3] sm:$0xf]
      %v996 = vmul.f32 %v986, %v995
      %v997 = vsel %vm979, %v994, 0.0
      %998 = vadd.xlane.f32.xlu0 %v997
      %v999 = vpop.xlane.xlu0 %998
      %v1000 = vadd.f32 %v996, %v999
      %vm1001 = vcmask 3072
      %1002 = vst.msk [vmem:[#allocation3] sm:$0xf] %vm1001, %v1000
      %v1003 = vld [vmem:[#allocation4] sm:$0xff]
      %v1004 = vld [vmem:[#allocation4 + $0x8] sm:$0xff]
      %v1005 = vld [vmem:[#allocation4 + $0x10] sm:$0xff]
      %v1006 = vld [vmem:[#allocation4 + $0x18] sm:$0xff]
      %1008 = vset.pattern.permute.xlu0 0
      %1009 = vperm.xlu0 %1008, %v986
      %v1010 = vpop.permute.xlu0 %1009
      %v1016 = vcombine.high %v1003, %v1003
      %v1017 = vcombine.high %v1004, %v1004
      %v1018 = vcombine.high %v1005, %v1005
      %v1019 = vcombine.high %v1006, %v1006
      %v1024 = vmul.f32 %v1010, %v1003
      %v1025 = vmul.f32 %v1010, %v1016
      %v1026 = vmul.f32 %v1010, %v1004
      %v1027 = vmul.f32 %v1010, %v1017
      %v1028 = vmul.f32 %v1010, %v1005
      %v1029 = vmul.f32 %v1010, %v1018
      %v1030 = vmul.f32 %v1010, %v1006
      %v1031 = vmul.f32 %v1010, %v1019
      %v1032 = vpack.c.bf16 %v994, %v994
      %v1033 = vld [vmem:[%s242] sm:$0xff]
      %v1034 = vld [vmem:[%s242 + $0x8] sm:$0xff]
      %v1037 = vcombine.high %v1033, %v1033
      %v1039 = vunpack.c.l.s4 1983009808
      %v1040 = vunpack.c.0.s8 %v1039
      %v1041 = vlaneseq
      %v1042 = vshrl.u32 %v1041, 7
      %v1043 = vsub.s32 %v1040, %v1042
      %v1044 = vrot.slane %v1033, %v1043
      %v1046 = vunpack.c.l.s4 1983009808
      %v1047 = vunpack.c.0.s8 %v1046
      %v1048 = vlaneseq
      %v1049 = vshrl.u32 %v1048, 7
      %v1050 = vsub.s32 %v1047, %v1049
      %v1051 = vrot.slane %v1037, %v1050
      %v1052 = vcombine.high %v1044, %v1044
      %v1053 = vcombine.high %v1051, %v1051
      %v1054 = vcombine.high %v1034, %v1034
      %v1056 = vunpack.c.l.s4 1983009808
      %v1057 = vunpack.c.0.s8 %v1056
      %v1058 = vlaneseq
      %v1059 = vshrl.u32 %v1058, 7
      %v1060 = vsub.s32 %v1057, %v1059
      %v1061 = vrot.slane %v1034, %v1060
      %v1063 = vunpack.c.l.s4 1983009808
      %v1064 = vunpack.c.0.s8 %v1063
      %v1065 = vlaneseq
      %v1066 = vshrl.u32 %v1065, 7
      %v1067 = vsub.s32 %v1064, %v1066
      %v1068 = vrot.slane %v1054, %v1067
      %v1069 = vcombine.high %v1061, %v1061
      %v1070 = vcombine.high %v1068, %v1068
      %vm1071 = vcmask 31744
      %v1073 = vsel %vm1071, %v1032, 0
      %vm1075 = vcmask 1041408
      %v1077 = vsel %vm1075, %v1044, 0
      %v1080 = vsel %vm1075, %v1052, 0
      %v1083 = vsel %vm1075, %v1051, 0
      %v1086 = vsel %vm1075, %v1053, 0
      %v1089 = vsel %vm1075, %v1061, 0
      %v1092 = vsel %vm1075, %v1069, 0
      %v1095 = vsel %vm1075, %v1068, 0
      %v1098 = vsel %vm1075, %v1070, 0
      %1100 = vmatprep.subr.bf16.mxu0 0
      %1101 = vmatpush1.bf16.msra.mxu0 0
      %1102 = vmatprep.subr.bf16.mxu0 0
      %1103 = vmatpush1.bf16.msra.mxu0 0
      %1104 = vmatprep.subr.bf16.mxu0 0
      %1105 = vmatpush1.bf16.msra.mxu0 0
      %1106 = vmatprep.subr.bf16.mxu0 0
      %1107 = vmatpush1.bf16.msra.mxu0 0
      %1108 = vmatprep.subr.bf16.mxu0 0
      %1109 = vmatpush1.bf16.msra.mxu0 0
      %1110 = vmatprep.subr.bf16.mxu0 0
      %1111 = vmatpush1.bf16.msra.mxu0 0
      %1112 = vmatprep.subr.bf16.mxu0 0
      %1113 = vmatpush1.bf16.msra.mxu0 0
      %1114 = vmatprep.subr.bf16.mxu0 %v1080
      %1115 = vmatpush1.bf16.msra.mxu0 %v1077
      %1116 = vmatprep.subr.bf16.mxu0 0
      %1117 = vmatpush2.bf16.msra.mxu0 0
      %1118 = vmatprep.subr.bf16.mxu0 0
      %1119 = vmatpush2.bf16.msra.mxu0 0
      %1120 = vmatprep.subr.bf16.mxu0 0
      %1121 = vmatpush2.bf16.msra.mxu0 0
      %1122 = vmatprep.subr.bf16.mxu0 0
      %1123 = vmatpush2.bf16.msra.mxu0 0
      %1124 = vmatprep.subr.bf16.mxu0 0
      %1125 = vmatpush2.bf16.msra.mxu0 0
      %1126 = vmatprep.subr.bf16.mxu0 0
      %1127 = vmatpush2.bf16.msra.mxu0 0
      %1128 = vmatprep.subr.bf16.mxu0 0
      %1129 = vmatpush2.bf16.msra.mxu0 0
      %1130 = vmatprep.subr.bf16.mxu0 0
      %1131 = vmatpush2.bf16.msra.mxu0 0
      %1132 = vmatprep.mubr.bf16.mxu0 0
      %1133 = vmatmul.mubr.bf16.gmra.mxu0 %v1073
      %v1134 = vpop.f32.mrf.mxu0
      %v1135 = vadd.f32 0.0, %v1134
      %v1136 = vpop.f32.mrf.mxu0
      %v1137 = vadd.f32 0.0, %v1136
      %v1138 = vpop.f32.mrf.mxu0
      %v1139 = vpop.f32.mrf.mxu0
      %1140 = vdwg.mxu0
      %1141 = vmatprep.subr.bf16.mxu0 0
      %1142 = vmatpush1.bf16.msra.mxu0 0
      %1143 = vmatprep.subr.bf16.mxu0 0
      %1144 = vmatpush1.bf16.msra.mxu0 0
      %1145 = vmatprep.subr.bf16.mxu0 0
      %1146 = vmatpush1.bf16.msra.mxu0 0
      %1147 = vmatprep.subr.bf16.mxu0 0
      %1148 = vmatpush1.bf16.msra.mxu0 0
      %1149 = vmatprep.subr.bf16.mxu0 0
      %1150 = vmatpush1.bf16.msra.mxu0 0
      %1151 = vmatprep.subr.bf16.mxu0 0
      %1152 = vmatpush1.bf16.msra.mxu0 0
      %1153 = vmatprep.subr.bf16.mxu0 0
      %1154 = vmatpush1.bf16.msra.mxu0 0
      %1155 = vmatprep.subr.bf16.mxu0 %v1086
      %1156 = vmatpush1.bf16.msra.mxu0 %v1083
      %1157 = vmatprep.subr.bf16.mxu0 0
      %1158 = vmatpush2.bf16.msra.mxu0 0
      %1159 = vmatprep.subr.bf16.mxu0 0
      %1160 = vmatpush2.bf16.msra.mxu0 0
      %1161 = vmatprep.subr.bf16.mxu0 0
      %1162 = vmatpush2.bf16.msra.mxu0 0
      %1163 = vmatprep.subr.bf16.mxu0 0
      %1164 = vmatpush2.bf16.msra.mxu0 0
      %1165 = vmatprep.subr.bf16.mxu0 0
      %1166 = vmatpush2.bf16.msra.mxu0 0
      %1167 = vmatprep.subr.bf16.mxu0 0
      %1168 = vmatpush2.bf16.msra.mxu0 0
      %1169 = vmatprep.subr.bf16.mxu0 0
      %1170 = vmatpush2.bf16.msra.mxu0 0
      %1171 = vmatprep.subr.bf16.mxu0 0
      %1172 = vmatpush2.bf16.msra.mxu0 0
      %1173 = vmatprep.mubr.bf16.mxu0 0
      %1174 = vmatmul.mubr.bf16.gmra.mxu0 %v1073
      %v1175 = vpop.f32.mrf.mxu0
      %v1176 = vadd.f32 0.0, %v1175
      %v1177 = vpop.f32.mrf.mxu0
      %v1178 = vadd.f32 0.0, %v1177
      %v1179 = vpop.f32.mrf.mxu0
      %v1180 = vpop.f32.mrf.mxu0
      %1181 = vdwg.mxu0
      %1182 = vmatprep.subr.bf16.mxu0 0
      %1183 = vmatpush1.bf16.msra.mxu0 0
      %1184 = vmatprep.subr.bf16.mxu0 0
      %1185 = vmatpush1.bf16.msra.mxu0 0
      %1186 = vmatprep.subr.bf16.mxu0 0
      %1187 = vmatpush1.bf16.msra.mxu0 0
      %1188 = vmatprep.subr.bf16.mxu0 0
      %1189 = vmatpush1.bf16.msra.mxu0 0
      %1190 = vmatprep.subr.bf16.mxu0 0
      %1191 = vmatpush1.bf16.msra.mxu0 0
      %1192 = vmatprep.subr.bf16.mxu0 0
      %1193 = vmatpush1.bf16.msra.mxu0 0
      %1194 = vmatprep.subr.bf16.mxu0 0
      %1195 = vmatpush1.bf16.msra.mxu0 0
      %1196 = vmatprep.subr.bf16.mxu0 %v1092
      %1197 = vmatpush1.bf16.msra.mxu0 %v1089
      %1198 = vmatprep.subr.bf16.mxu0 0
      %1199 = vmatpush2.bf16.msra.mxu0 0
      %1200 = vmatprep.subr.bf16.mxu0 0
      %1201 = vmatpush2.bf16.msra.mxu0 0
      %1202 = vmatprep.subr.bf16.mxu0 0
      %1203 = vmatpush2.bf16.msra.mxu0 0
      %1204 = vmatprep.subr.bf16.mxu0 0
      %1205 = vmatpush2.bf16.msra.mxu0 0
      %1206 = vmatprep.subr.bf16.mxu0 0
      %1207 = vmatpush2.bf16.msra.mxu0 0
      %1208 = vmatprep.subr.bf16.mxu0 0
      %1209 = vmatpush2.bf16.msra.mxu0 0
      %1210 = vmatprep.subr.bf16.mxu0 0
      %1211 = vmatpush2.bf16.msra.mxu0 0
      %1212 = vmatprep.subr.bf16.mxu0 0
      %1213 = vmatpush2.bf16.msra.mxu0 0
      %1214 = vmatprep.mubr.bf16.mxu0 0
      %1215 = vmatmul.mubr.bf16.gmra.mxu0 %v1073
      %v1216 = vpop.f32.mrf.mxu0
      %v1217 = vadd.f32 0.0, %v1216
      %v1218 = vpop.f32.mrf.mxu0
      %v1219 = vadd.f32 0.0, %v1218
      %v1220 = vpop.f32.mrf.mxu0
      %v1221 = vpop.f32.mrf.mxu0
      %1222 = vdwg.mxu0
      %1223 = vmatprep.subr.bf16.mxu0 0
      %1224 = vmatpush1.bf16.msra.mxu0 0
      %1225 = vmatprep.subr.bf16.mxu0 0
      %1226 = vmatpush1.bf16.msra.mxu0 0
      %1227 = vmatprep.subr.bf16.mxu0 0
      %1228 = vmatpush1.bf16.msra.mxu0 0
      %1229 = vmatprep.subr.bf16.mxu0 0
      %1230 = vmatpush1.bf16.msra.mxu0 0
      %1231 = vmatprep.subr.bf16.mxu0 0
      %1232 = vmatpush1.bf16.msra.mxu0 0
      %1233 = vmatprep.subr.bf16.mxu0 0
      %1234 = vmatpush1.bf16.msra.mxu0 0
      %1235 = vmatprep.subr.bf16.mxu0 0
      %1236 = vmatpush1.bf16.msra.mxu0 0
      %1237 = vmatprep.subr.bf16.mxu0 %v1098
      %1238 = vmatpush1.bf16.msra.mxu0 %v1095
      %1239 = vmatprep.subr.bf16.mxu0 0
      %1240 = vmatpush2.bf16.msra.mxu0 0
      %1241 = vmatprep.subr.bf16.mxu0 0
      %1242 = vmatpush2.bf16.msra.mxu0 0
      %1243 = vmatprep.subr.bf16.mxu0 0
      %1244 = vmatpush2.bf16.msra.mxu0 0
      %1245 = vmatprep.subr.bf16.mxu0 0
      %1246 = vmatpush2.bf16.msra.mxu0 0
      %1247 = vmatprep.subr.bf16.mxu0 0
      %1248 = vmatpush2.bf16.msra.mxu0 0
      %1249 = vmatprep.subr.bf16.mxu0 0
      %1250 = vmatpush2.bf16.msra.mxu0 0
      %1251 = vmatprep.subr.bf16.mxu0 0
      %1252 = vmatpush2.bf16.msra.mxu0 0
      %1253 = vmatprep.subr.bf16.mxu0 0
      %1254 = vmatpush2.bf16.msra.mxu0 0
      %1255 = vmatprep.mubr.bf16.mxu0 0
      %1256 = vmatmul.mubr.bf16.gmra.mxu0 %v1073
      %v1257 = vpop.f32.mrf.mxu0
      %v1258 = vadd.f32 0.0, %v1257
      %v1259 = vpop.f32.mrf.mxu0
      %v1260 = vadd.f32 0.0, %v1259
      %v1261 = vpop.f32.mrf.mxu0
      %v1262 = vpop.f32.mrf.mxu0
      %1263 = vdwg.mxu0
      %v1264 = vadd.f32 %v1024, %v1135
      %v1265 = vadd.f32 %v1025, %v1137
      %v1266 = vadd.f32 %v1026, %v1176
      %v1267 = vadd.f32 %v1027, %v1178
      %v1268 = vadd.f32 %v1028, %v1217
      %v1269 = vadd.f32 %v1029, %v1219
      %v1270 = vadd.f32 %v1030, %v1258
      %v1271 = vadd.f32 %v1031, %v1260
      %v1280 = vcombine.low %v1264, %v1265
      %v1281 = vcombine.low %v1266, %v1267
      %v1282 = vcombine.low %v1268, %v1269
      %v1283 = vcombine.low %v1270, %v1271
      %1288 = vst [vmem:[#allocation4] sm:$0xff] %v1280
      %1289 = vst [vmem:[#allocation4 + $0x8] sm:$0xff] %v1281
      %1290 = vst [vmem:[#allocation4 + $0x10] sm:$0xff] %v1282
      %1291 = vst [vmem:[#allocation4 + $0x18] sm:$0xff] %v1283
      %1292 = vst.msk [vmem:[#allocation2] sm:$0xf] %vm1001, %v983
      // Predicated region
      $region37: #{pmpa1_ave_forward.4} parent=31 // pred_check
        %p1293 = pneg %p249
      $region38: #{pmpa1_ave_forward.4} parent=31 // pred_check_branch
        %1295 = sbr.rel (%p1293) target = $region40
      $region39: #{pmpa1_ave_forward.4} parent=31 // pred_region
        %v1296 = vld [vmem:[#allocation4] sm:$0xff]
        %v1297 = vld [vmem:[#allocation4 + $0x8] sm:$0xff]
        %v1298 = vld [vmem:[#allocation4 + $0x10] sm:$0xff]
        %v1299 = vld [vmem:[#allocation4 + $0x18] sm:$0xff]
        %v1300 = vld [vmem:[#allocation3] sm:$0xf]
        %v1301 = vrcp.pop %v1300
        %1303 = vset.pattern.permute.xlu0 0
        %1304 = vperm.xlu0 %1303, %v1301
        %v1305 = vpop.permute.xlu0 %1304
        %v1307 = vunpack.c.l.s4 839922192
        %v1308 = vunpack.c.0.s8 %v1307
        %v1309 = vlaneseq
        %v1310 = vshrl.u32 %v1309, 7
        %v1311 = vsub.s32 %v1308, %v1310
        %v1312 = vrot.slane %v1305, %v1311
        %v1314 = vmul.f32 %v1296, %v1312
        %v1315 = vmul.f32 %v1297, %v1312
        %v1316 = vmul.f32 %v1298, %v1312
        %v1317 = vmul.f32 %v1299, %v1312
        %1318 = vst [vmem:[%s247] sm:$0xff] %v1314
        %1319 = vst [vmem:[%s247 + $0x8] sm:$0xff] %v1315
        %1320 = vst [vmem:[%s247 + $0x10] sm:$0xff] %v1316
        %1321 = vst [vmem:[%s247 + $0x18] sm:$0xff] %v1317
      $region40: #{pmpa1_ave_forward.4} parent=31 // pred_fallthru
        _
      %p1322 = scmp.lt.s32.totalorder %s18, 1
      %s1323 = scalar_select %p1322, %s18, 1
      %s1324 = smul.addr %s1323, 8
      %s1325 = smul.addr %s1324, 4
      %s1326 = scalar_lea.vmem %s3, %s1325
      // Predicated region
      $region41: #{pmpa1_ave_forward.4} parent=31 // pred_check
        %p1327 = pneg %p126
      $region42: #{pmpa1_ave_forward.4} parent=31 // pred_check_branch
        %1329 = sbr.rel (%p1327) target = $region44
      $region43: #{pmpa1_ave_forward.4} parent=31 // pred_region
        _
      $region44: #{pmpa1_ave_forward.4} parent=31 // pred_fallthru
        _
    $region32: #{pmpa1_ave_forward.4} parent=5 // pred_fallthru
      _
    %p1330 = scmp.le.s32.totalorder 2, %s9
    // Predicated region
    $region45: #{pmpa1_ave_forward.4} parent=5 // pred_check
      %p1331 = pneg %p1330
    $region46: #{pmpa1_ave_forward.4} parent=5 // pred_check_branch
      %1333 = sbr.rel (%p1331) target = $region48
    $region47: #{pmpa1_ave_forward.4} parent=5 // pred_region
      %s1334 = ssub.s32 %s9, 2
      // Predicated region
      $region49: #{pmpa1_ave_forward.4} parent=47 // pred_check
        %p1335 = pneg %p132
      $region50: #{pmpa1_ave_forward.4} parent=47 // pred_check_branch
        %1337 = sbr.rel (%p1335) target = $region52
      $region51: #{pmpa1_ave_forward.4} parent=47 // pred_region
        %p1338 = scmp.lt.s32.totalorder %s20, 1
        %s1339 = scalar_select %p1338, %s20, 1
        %s1340 = smul.addr %s1339, 8
        %s1341 = smul.addr %s1340, 4
        %s1342 = scalar_lea.vmem %s3, %s1341
      $region52: #{pmpa1_ave_forward.4} parent=47 // pred_fallthru
        _
    $region48: #{pmpa1_ave_forward.4} parent=5 // pred_fallthru
      _
  $region6: #{pmpa1_ave_forward.4} parent=0 // loop_footer
    %s13 = sadd.s32 1, %s9
  $region7: #{pmpa1_ave_forward.4} parent=0 // loop_footer_branch
    %8 = sbr.rel target = $region3
  $region8: #{pmpa1_ave_forward.4} parent=0 // loop_exit
    _

// kernel: pmpa1_ave_forward.5
$region0: #{pmpa1_ave_forward.5}
  #allocation0 [shape = 'u32[]', space=smem, size = 0x4, offset = 0x4, fixed_abs, tag = 'smem constant byte address 0x4 - core index']
  #allocation1 [shape = 'u32[144,128]{1,0:T(1,128)}', space=vmem, size = 0x12000, scoped, tag = 'internal scratch']
  %s0 = inlined_call_operand.vmem [shape: f32[2,4,1024], index: 0, kind: input, shape index: {}]
  %s1 = inlined_call_operand.vmem [shape: f32[2,4,1024], index: 1, kind: input, shape index: {}]
  %s2 = inlined_call_operand.vmem [shape: f32[4,4], index: 2, kind: input, shape index: {}]
  %s3 = inlined_call_operand.vmem [shape: f32[2,4,1024], index: 3, kind: output, shape index: {}]
  %s4 = sld [smem:[#allocation0]]
  $region45: #{pmpa1_ave_forward.5} parent=0
    _
  %s6 = ssub.s32 1, %s4
  %s7 = scalar_select 0, %s6, %s4
  loop: start=0, step=1, limit=4
  $region2: #{pmpa1_ave_forward.5} parent=0 // loop_pre_header
    _
  $region3: #{pmpa1_ave_forward.5} parent=0 // loop_header
    %s9 = sphi 0, %s13
    %p10 = scmp.ge.s32.totalorder %s9, 4
    %s16 = sphi 0, %s28
    %s17 = sphi 0, %s24
    %s18 = sphi 0, %s16
    %s19 = sphi 0, %s17
    %s20 = sphi 0, %s18
    %s21 = sphi 0, %s19
    %s33 = sphi 0, %s35
    %s36 = sphi 0, %s33
    %s37 = sphi 0, %s36
    %s53 = sphi 0, %s37
    %s61 = sphi 0, %s63
    %s64 = sphi 0, %s61
    %s65 = sphi 0, %s64
    %s81 = sphi 0, %s65
    %s85 = sphi 0, %s85
    %s87 = sphi 0, %s85
    %s88 = sphi 0, %s87
    %s102 = sphi 0, %s88
    %s110 = sphi 0, %s112
    %s113 = sphi 0, %s110
    %s114 = sphi 0, %s113
    %s130 = sphi 0, %s114
  $region4: #{pmpa1_ave_forward.5} parent=0 // loop_header_branch
    %12 = sbr.rel (%p10) target = $region8
  $region5: #{pmpa1_ave_forward.5} parent=0 // loop_body
    %s14 = ssub.s32 %s9, 1
    %s15 = ssub.s32 %s9, 2
    %s22 = sadd.s32 1, %s17
    %p23 = scmp.ge.s32.totalorder %s22, 1
    %s24 = scalar_select %p23, 0, %s22
    %s25 = sadd.s32 1, %s16
    %s26 = scalar_select %p23, %s25, %s16
    %p27 = scmp.ge.s32.totalorder %s26, 2
    %s28 = scalar_select %p27, 0, %s26
    %s29 = ssub.s32 %s16, %s28
    %s30 = ssub.s32 %s17, %s24
    %s31 = sor.u32 %s29, %s30
    %p32 = scmp.eq.s32.totalorder %s31, 0
    %s34 = sadd.s32 %s33, 1
    %s35 = scalar_select %p32, %s33, %s34
    %p38 = pneg %p32
    %p39 = scmp.eq.s32.totalorder %s9, 1
    %p40 = por %p38, %p39
    %p41 = scmp.ne.s32.totalorder %s33, %s36
    %p42 = scmp.eq.s32.totalorder %s9, 0
    %p43 = por %p41, %p42
    %p44 = scmp.ne.s32.totalorder %s33, %s36
    %p45 = scmp.eq.s32.totalorder %s14, 1
    %p46 = por %p44, %p45
    %p47 = scmp.ne.s32.totalorder %s36, %s37
    %p48 = scmp.eq.s32.totalorder %s14, 0
    %p49 = por %p47, %p48
    %p50 = scmp.ne.s32.totalorder %s36, %s37
    %p51 = scmp.eq.s32.totalorder %s15, 1
    %p52 = por %p50, %p51
    %p54 = scmp.ne.s32.totalorder %s37, %s53
    %p55 = scmp.eq.s32.totalorder %s15, 0
    %p56 = por %p54, %p55
    %s57 = ssub.s32 %s16, %s28
    %s58 = ssub.s32 %s17, %s24
    %s59 = sor.u32 %s57, %s58
    %p60 = scmp.eq.s32.totalorder %s59, 0
    %s62 = sadd.s32 %s61, 1
    %s63 = scalar_select %p60, %s61, %s62
    %p66 = pneg %p60
    %p67 = scmp.eq.s32.totalorder %s9, 1
    %p68 = por %p66, %p67
    %p69 = scmp.ne.s32.totalorder %s61, %s64
    %p70 = scmp.eq.s32.totalorder %s9, 0
    %p71 = por %p69, %p70
    %p72 = scmp.ne.s32.totalorder %s61, %s64
    %p73 = scmp.eq.s32.totalorder %s14, 1
    %p74 = por %p72, %p73
    %p75 = scmp.ne.s32.totalorder %s64, %s65
    %p76 = scmp.eq.s32.totalorder %s14, 0
    %p77 = por %p75, %p76
    %p78 = scmp.ne.s32.totalorder %s64, %s65
    %p79 = scmp.eq.s32.totalorder %s15, 1
    %p80 = por %p78, %p79
    %p82 = scmp.ne.s32.totalorder %s65, %s81
    %p83 = scmp.eq.s32.totalorder %s15, 0
    %p84 = por %p82, %p83
    %s86 = sadd.s32 %s85, 1
    %p89 = scmp.eq.s32.totalorder %s9, 1
    %p90 = scmp.ne.s32.totalorder %s85, %s87
    %p91 = scmp.eq.s32.totalorder %s9, 0
    %p92 = por %p90, %p91
    %p93 = scmp.ne.s32.totalorder %s85, %s87
    %p94 = scmp.eq.s32.totalorder %s14, 1
    %p95 = por %p93, %p94
    %p96 = scmp.ne.s32.totalorder %s87, %s88
    %p97 = scmp.eq.s32.totalorder %s14, 0
    %p98 = por %p96, %p97
    %p99 = scmp.ne.s32.totalorder %s87, %s88
    %p100 = scmp.eq.s32.totalorder %s15, 1
    %p101 = por %p99, %p100
    %p103 = scmp.ne.s32.totalorder %s88, %s102
    %p104 = scmp.eq.s32.totalorder %s15, 0
    %p105 = por %p103, %p104
    %s106 = ssub.s32 %s16, %s28
    %s107 = ssub.s32 %s17, %s24
    %s108 = sor.u32 %s106, %s107
    %p109 = scmp.eq.s32.totalorder %s108, 0
    %s111 = sadd.s32 %s110, 1
    %s112 = scalar_select %p109, %s110, %s111
    %p115 = pneg %p109
    %p116 = scmp.eq.s32.totalorder %s9, 1
    %p117 = por %p115, %p116
    %p118 = scmp.ne.s32.totalorder %s110, %s113
    %p119 = scmp.eq.s32.totalorder %s9, 0
    %p120 = por %p118, %p119
    %p121 = scmp.ne.s32.totalorder %s110, %s113
    %p122 = scmp.eq.s32.totalorder %s14, 1
    %p123 = por %p121, %p122
    %p124 = scmp.ne.s32.totalorder %s113, %s114
    %p125 = scmp.eq.s32.totalorder %s14, 0
    %p126 = por %p124, %p125
    %p127 = scmp.ne.s32.totalorder %s113, %s114
    %p128 = scmp.eq.s32.totalorder %s15, 1
    %p129 = por %p127, %p128
    %p131 = scmp.ne.s32.totalorder %s114, %s130
    %p132 = scmp.eq.s32.totalorder %s15, 0
    %p133 = por %p131, %p132
    %p134 = scmp.le.s32.totalorder 1, %s9
    %p135 = scmp.lt.s32.totalorder %s9, 3
    %p136 = pnand %p134, %p135
    %p137 = pneg %p136
    // Predicated region
    $region9: #{pmpa1_ave_forward.5} parent=5 // pred_check
      _
    $region10: #{pmpa1_ave_forward.5} parent=5 // pred_check_branch
      %139 = sbr.rel (%p136) target = $region12
    $region11: #{pmpa1_ave_forward.5} parent=5 // pred_region
      %s140 = ssub.s32 %s9, 1
      // Predicated region
      $region13: #{pmpa1_ave_forward.5} parent=11 // pred_check
        %p141 = pneg %p98
      $region14: #{pmpa1_ave_forward.5} parent=11 // pred_check_branch
        %143 = sbr.rel (%p141) target = $region16
      $region15: #{pmpa1_ave_forward.5} parent=11 // pred_region
        _
      $region16: #{pmpa1_ave_forward.5} parent=11 // pred_fallthru
        _
    $region12: #{pmpa1_ave_forward.5} parent=5 // pred_fallthru
      _
    %p144 = scmp.lt.s32.totalorder %s9, 2
    // Predicated region
    $region17: #{pmpa1_ave_forward.5} parent=5 // pred_check
      %p145 = pneg %p144
    $region18: #{pmpa1_ave_forward.5} parent=5 // pred_check_branch
      %147 = sbr.rel (%p145) target = $region20
    $region19: #{pmpa1_ave_forward.5} parent=5 // pred_region
      // Predicated region
      $region21: #{pmpa1_ave_forward.5} parent=19 // pred_check
        %p148 = pneg %p43
      $region22: #{pmpa1_ave_forward.5} parent=19 // pred_check_branch
        %150 = sbr.rel (%p148) target = $region24
      $region23: #{pmpa1_ave_forward.5} parent=19 // pred_region
        %s151 = smul.u32 8, %s17
        %p152 = scmp.lt.s32.totalorder %s16, 1
        %s153 = scalar_select %p152, %s16, 1
        %p154 = scmp.lt.s32.totalorder %s151, 7
        %s155 = scalar_select %p154, %s151, 7
        %s156 = smul.addr %s153, 8
        %s157 = sadd.s32 %s155, %s156
        %s158 = smul.addr %s157, 4
        %s159 = scalar_lea.vmem %s0, %s158
        %s160 = smul.u32 8, %s17
      $region24: #{pmpa1_ave_forward.5} parent=19 // pred_fallthru
        _
      // Predicated region
      $region25: #{pmpa1_ave_forward.5} parent=19 // pred_check
        %p161 = pneg %p71
      $region26: #{pmpa1_ave_forward.5} parent=19 // pred_check_branch
        %163 = sbr.rel (%p161) target = $region28
      $region27: #{pmpa1_ave_forward.5} parent=19 // pred_region
        %s164 = smul.u32 8, %s17
        %p165 = scmp.lt.s32.totalorder %s16, 1
        %s166 = scalar_select %p165, %s16, 1
        %p167 = scmp.lt.s32.totalorder %s164, 7
        %s168 = scalar_select %p167, %s164, 7
        %s169 = smul.addr %s166, 8
        %s170 = sadd.s32 %s168, %s169
        %s171 = smul.addr %s170, 4
        %s172 = scalar_lea.vmem %s1, %s171
        %s173 = smul.u32 8, %s17
      $region28: #{pmpa1_ave_forward.5} parent=19 // pred_fallthru
        _
    $region20: #{pmpa1_ave_forward.5} parent=5 // pred_fallthru
      _
    %p174 = scmp.le.s32.totalorder 1, %s9
    %p175 = scmp.lt.s32.totalorder %s9, 3
    %p176 = pnand %p174, %p175
    %p177 = pneg %p176
    // Predicated region
    $region29: #{pmpa1_ave_forward.5} parent=5 // pred_check
      _
    $region30: #{pmpa1_ave_forward.5} parent=5 // pred_check_branch
      %179 = sbr.rel (%p176) target = $region32
    $region31: #{pmpa1_ave_forward.5} parent=5 // pred_region
      %s180 = ssub.s32 %s9, 1
      %s181 = smul.u32 8, %s19
      %p182 = scmp.lt.s32.totalorder %s18, 1
      %s183 = scalar_select %p182, %s18, 1
      %p184 = scmp.lt.s32.totalorder %s181, 7
      %s185 = scalar_select %p184, %s181, 7
      %s186 = smul.addr %s183, 8
      %s187 = sadd.s32 %s185, %s186
      %s188 = smul.addr %s187, 4
      %s189 = scalar_lea.vmem %s0, %s188
      %p190 = pneg %p49
      %p191 = pneg %p46
      %s192 = smul.u32 8, %s19
      %p193 = scmp.lt.s32.totalorder %s18, 1
      %s194 = scalar_select %p193, %s18, 1
      %p195 = scmp.lt.s32.totalorder %s192, 7
      %s196 = scalar_select %p195, %s192, 7
      %s197 = smul.addr %s194, 8
      %s198 = sadd.s32 %s196, %s197
      %s199 = smul.addr %s198, 4
      %s200 = scalar_lea.vmem %s1, %s199
      %p201 = pneg %p77
      %p202 = pneg %p74
      %p203 = pneg %p98
      %p204 = pneg %p95
      %p205 = pneg %p126
      %p206 = pneg %p123
      %s207 = smul.u32 8, %s19
      %p208 = scmp.lt.s32.totalorder %s18, 1
      %s209 = scalar_select %p208, %s18, 1
      %p210 = scmp.lt.s32.totalorder %s207, 7
      %s211 = scalar_select %p210, %s207, 7
      %s212 = smul.addr %s209, 8
      %s213 = sadd.s32 %s211, %s212
      %s214 = smul.addr %s213, 4
      %s215 = scalar_lea.vmem %s3, %s214
      %s216 = smul.u32 8, %s19
      %p217 = scmp.lt.s32.totalorder %s18, 1
      %s218 = scalar_select %p217, %s18, 1
      %p219 = scmp.lt.s32.totalorder %s216, 7
      %s220 = scalar_select %p219, %s216, 7
      %s221 = smul.addr %s218, 8
      %s222 = sadd.s32 %s220, %s221
      %s223 = smul.addr %s222, 4
      %s224 = scalar_lea.vmem %s0, %s223
      %s225 = smul.u32 8, %s19
      %s226 = smul.u32 8, %s19
      %p227 = scmp.lt.s32.totalorder %s18, 1
      %s228 = scalar_select %p227, %s18, 1
      %p229 = scmp.lt.s32.totalorder %s226, 7
      %s230 = scalar_select %p229, %s226, 7
      %s231 = smul.addr %s228, 8
      %s232 = sadd.s32 %s230, %s231
      %s233 = smul.addr %s232, 4
      %s234 = scalar_lea.vmem %s1, %s233
      %s235 = smul.u32 8, %s19
      %s236 = smul.u32 8, %s19
      %p237 = scmp.lt.s32.totalorder %s18, 1
      %s238 = scalar_select %p237, %s18, 1
      %p239 = scmp.lt.s32.totalorder %s236, 7
      %s240 = scalar_select %p239, %s236, 7
      %s241 = smul.addr %s238, 8
      %s242 = sadd.s32 %s240, %s241
      %s243 = smul.addr %s242, 4
      %s244 = scalar_lea.vmem %s3, %s243
      %s245 = smul.u32 8, %s19
      %v246 = vld [vmem:[%s224] sm:$0xff]
      %v247 = vld [vmem:[%s224 + $0x8] sm:$0xff]
      %v248 = vld [vmem:[%s224 + $0x10] sm:$0xff]
      %v249 = vld [vmem:[%s224 + $0x18] sm:$0xff]
      %v250 = vld [vmem:[%s234] sm:$0xff]
      %v251 = vld [vmem:[%s234 + $0x8] sm:$0xff]
      %v252 = vld [vmem:[%s234 + $0x10] sm:$0xff]
      %v253 = vld [vmem:[%s234 + $0x18] sm:$0xff]
      %v254 = vadd.f32 %v246, %v250
      %v255 = vadd.f32 %v247, %v251
      %v256 = vadd.f32 %v248, %v252
      %v257 = vadd.f32 %v249, %v253
      %v258 = vld [vmem:[%s2] sm:$0xf]
      %v263 = vcombine.high %v254, %v254
      %v264 = vcombine.high %v255, %v255
      %v265 = vcombine.high %v256, %v256
      %v266 = vcombine.high %v257, %v257
      %vm267 = vcmask 31744
      %v269 = vsel %vm267, %v258, 0
      %vm271 = vcmask 1043456
      %v272 = vsel %vm271, %v254, 0
      %v274 = vsel %vm271, %v263, 0
      %v276 = vsel %vm271, %v255, 0
      %v278 = vsel %vm271, %v264, 0
      %v280 = vsel %vm271, %v256, 0
      %v282 = vsel %vm271, %v265, 0
      %v284 = vsel %vm271, %v257, 0
      %v286 = vsel %vm271, %v266, 0
      %288 = vmatprep.subr.mxu0 0.0
      %289 = vmatpush1.msra.mxu0 0.0
      %290 = vmatprep.subr.mxu0 0.0
      %291 = vmatpush1.msra.mxu0 0.0
      %292 = vmatprep.subr.mxu0 0.0
      %293 = vmatpush1.msra.mxu0 0.0
      %294 = vmatprep.subr.mxu0 0.0
      %295 = vmatpush1.msra.mxu0 0.0
      %296 = vmatprep.subr.mxu0 0.0
      %297 = vmatpush1.msra.mxu0 0.0
      %298 = vmatprep.subr.mxu0 0.0
      %299 = vmatpush1.msra.mxu0 0.0
      %300 = vmatprep.subr.mxu0 0.0
      %301 = vmatpush1.msra.mxu0 0.0
      %302 = vmatprep.subr.mxu0 0.0
      %303 = vmatpush1.msra.mxu0 0.0
      %304 = vmatprep.subr.mxu0 0.0
      %305 = vmatpush1.msra.mxu0 0.0
      %306 = vmatprep.subr.mxu0 0.0
      %307 = vmatpush1.msra.mxu0 0.0
      %308 = vmatprep.subr.mxu0 0.0
      %309 = vmatpush1.msra.mxu0 0.0
      %310 = vmatprep.subr.mxu0 0.0
      %311 = vmatpush1.msra.mxu0 0.0
      %312 = vmatprep.subr.mxu0 0.0
      %313 = vmatpush1.msra.mxu0 0.0
      %314 = vmatprep.subr.mxu0 0.0
      %315 = vmatpush1.msra.mxu0 0.0
      %316 = vmatprep.subr.mxu0 0.0
      %317 = vmatpush1.msra.mxu0 0.0
      %318 = vmatprep.subr.mxu0 %v274
      %319 = vmatpush1.msra.mxu0 %v272
      %320 = vmatprep.subr.mxu0 0.0
      %321 = vmatpush2.msra.mxu0 0.0
      %322 = vmatprep.subr.mxu0 0.0
      %323 = vmatpush2.msra.mxu0 0.0
      %324 = vmatprep.subr.mxu0 0.0
      %325 = vmatpush2.msra.mxu0 0.0
      %326 = vmatprep.subr.mxu0 0.0
      %327 = vmatpush2.msra.mxu0 0.0
      %328 = vmatprep.subr.mxu0 0.0
      %329 = vmatpush2.msra.mxu0 0.0
      %330 = vmatprep.subr.mxu0 0.0
      %331 = vmatpush2.msra.mxu0 0.0
      %332 = vmatprep.subr.mxu0 0.0
      %333 = vmatpush2.msra.mxu0 0.0
      %334 = vmatprep.subr.mxu0 0.0
      %335 = vmatpush2.msra.mxu0 0.0
      %336 = vmatprep.subr.mxu0 0.0
      %337 = vmatpush2.msra.mxu0 0.0
      %338 = vmatprep.subr.mxu0 0.0
      %339 = vmatpush2.msra.mxu0 0.0
      %340 = vmatprep.subr.mxu0 0.0
      %341 = vmatpush2.msra.mxu0 0.0
      %342 = vmatprep.subr.mxu0 0.0
      %343 = vmatpush2.msra.mxu0 0.0
      %344 = vmatprep.subr.mxu0 0.0
      %345 = vmatpush2.msra.mxu0 0.0
      %346 = vmatprep.subr.mxu0 0.0
      %347 = vmatpush2.msra.mxu0 0.0
      %348 = vmatprep.subr.mxu0 0.0
      %349 = vmatpush2.msra.mxu0 0.0
      %350 = vmatprep.subr.mxu0 0.0
      %351 = vmatpush2.msra.mxu0 0.0
      %352 = vmatprep.mubr.f32.mxu0 0.0
      %353 = vmatmul.mubr.f32.gmra.mxu0 %v269
      %v354 = vpop.f32.mrf.mxu0
      %v355 = vadd.f32 0.0, %v354
      %v356 = vpop.f32.mrf.mxu0
      %v357 = vadd.f32 0.0, %v356
      %358 = vdwg.mxu0
      %359 = vmatprep.subr.mxu0 0.0
      %360 = vmatpush1.msra.mxu0 0.0
      %361 = vmatprep.subr.mxu0 0.0
      %362 = vmatpush1.msra.mxu0 0.0
      %363 = vmatprep.subr.mxu0 0.0
      %364 = vmatpush1.msra.mxu0 0.0
      %365 = vmatprep.subr.mxu0 0.0
      %366 = vmatpush1.msra.mxu0 0.0
      %367 = vmatprep.subr.mxu0 0.0
      %368 = vmatpush1.msra.mxu0 0.0
      %369 = vmatprep.subr.mxu0 0.0
      %370 = vmatpush1.msra.mxu0 0.0
      %371 = vmatprep.subr.mxu0 0.0
      %372 = vmatpush1.msra.mxu0 0.0
      %373 = vmatprep.subr.mxu0 0.0
      %374 = vmatpush1.msra.mxu0 0.0
      %375 = vmatprep.subr.mxu0 0.0
      %376 = vmatpush1.msra.mxu0 0.0
      %377 = vmatprep.subr.mxu0 0.0
      %378 = vmatpush1.msra.mxu0 0.0
      %379 = vmatprep.subr.mxu0 0.0
      %380 = vmatpush1.msra.mxu0 0.0
      %381 = vmatprep.subr.mxu0 0.0
      %382 = vmatpush1.msra.mxu0 0.0
      %383 = vmatprep.subr.mxu0 0.0
      %384 = vmatpush1.msra.mxu0 0.0
      %385 = vmatprep.subr.mxu0 0.0
      %386 = vmatpush1.msra.mxu0 0.0
      %387 = vmatprep.subr.mxu0 0.0
      %388 = vmatpush1.msra.mxu0 0.0
      %389 = vmatprep.subr.mxu0 %v278
      %390 = vmatpush1.msra.mxu0 %v276
      %391 = vmatprep.subr.mxu0 0.0
      %392 = vmatpush2.msra.mxu0 0.0
      %393 = vmatprep.subr.mxu0 0.0
      %394 = vmatpush2.msra.mxu0 0.0
      %395 = vmatprep.subr.mxu0 0.0
      %396 = vmatpush2.msra.mxu0 0.0
      %397 = vmatprep.subr.mxu0 0.0
      %398 = vmatpush2.msra.mxu0 0.0
      %399 = vmatprep.subr.mxu0 0.0
      %400 = vmatpush2.msra.mxu0 0.0
      %401 = vmatprep.subr.mxu0 0.0
      %402 = vmatpush2.msra.mxu0 0.0
      %403 = vmatprep.subr.mxu0 0.0
      %404 = vmatpush2.msra.mxu0 0.0
      %405 = vmatprep.subr.mxu0 0.0
      %406 = vmatpush2.msra.mxu0 0.0
      %407 = vmatprep.subr.mxu0 0.0
      %408 = vmatpush2.msra.mxu0 0.0
      %409 = vmatprep.subr.mxu0 0.0
      %410 = vmatpush2.msra.mxu0 0.0
      %411 = vmatprep.subr.mxu0 0.0
      %412 = vmatpush2.msra.mxu0 0.0
      %413 = vmatprep.subr.mxu0 0.0
      %414 = vmatpush2.msra.mxu0 0.0
      %415 = vmatprep.subr.mxu0 0.0
      %416 = vmatpush2.msra.mxu0 0.0
      %417 = vmatprep.subr.mxu0 0.0
      %418 = vmatpush2.msra.mxu0 0.0
      %419 = vmatprep.subr.mxu0 0.0
      %420 = vmatpush2.msra.mxu0 0.0
      %421 = vmatprep.subr.mxu0 0.0
      %422 = vmatpush2.msra.mxu0 0.0
      %423 = vmatprep.mubr.f32.mxu0 0.0
      %424 = vmatmul.mubr.f32.gmra.mxu0 %v269
      %v425 = vpop.f32.mrf.mxu0
      %v426 = vadd.f32 0.0, %v425
      %v427 = vpop.f32.mrf.mxu0
      %v428 = vadd.f32 0.0, %v427
      %429 = vdwg.mxu0
      %430 = vmatprep.subr.mxu0 0.0
      %431 = vmatpush1.msra.mxu0 0.0
      %432 = vmatprep.subr.mxu0 0.0
      %433 = vmatpush1.msra.mxu0 0.0
      %434 = vmatprep.subr.mxu0 0.0
      %435 = vmatpush1.msra.mxu0 0.0
      %436 = vmatprep.subr.mxu0 0.0
      %437 = vmatpush1.msra.mxu0 0.0
      %438 = vmatprep.subr.mxu0 0.0
      %439 = vmatpush1.msra.mxu0 0.0
      %440 = vmatprep.subr.mxu0 0.0
      %441 = vmatpush1.msra.mxu0 0.0
      %442 = vmatprep.subr.mxu0 0.0
      %443 = vmatpush1.msra.mxu0 0.0
      %444 = vmatprep.subr.mxu0 0.0
      %445 = vmatpush1.msra.mxu0 0.0
      %446 = vmatprep.subr.mxu0 0.0
      %447 = vmatpush1.msra.mxu0 0.0
      %448 = vmatprep.subr.mxu0 0.0
      %449 = vmatpush1.msra.mxu0 0.0
      %450 = vmatprep.subr.mxu0 0.0
      %451 = vmatpush1.msra.mxu0 0.0
      %452 = vmatprep.subr.mxu0 0.0
      %453 = vmatpush1.msra.mxu0 0.0
      %454 = vmatprep.subr.mxu0 0.0
      %455 = vmatpush1.msra.mxu0 0.0
      %456 = vmatprep.subr.mxu0 0.0
      %457 = vmatpush1.msra.mxu0 0.0
      %458 = vmatprep.subr.mxu0 0.0
      %459 = vmatpush1.msra.mxu0 0.0
      %460 = vmatprep.subr.mxu0 %v282
      %461 = vmatpush1.msra.mxu0 %v280
      %462 = vmatprep.subr.mxu0 0.0
      %463 = vmatpush2.msra.mxu0 0.0
      %464 = vmatprep.subr.mxu0 0.0
      %465 = vmatpush2.msra.mxu0 0.0
      %466 = vmatprep.subr.mxu0 0.0
      %467 = vmatpush2.msra.mxu0 0.0
      %468 = vmatprep.subr.mxu0 0.0
      %469 = vmatpush2.msra.mxu0 0.0
      %470 = vmatprep.subr.mxu0 0.0
      %471 = vmatpush2.msra.mxu0 0.0
      %472 = vmatprep.subr.mxu0 0.0
      %473 = vmatpush2.msra.mxu0 0.0
      %474 = vmatprep.subr.mxu0 0.0
      %475 = vmatpush2.msra.mxu0 0.0
      %476 = vmatprep.subr.mxu0 0.0
      %477 = vmatpush2.msra.mxu0 0.0
      %478 = vmatprep.subr.mxu0 0.0
      %479 = vmatpush2.msra.mxu0 0.0
      %480 = vmatprep.subr.mxu0 0.0
      %481 = vmatpush2.msra.mxu0 0.0
      %482 = vmatprep.subr.mxu0 0.0
      %483 = vmatpush2.msra.mxu0 0.0
      %484 = vmatprep.subr.mxu0 0.0
      %485 = vmatpush2.msra.mxu0 0.0
      %486 = vmatprep.subr.mxu0 0.0
      %487 = vmatpush2.msra.mxu0 0.0
      %488 = vmatprep.subr.mxu0 0.0
      %489 = vmatpush2.msra.mxu0 0.0
      %490 = vmatprep.subr.mxu0 0.0
      %491 = vmatpush2.msra.mxu0 0.0
      %492 = vmatprep.subr.mxu0 0.0
      %493 = vmatpush2.msra.mxu0 0.0
      %494 = vmatprep.mubr.f32.mxu0 0.0
      %495 = vmatmul.mubr.f32.gmra.mxu0 %v269
      %v496 = vpop.f32.mrf.mxu0
      %v497 = vadd.f32 0.0, %v496
      %v498 = vpop.f32.mrf.mxu0
      %v499 = vadd.f32 0.0, %v498
      %500 = vdwg.mxu0
      %501 = vmatprep.subr.mxu0 0.0
      %502 = vmatpush1.msra.mxu0 0.0
      %503 = vmatprep.subr.mxu0 0.0
      %504 = vmatpush1.msra.mxu0 0.0
      %505 = vmatprep.subr.mxu0 0.0
      %506 = vmatpush1.msra.mxu0 0.0
      %507 = vmatprep.subr.mxu0 0.0
      %508 = vmatpush1.msra.mxu0 0.0
      %509 = vmatprep.subr.mxu0 0.0
      %510 = vmatpush1.msra.mxu0 0.0
      %511 = vmatprep.subr.mxu0 0.0
      %512 = vmatpush1.msra.mxu0 0.0
      %513 = vmatprep.subr.mxu0 0.0
      %514 = vmatpush1.msra.mxu0 0.0
      %515 = vmatprep.subr.mxu0 0.0
      %516 = vmatpush1.msra.mxu0 0.0
      %517 = vmatprep.subr.mxu0 0.0
      %518 = vmatpush1.msra.mxu0 0.0
      %519 = vmatprep.subr.mxu0 0.0
      %520 = vmatpush1.msra.mxu0 0.0
      %521 = vmatprep.subr.mxu0 0.0
      %522 = vmatpush1.msra.mxu0 0.0
      %523 = vmatprep.subr.mxu0 0.0
      %524 = vmatpush1.msra.mxu0 0.0
      %525 = vmatprep.subr.mxu0 0.0
      %526 = vmatpush1.msra.mxu0 0.0
      %527 = vmatprep.subr.mxu0 0.0
      %528 = vmatpush1.msra.mxu0 0.0
      %529 = vmatprep.subr.mxu0 0.0
      %530 = vmatpush1.msra.mxu0 0.0
      %531 = vmatprep.subr.mxu0 %v286
      %532 = vmatpush1.msra.mxu0 %v284
      %533 = vmatprep.subr.mxu0 0.0
      %534 = vmatpush2.msra.mxu0 0.0
      %535 = vmatprep.subr.mxu0 0.0
      %536 = vmatpush2.msra.mxu0 0.0
      %537 = vmatprep.subr.mxu0 0.0
      %538 = vmatpush2.msra.mxu0 0.0
      %539 = vmatprep.subr.mxu0 0.0
      %540 = vmatpush2.msra.mxu0 0.0
      %541 = vmatprep.subr.mxu0 0.0
      %542 = vmatpush2.msra.mxu0 0.0
      %543 = vmatprep.subr.mxu0 0.0
      %544 = vmatpush2.msra.mxu0 0.0
      %545 = vmatprep.subr.mxu0 0.0
      %546 = vmatpush2.msra.mxu0 0.0
      %547 = vmatprep.subr.mxu0 0.0
      %548 = vmatpush2.msra.mxu0 0.0
      %549 = vmatprep.subr.mxu0 0.0
      %550 = vmatpush2.msra.mxu0 0.0
      %551 = vmatprep.subr.mxu0 0.0
      %552 = vmatpush2.msra.mxu0 0.0
      %553 = vmatprep.subr.mxu0 0.0
      %554 = vmatpush2.msra.mxu0 0.0
      %555 = vmatprep.subr.mxu0 0.0
      %556 = vmatpush2.msra.mxu0 0.0
      %557 = vmatprep.subr.mxu0 0.0
      %558 = vmatpush2.msra.mxu0 0.0
      %559 = vmatprep.subr.mxu0 0.0
      %560 = vmatpush2.msra.mxu0 0.0
      %561 = vmatprep.subr.mxu0 0.0
      %562 = vmatpush2.msra.mxu0 0.0
      %563 = vmatprep.subr.mxu0 0.0
      %564 = vmatpush2.msra.mxu0 0.0
      %565 = vmatprep.mubr.f32.mxu0 0.0
      %566 = vmatmul.mubr.f32.gmra.mxu0 %v269
      %v567 = vpop.f32.mrf.mxu0
      %v568 = vadd.f32 0.0, %v567
      %v569 = vpop.f32.mrf.mxu0
      %v570 = vadd.f32 0.0, %v569
      %571 = vdwg.mxu0
      %v580 = vcombine.low %v355, %v357
      %v581 = vcombine.low %v426, %v428
      %v582 = vcombine.low %v497, %v499
      %v583 = vcombine.low %v568, %v570
      %588 = vst [vmem:[%s244] sm:$0xff] %v580
      %589 = vst [vmem:[%s244 + $0x8] sm:$0xff] %v581
      %590 = vst [vmem:[%s244 + $0x10] sm:$0xff] %v582
      %591 = vst [vmem:[%s244 + $0x18] sm:$0xff] %v583
      %s592 = smul.u32 8, %s19
      %p593 = scmp.lt.s32.totalorder %s18, 1
      %s594 = scalar_select %p593, %s18, 1
      %p595 = scmp.lt.s32.totalorder %s592, 7
      %s596 = scalar_select %p595, %s592, 7
      %s597 = smul.addr %s594, 8
      %s598 = sadd.s32 %s596, %s597
      %s599 = smul.addr %s598, 4
      %s600 = scalar_lea.vmem %s3, %s599
      // Predicated region
      $region33: #{pmpa1_ave_forward.5} parent=31 // pred_check
        %p601 = pneg %p123
      $region34: #{pmpa1_ave_forward.5} parent=31 // pred_check_branch
        %603 = sbr.rel (%p601) target = $region36
      $region35: #{pmpa1_ave_forward.5} parent=31 // pred_region
        %s604 = smul.u32 8, %s19
      $region36: #{pmpa1_ave_forward.5} parent=31 // pred_fallthru
        _
    $region32: #{pmpa1_ave_forward.5} parent=5 // pred_fallthru
      _
    %p605 = scmp.le.s32.totalorder 2, %s9
    // Predicated region
    $region37: #{pmpa1_ave_forward.5} parent=5 // pred_check
      %p606 = pneg %p605
    $region38: #{pmpa1_ave_forward.5} parent=5 // pred_check_branch
      %608 = sbr.rel (%p606) target = $region40
    $region39: #{pmpa1_ave_forward.5} parent=5 // pred_region
      %s609 = ssub.s32 %s9, 2
      // Predicated region
      $region41: #{pmpa1_ave_forward.5} parent=39 // pred_check
        %p610 = pneg %p129
      $region42: #{pmpa1_ave_forward.5} parent=39 // pred_check_branch
        %612 = sbr.rel (%p610) target = $region44
      $region43: #{pmpa1_ave_forward.5} parent=39 // pred_region
        %s613 = smul.u32 8, %s21
        %p614 = scmp.lt.s32.totalorder %s20, 1
        %s615 = scalar_select %p614, %s20, 1
        %p616 = scmp.lt.s32.totalorder %s613, 7
        %s617 = scalar_select %p616, %s613, 7
        %s618 = smul.addr %s615, 8
        %s619 = sadd.s32 %s617, %s618
        %s620 = smul.addr %s619, 4
        %s621 = scalar_lea.vmem %s3, %s620
      $region44: #{pmpa1_ave_forward.5} parent=39 // pred_fallthru
        _
    $region40: #{pmpa1_ave_forward.5} parent=5 // pred_fallthru
      _
  $region6: #{pmpa1_ave_forward.5} parent=0 // loop_footer
    %s13 = sadd.s32 1, %s9
  $region7: #{pmpa1_ave_forward.5} parent=0 // loop_footer_branch
    %8 = sbr.rel target = $region3
  $region8: #{pmpa1_ave_forward.5} parent=0 // loop_exit
    _

</llo_original>
